<compile_context>
chip_gen: v6e
topology: v6e:2x2x1
jax: 0.10.0
libtpu: 0.0.40
codegen_flags: <defaults>
</compile_context>

<pallas_src>
import functools

import jax
import jax.numpy as jnp
from jax.experimental import pallas as pl
from jax.experimental.pallas import tpu as pltpu

_VMEM_TILE_BUDGET = 20 * 1024 * 1024   # budget used when picking tile sizes
_VMEM_LIMIT_BYTES = 48 * 1024 * 1024   # < 64 MiB physical VMEM on v7x, > 32 MiB default


def _round_up(x, m):
    return ((x + m - 1) // m) * m


def _post_attention_kernel(g_ref, h_ref, wg_ref, wh_ref, o_ref):
    # One (tm x tn) output tile; full contraction dims are resident.
    # Activations are cast to the weight (compute) dtype in-register (VPU),
    # matmuls run on the MXU, accumulate in f32, tanh epilogue in f32 (EUP),
    # single cast on the way out.
    wg = wg_ref[...]
    wh = wh_ref[...]
    acc = jnp.dot(g_ref[...].astype(wg.dtype), wg,
                  preferred_element_type=jnp.float32)
    acc = acc + jnp.dot(h_ref[...].astype(wh.dtype), wh,
                        preferred_element_type=jnp.float32)
    o_ref[...] = jnp.tanh(acc).astype(o_ref.dtype)


def prepare_post_attention_weights(weight, d_g, compute_dtype=jnp.bfloat16):
    """Split + transpose the PyTorch-layout Linear weight ONCE at load time.

    weight: [P, Dg+Dh] with y = x @ weight.T.
    Returns (wg, wh) of shapes [Dg, P] / [Dh, P] in the kernel compute dtype,
    so the per-call path never re-transposes the weight through HBM.
    """
    p, e = weight.shape
    del e
    wg = jnp.asarray(weight[:, :d_g].T, dtype=compute_dtype)
    wh = jnp.asarray(weight[:, d_g:].T, dtype=compute_dtype)
    return wg, wh


def _pick_tiles(M, Dg, Dh, P, act_bytes, w_bytes, out_bytes):
    """Pick (tm, tn, weight_stationary) so double-buffered tiles fit VMEM."""

    def fits(tm_, tn_):
        act = 2 * tm_ * (Dg + Dh) * act_bytes   # double-buffered activations
        wts = 2 * (Dg + Dh) * tn_ * w_bytes     # (conservative) weight buffers
        out = 2 * tm_ * tn_ * out_bytes         # double-buffered output tile
        acc = tm_ * tn_ * 4                     # f32 accumulator / epilogue
        return act + wts + out + acc <= _VMEM_TILE_BUDGET

    # Preferred: weight-stationary (tn == full P): weights DMA'd once and kept
    # resident across the whole row grid, output tile fully lane-dense.
    tm = min(512, _round_up(M, 8))
    while not fits(tm, P) and tm > 8:
        tm = _round_up(max(8, tm // 2), 8)
    if fits(tm, P):
        return tm, P, True

    # Fallback for very large weights: also tile N lane-densely (mult. of 128).
    tm = min(512, _round_up(M, 8))
    tn = 512
    while not fits(tm, tn) and tn > 128:
        tn //= 2
    while not fits(tm, tn) and tm > 8:
        tm = _round_up(max(8, tm // 2), 8)
    return tm, tn, False


@functools.partial(jax.jit, static_argnames=("proj_dim",))
def post_attention_layer(g, h, wg, wh, *, proj_dim):
    """g: [B,S,Dg], h: [B,S,Dh], wg/wh from prepare_post_attention_weights."""
    B, S, Dg = g.shape
    _, _, Dh = h.shape
    dgw, P = wg.shape
    dhw, P2 = wh.shape
    assert dgw == Dg and dhw == Dh and P == P2 == proj_dim

    M = B * S
    out_dtype = g.dtype
    act_bytes = jnp.dtype(g.dtype).itemsize
    w_bytes = jnp.dtype(wg.dtype).itemsize
    out_bytes = jnp.dtype(out_dtype).itemsize

    tm, tn, weight_stationary = _pick_tiles(M, Dg, Dh, P,
                                            act_bytes, w_bytes, out_bytes)

    # Free (metadata-only) flatten of the token dims; no cast, no pad, no slice.
    g2 = g.reshape(M, Dg)
    h2 = h.reshape(M, Dh)

    cost = pl.CostEstimate(
        flops=2 * M * (Dg + Dh) * P,
        transcendentals=M * P,
        bytes_accessed=M * (Dg + Dh) * act_bytes
        + (Dg + Dh) * P * w_bytes
        + M * P * out_bytes,
    )

    if weight_stationary:
        # 1-D grid over rows; weights resident (constant index_map); output
        # tile spans the full (lane-dense) P. Partial last row-block (if M is
        # not a multiple of tm) is handled by Pallas boundary masking.
        grid = (pl.cdiv(M, tm),)
        in_specs = [
            pl.BlockSpec((tm, Dg), lambda i: (i, 0)),
            pl.BlockSpec((tm, Dh), lambda i: (i, 0)),
            pl.BlockSpec((Dg, P), lambda i: (0, 0)),
            pl.BlockSpec((Dh, P), lambda i: (0, 0)),
        ]
        out_specs = pl.BlockSpec((tm, P), lambda i: (i, 0))
        dim_sem = ("parallel",)
    else:
        # Large weight: tile N too (tn multiple of 128). Activation blocks keep
        # a constant index over j, so Pallas skips their re-DMA between j steps.
        grid = (pl.cdiv(M, tm), pl.cdiv(P, tn))
        in_specs = [
            pl.BlockSpec((tm, Dg), lambda i, j: (i, 0)),
            pl.BlockSpec((tm, Dh), lambda i, j: (i, 0)),
            pl.BlockSpec((Dg, tn), lambda i, j: (0, j)),
            pl.BlockSpec((Dh, tn), lambda i, j: (0, j)),
        ]
        out_specs = pl.BlockSpec((tm, tn), lambda i, j: (i, j))
        dim_sem = ("parallel", "parallel")

    out = pl.pallas_call(
        _post_attention_kernel,
        out_shape=jax.ShapeDtypeStruct((M, P), out_dtype),
        grid_spec=pltpu.PrefetchScalarGridSpec(
            num_scalar_prefetch=0,
            grid=grid,
            in_specs=in_specs,
            out_specs=out_specs,
        ),
        compiler_params=pltpu.CompilerParams(
            dimension_semantics=dim_sem,
            vmem_limit_bytes=_VMEM_LIMIT_BYTES,
        ),
        cost_estimate=cost,
    )(g2, h2, wg, wh)

    return out.reshape(B, S, P)


if __name__ == "__main__":
    # Module-consistent dims (emb_dim=1600 split evenly, proj_dim=800), small batch/seq.
    B, S = 2, 8
    Dg, Dh = 800, 800      # emb_dim = 1600
    P = 800                # proj_dim = 800

    key = jax.random.PRNGKey(0)
    kg, kh, kw = jax.random.split(key, 3)
    g = jax.random.normal(kg, (B, S, Dg), dtype=jnp.float32)
    h = jax.random.normal(kh, (B, S, Dh), dtype=jnp.float32)
    # Deterministic Linear weight init (uniform, like PyTorch's default bound).
    bound = 1.0 / jnp.sqrt(jnp.float32(Dg + Dh))
    weight = jax.random.uniform(kw, (P, Dg + Dh), dtype=jnp.float32,
                                minval=-bound, maxval=bound)

    # Pure-JAX reference for the same forward pass (eval-mode dropout = identity).
    x = jnp.concatenate([g, h], axis=2)
    y_ref = jnp.tanh(jnp.einsum("bse,pe->bsp", x, weight))

    # f32 path: exact agreement with the reference.
    wg32, wh32 = prepare_post_attention_weights(weight, Dg, jnp.float32)
    y32 = post_attention_layer(g, h, wg32, wh32, proj_dim=P)
    y32 = jax.block_until_ready(y32)
    assert y32.shape == (B, S, P)
    assert jnp.allclose(y32, y_ref, atol=1e-5, rtol=1e-5), "f32 mismatch vs reference"

    # bf16 compute path (default: MXU-friendly, half the weight HBM traffic).
    wg16, wh16 = prepare_post_attention_weights(weight, Dg, jnp.bfloat16)
    y16 = post_attention_layer(g, h, wg16, wh16, proj_dim=P)
    y16 = jax.block_until_ready(y16)
    assert y16.shape == (B, S, P)
    assert jnp.allclose(y16, y_ref, atol=3e-2, rtol=3e-2), "bf16 mismatch vs reference"

    print("KERNEL_OK")
</pallas_src>

<mosaic_0001>
module attributes {stable_mosaic.version = 11 : i64} {
  func.func @_post_attention_kernel(%arg0: i32, %arg1: memref<16x800xf32, #tpu.memory_space<vmem>>, %arg2: memref<16x800xf32, #tpu.memory_space<vmem>>, %arg3: memref<800x800xf32, #tpu.memory_space<vmem>>, %arg4: memref<800x800xf32, #tpu.memory_space<vmem>>, %arg5: memref<16x800xf32, #tpu.memory_space<vmem>>) attributes {dimension_semantics = [#tpu.dimension_semantics<parallel>], iteration_bounds = array<i64: 1>, scalar_prefetch = 0 : i64, scratch_operands = 0 : i64, tpu.core_type = #tpu.core_type<tc>, window_params = [{transform_indices = @transform_0, window_bounds = array<i64: 16, 800>}, {transform_indices = @transform_1, window_bounds = array<i64: 16, 800>}, {pipeline_mode = #tpu.pipeline_mode<synchronous>, transform_indices = @transform_2, window_bounds = array<i64: 800, 800>}, {pipeline_mode = #tpu.pipeline_mode<synchronous>, transform_indices = @transform_3, window_bounds = array<i64: 800, 800>}, {transform_indices = @transform_4, window_bounds = array<i64: 16, 800>}]} {
    %c0 = arith.constant 0 : index
    %c0_0 = arith.constant 0 : index
    %0 = vector.load %arg3[%c0, %c0_0] : memref<800x800xf32, #tpu.memory_space<vmem>>, vector<800x800xf32>
    %c0_1 = arith.constant 0 : index
    %c0_2 = arith.constant 0 : index
    %1 = vector.load %arg4[%c0_1, %c0_2] : memref<800x800xf32, #tpu.memory_space<vmem>>, vector<800x800xf32>
    %c0_3 = arith.constant 0 : index
    %c0_4 = arith.constant 0 : index
    %2 = vector.load %arg1[%c0_3, %c0_4] : memref<16x800xf32, #tpu.memory_space<vmem>>, vector<16x800xf32>
    %cst = arith.constant dense<0.000000e+00> : vector<16x800xf32>
    %3 = tpu.matmul %2, %0, %cst {dimension_numbers = #tpu.dot_dimension_numbers<[1], [0], [0], [1], [0, 0, 1, 1], [], []>} : vector<16x800xf32>, vector<800x800xf32>, vector<16x800xf32> -> vector<16x800xf32>
    %c0_5 = arith.constant 0 : index
    %c0_6 = arith.constant 0 : index
    %4 = vector.load %arg2[%c0_5, %c0_6] : memref<16x800xf32, #tpu.memory_space<vmem>>, vector<16x800xf32>
    %cst_7 = arith.constant dense<0.000000e+00> : vector<16x800xf32>
    %5 = tpu.matmul %4, %1, %cst_7 {dimension_numbers = #tpu.dot_dimension_numbers<[1], [0], [0], [1], [0, 0, 1, 1], [], []>} : vector<16x800xf32>, vector<800x800xf32>, vector<16x800xf32> -> vector<16x800xf32>
    %6 = arith.addf %3, %5 : vector<16x800xf32>
    %7 = math.tanh %6 : vector<16x800xf32>
    %c0_8 = arith.constant 0 : index
    %c0_9 = arith.constant 0 : index
    %8 = vector.load %arg5[%c0_8, %c0_9] : memref<16x800xf32, #tpu.memory_space<vmem>>, vector<16x800xf32>
    tpu.vector_store %arg5[%c0_8, %c0_9], %7 {strides = array<i32>} : memref<16x800xf32, #tpu.memory_space<vmem>>, vector<16x800xf32>,
    return
  }
  func.func @transform_0(%arg0: i32) -> (i32, i32) {
    %c0_i32 = arith.constant 0 : i32
    %c0_i32_0 = arith.constant 0 : i32
    return %arg0, %c0_i32 : i32, i32
  }
  func.func @transform_1(%arg0: i32) -> (i32, i32) {
    %c0_i32 = arith.constant 0 : i32
    %c0_i32_0 = arith.constant 0 : i32
    return %arg0, %c0_i32 : i32, i32
  }
  func.func @transform_2(%arg0: i32) -> (i32, i32) {
    %c0_i32 = arith.constant 0 : i32
    %c0_i32_0 = arith.constant 0 : i32
    %c0_i32_1 = arith.constant 0 : i32
    return %c0_i32, %c0_i32_0 : i32, i32
  }
  func.func @transform_3(%arg0: i32) -> (i32, i32) {
    %c0_i32 = arith.constant 0 : i32
    %c0_i32_0 = arith.constant 0 : i32
    %c0_i32_1 = arith.constant 0 : i32
    return %c0_i32, %c0_i32_0 : i32, i32
  }
  func.func @transform_4(%arg0: i32) -> (i32, i32) {
    %c0_i32 = arith.constant 0 : i32
    %c0_i32_0 = arith.constant 0 : i32
    return %arg0, %c0_i32 : i32, i32
  }
}

</mosaic_0001>

<llo_original>
// kernel: post_attention_layer.1
$region0: #{post_attention_layer.1}
  #allocation0 [shape = 'u32[]', space=smem, size = 0x4, offset = 0x4, fixed_abs, tag = 'smem constant byte address 0x4 - core index']
  #allocation1 [shape = 'u32[144,128]{1,0:T(1,128)}', space=vmem, size = 0x12000, scoped, tag = 'internal scratch']
  %s0 = inlined_call_operand.hbm [shape: f32[16,800], index: 0, kind: input, shape index: {}]
  %s1 = inlined_call_operand.hbm [shape: f32[16,800], index: 1, kind: input, shape index: {}]
  %s2 = inlined_call_operand.hbm [shape: f32[800,800], index: 2, kind: input, shape index: {}]
  %s3 = inlined_call_operand.hbm [shape: f32[800,800], index: 3, kind: input, shape index: {}]
  %s4 = inlined_call_operand.hbm [shape: f32[16,800], index: 4, kind: output, shape index: {}]
  %s5 = sld [smem:[#allocation0]]
  $region42: #{post_attention_layer.1} parent=0
    _
  %s7 = ssub.s32 1, %s5
  %s8 = scalar_select 0, %s7, %s5
  $region1: #{post_attention_layer.1} parent=0
    #allocation2 [shape = 'u8[57344]{0}', space=vmem, size = 0xe000, scoped, tag = 'input window, operand 0, single buffered']
    #allocation3 [shape = 's32[1]{0}', space=sflag, size = 0x4, scoped, tag = 'scoped memory for post_attention_layer.1']
    #allocation4 [shape = 's32[1]{0}', space=sflag, size = 0x4, scoped, tag = 'scoped memory for post_attention_layer.1']
    #allocation5 [shape = 'u8[57344]{0}', space=vmem, size = 0xe000, scoped, tag = 'input window, operand 1, single buffered']
    #allocation6 [shape = 's32[1]{0}', space=sflag, size = 0x4, scoped, tag = 'scoped memory for post_attention_layer.1']
    #allocation7 [shape = 'u8[2867200]{0}', space=vmem, size = 0x2bc000, scoped, tag = 'input window, operand 2, single buffered']
    #allocation8 [shape = 'u8[2867200]{0}', space=vmem, size = 0x2bc000, scoped, tag = 'input window, operand 3, single buffered']
    #allocation9 [shape = 's32[1]{0}', space=sflag, size = 0x4, scoped, tag = 'scoped memory for post_attention_layer.1']
    #allocation10 [shape = 'u8[57344]{0}', space=vmem, size = 0xe000, scoped, tag = 'output window, operand 0, single buffered']
    %9 = vsyncpa [#allocation3], 0
    %10 = vsyncpa [#allocation6], 0
    %11 = vsyncpa [#allocation9], 0
    %12 = vsyncpa [#allocation4], 0
    // Predicated region
    $region2: #{post_attention_layer.1} parent=1 // pred_check
      _
    $region3: #{post_attention_layer.1} parent=1 // pred_check_branch
      %14 = sbr.rel (0) target = $region5
    $region4: #{post_attention_layer.1} parent=1 // pred_region
      %s16 = ssub.s32 1792, 1792
      %17 = vsyncadd [#allocation3], %s16
      %s18 = sshll.u32 [#allocation2], 4
      %s19 = int_to_ptr.vmem [resolvable:$true] %s18
      %24 = dma.hbm_to_vmem [thread:$0]  %s0, 1792, %s19, [#allocation3], 896, 896, 56
    $region5: #{post_attention_layer.1} parent=1 // pred_fallthru
      _
    // Predicated region
    $region6: #{post_attention_layer.1} parent=1 // pred_check
      _
    $region7: #{post_attention_layer.1} parent=1 // pred_check_branch
      %26 = sbr.rel (0) target = $region9
    $region8: #{post_attention_layer.1} parent=1 // pred_region
      %s28 = ssub.s32 1792, 1792
      %29 = vsyncadd [#allocation6], %s28
      %s30 = sshll.u32 [#allocation5], 4
      %s31 = int_to_ptr.vmem [resolvable:$true] %s30
      %36 = dma.hbm_to_vmem [thread:$0]  %s1, 1792, %s31, [#allocation6], 896, 896, 56
    $region9: #{post_attention_layer.1} parent=1 // pred_fallthru
      _
    // Predicated region
    $region10: #{post_attention_layer.1} parent=1 // pred_check
      _
    $region11: #{post_attention_layer.1} parent=1 // pred_check_branch
      %38 = sbr.rel (0) target = $region13
    $region12: #{post_attention_layer.1} parent=1 // pred_region
      %s40 = ssub.s32 89600, 89600
      %41 = vsyncadd [#allocation6], %s40
      %s42 = sshll.u32 [#allocation7], 4
      %s43 = int_to_ptr.vmem [resolvable:$true] %s42
      %48 = dma.hbm_to_vmem [thread:$0]  %s2, 89600, %s43, [#allocation6], 896, 896, 56
    $region13: #{post_attention_layer.1} parent=1 // pred_fallthru
      _
    // Predicated region
    $region14: #{post_attention_layer.1} parent=1 // pred_check
      _
    $region15: #{post_attention_layer.1} parent=1 // pred_check_branch
      %50 = sbr.rel (0) target = $region17
    $region16: #{post_attention_layer.1} parent=1 // pred_region
      %s52 = ssub.s32 89600, 89600
      %53 = vsyncadd [#allocation9], %s52
      %s54 = sshll.u32 [#allocation8], 4
      %s55 = int_to_ptr.vmem [resolvable:$true] %s54
      %60 = dma.hbm_to_vmem [thread:$0]  %s3, 89600, %s55, [#allocation9], 896, 896, 56
    $region17: #{post_attention_layer.1} parent=1 // pred_fallthru
      _
    // Predicated region
    $region18: #{post_attention_layer.1} parent=1 // pred_check
      _
    $region19: #{post_attention_layer.1} parent=1 // pred_check_branch
      %62 = sbr.rel (0) target = $region21
    $region20: #{post_attention_layer.1} parent=1 // pred_region
      %63 = dma.done [#allocation3], 1792
    $region21: #{post_attention_layer.1} parent=1 // pred_fallthru
      _
    // Predicated region
    $region22: #{post_attention_layer.1} parent=1 // pred_check
      _
    $region23: #{post_attention_layer.1} parent=1 // pred_check_branch
      %65 = sbr.rel (0) target = $region25
    $region24: #{post_attention_layer.1} parent=1 // pred_region
      %66 = dma.done [#allocation6], 1792
    $region25: #{post_attention_layer.1} parent=1 // pred_fallthru
      _
    // Predicated region
    $region26: #{post_attention_layer.1} parent=1 // pred_check
      _
    $region27: #{post_attention_layer.1} parent=1 // pred_check_branch
      %68 = sbr.rel (0) target = $region29
    $region28: #{post_attention_layer.1} parent=1 // pred_region
      %69 = dma.done [#allocation6], 89600
    $region29: #{post_attention_layer.1} parent=1 // pred_fallthru
      _
    // Predicated region
    $region30: #{post_attention_layer.1} parent=1 // pred_check
      _
    $region31: #{post_attention_layer.1} parent=1 // pred_check_branch
      %71 = sbr.rel (0) target = $region33
    $region32: #{post_attention_layer.1} parent=1 // pred_region
      %72 = dma.done [#allocation9], 89600
    $region33: #{post_attention_layer.1} parent=1 // pred_fallthru
      _
    %v73 = vld [vmem:[#allocation7] sm:$0xff]
    %v74 = vld [vmem:[#allocation7 + $0x8] sm:$0xff]
    %v75 = vld [vmem:[#allocation7 + $0x10] sm:$0xff]
    %v76 = vld [vmem:[#allocation7 + $0x18] sm:$0xff]
    %v77 = vld [vmem:[#allocation7 + $0x20] sm:$0xff]
    %v78 = vld [vmem:[#allocation7 + $0x28] sm:$0xff]
    %v79 = vld [vmem:[#allocation7 + $0x30] sm:$0xff]
    %v80 = vld [vmem:[#allocation7 + $0x38] sm:$0xff]
    %v81 = vld [vmem:[#allocation7 + $0x40] sm:$0xff]
    %v82 = vld [vmem:[#allocation7 + $0x48] sm:$0xff]
    %v83 = vld [vmem:[#allocation7 + $0x50] sm:$0xff]
    %v84 = vld [vmem:[#allocation7 + $0x58] sm:$0xff]
    %v85 = vld [vmem:[#allocation7 + $0x60] sm:$0xff]
    %v86 = vld [vmem:[#allocation7 + $0x68] sm:$0xff]
    %v87 = vld [vmem:[#allocation7 + $0x70] sm:$0xff]
    %v88 = vld [vmem:[#allocation7 + $0x78] sm:$0xff]
    %v89 = vld [vmem:[#allocation7 + $0x80] sm:$0xff]
    %v90 = vld [vmem:[#allocation7 + $0x88] sm:$0xff]
    %v91 = vld [vmem:[#allocation7 + $0x90] sm:$0xff]
    %v92 = vld [vmem:[#allocation7 + $0x98] sm:$0xff]
    %v93 = vld [vmem:[#allocation7 + $0xa0] sm:$0xff]
    %v94 = vld [vmem:[#allocation7 + $0xa8] sm:$0xff]
    %v95 = vld [vmem:[#allocation7 + $0xb0] sm:$0xff]
    %v96 = vld [vmem:[#allocation7 + $0xb8] sm:$0xff]
    %v97 = vld [vmem:[#allocation7 + $0xc0] sm:$0xff]
    %v98 = vld [vmem:[#allocation7 + $0xc8] sm:$0xff]
    %v99 = vld [vmem:[#allocation7 + $0xd0] sm:$0xff]
    %v100 = vld [vmem:[#allocation7 + $0xd8] sm:$0xff]
    %v101 = vld [vmem:[#allocation7 + $0xe0] sm:$0xff]
    %v102 = vld [vmem:[#allocation7 + $0xe8] sm:$0xff]
    %v103 = vld [vmem:[#allocation7 + $0xf0] sm:$0xff]
    %v104 = vld [vmem:[#allocation7 + $0xf8] sm:$0xff]
    %v105 = vld [vmem:[#allocation7 + $0x100] sm:$0xff]
    %v106 = vld [vmem:[#allocation7 + $0x108] sm:$0xff]
    %v107 = vld [vmem:[#allocation7 + $0x110] sm:$0xff]
    %v108 = vld [vmem:[#allocation7 + $0x118] sm:$0xff]
    %v109 = vld [vmem:[#allocation7 + $0x120] sm:$0xff]
    %v110 = vld [vmem:[#allocation7 + $0x128] sm:$0xff]
    %v111 = vld [vmem:[#allocation7 + $0x130] sm:$0xff]
    %v112 = vld [vmem:[#allocation7 + $0x138] sm:$0xff]
    %v113 = vld [vmem:[#allocation7 + $0x140] sm:$0xff]
    %v114 = vld [vmem:[#allocation7 + $0x148] sm:$0xff]
    %v115 = vld [vmem:[#allocation7 + $0x150] sm:$0xff]
    %v116 = vld [vmem:[#allocation7 + $0x158] sm:$0xff]
    %v117 = vld [vmem:[#allocation7 + $0x160] sm:$0xff]
    %v118 = vld [vmem:[#allocation7 + $0x168] sm:$0xff]
    %v119 = vld [vmem:[#allocation7 + $0x170] sm:$0xff]
    %v120 = vld [vmem:[#allocation7 + $0x178] sm:$0xff]
    %v121 = vld [vmem:[#allocation7 + $0x180] sm:$0xff]
    %v122 = vld [vmem:[#allocation7 + $0x188] sm:$0xff]
    %v123 = vld [vmem:[#allocation7 + $0x190] sm:$0xff]
    %v124 = vld [vmem:[#allocation7 + $0x198] sm:$0xff]
    %v125 = vld [vmem:[#allocation7 + $0x1a0] sm:$0xff]
    %v126 = vld [vmem:[#allocation7 + $0x1a8] sm:$0xff]
    %v127 = vld [vmem:[#allocation7 + $0x1b0] sm:$0xff]
    %v128 = vld [vmem:[#allocation7 + $0x1b8] sm:$0xff]
    %v129 = vld [vmem:[#allocation7 + $0x1c0] sm:$0xff]
    %v130 = vld [vmem:[#allocation7 + $0x1c8] sm:$0xff]
    %v131 = vld [vmem:[#allocation7 + $0x1d0] sm:$0xff]
    %v132 = vld [vmem:[#allocation7 + $0x1d8] sm:$0xff]
    %v133 = vld [vmem:[#allocation7 + $0x1e0] sm:$0xff]
    %v134 = vld [vmem:[#allocation7 + $0x1e8] sm:$0xff]
    %v135 = vld [vmem:[#allocation7 + $0x1f0] sm:$0xff]
    %v136 = vld [vmem:[#allocation7 + $0x1f8] sm:$0xff]
    %v137 = vld [vmem:[#allocation7 + $0x200] sm:$0xff]
    %v138 = vld [vmem:[#allocation7 + $0x208] sm:$0xff]
    %v139 = vld [vmem:[#allocation7 + $0x210] sm:$0xff]
    %v140 = vld [vmem:[#allocation7 + $0x218] sm:$0xff]
    %v141 = vld [vmem:[#allocation7 + $0x220] sm:$0xff]
    %v142 = vld [vmem:[#allocation7 + $0x228] sm:$0xff]
    %v143 = vld [vmem:[#allocation7 + $0x230] sm:$0xff]
    %v144 = vld [vmem:[#allocation7 + $0x238] sm:$0xff]
    %v145 = vld [vmem:[#allocation7 + $0x240] sm:$0xff]
    %v146 = vld [vmem:[#allocation7 + $0x248] sm:$0xff]
    %v147 = vld [vmem:[#allocation7 + $0x250] sm:$0xff]
    %v148 = vld [vmem:[#allocation7 + $0x258] sm:$0xff]
    %v149 = vld [vmem:[#allocation7 + $0x260] sm:$0xff]
    %v150 = vld [vmem:[#allocation7 + $0x268] sm:$0xff]
    %v151 = vld [vmem:[#allocation7 + $0x270] sm:$0xff]
    %v152 = vld [vmem:[#allocation7 + $0x278] sm:$0xff]
    %v153 = vld [vmem:[#allocation7 + $0x280] sm:$0xff]
    %v154 = vld [vmem:[#allocation7 + $0x288] sm:$0xff]
    %v155 = vld [vmem:[#allocation7 + $0x290] sm:$0xff]
    %v156 = vld [vmem:[#allocation7 + $0x298] sm:$0xff]
    %v157 = vld [vmem:[#allocation7 + $0x2a0] sm:$0xff]
    %v158 = vld [vmem:[#allocation7 + $0x2a8] sm:$0xff]
    %v159 = vld [vmem:[#allocation7 + $0x2b0] sm:$0xff]
    %v160 = vld [vmem:[#allocation7 + $0x2b8] sm:$0xff]
    %v161 = vld [vmem:[#allocation7 + $0x2c0] sm:$0xff]
    %v162 = vld [vmem:[#allocation7 + $0x2c8] sm:$0xff]
    %v163 = vld [vmem:[#allocation7 + $0x2d0] sm:$0xff]
    %v164 = vld [vmem:[#allocation7 + $0x2d8] sm:$0xff]
    %v165 = vld [vmem:[#allocation7 + $0x2e0] sm:$0xff]
    %v166 = vld [vmem:[#allocation7 + $0x2e8] sm:$0xff]
    %v167 = vld [vmem:[#allocation7 + $0x2f0] sm:$0xff]
    %v168 = vld [vmem:[#allocation7 + $0x2f8] sm:$0xff]
    %v169 = vld [vmem:[#allocation7 + $0x300] sm:$0xff]
    %v170 = vld [vmem:[#allocation7 + $0x308] sm:$0xff]
    %v171 = vld [vmem:[#allocation7 + $0x310] sm:$0xff]
    %v172 = vld [vmem:[#allocation7 + $0x318] sm:$0xff]
    %v173 = vld [vmem:[#allocation7 + $0x320] sm:$0xff]
    %v174 = vld [vmem:[#allocation7 + $0x328] sm:$0xff]
    %v175 = vld [vmem:[#allocation7 + $0x330] sm:$0xff]
    %v176 = vld [vmem:[#allocation7 + $0x338] sm:$0xff]
    %v177 = vld [vmem:[#allocation7 + $0x340] sm:$0xff]
    %v178 = vld [vmem:[#allocation7 + $0x348] sm:$0xff]
    %v179 = vld [vmem:[#allocation7 + $0x350] sm:$0xff]
    %v180 = vld [vmem:[#allocation7 + $0x358] sm:$0xff]
    %v181 = vld [vmem:[#allocation7 + $0x360] sm:$0xff]
    %v182 = vld [vmem:[#allocation7 + $0x368] sm:$0xff]
    %v183 = vld [vmem:[#allocation7 + $0x370] sm:$0xff]
    %v184 = vld [vmem:[#allocation7 + $0x378] sm:$0xff]
    %v185 = vld [vmem:[#allocation7 + $0x380] sm:$0xff]
    %v186 = vld [vmem:[#allocation7 + $0x388] sm:$0xff]
    %v187 = vld [vmem:[#allocation7 + $0x390] sm:$0xff]
    %v188 = vld [vmem:[#allocation7 + $0x398] sm:$0xff]
    %v189 = vld [vmem:[#allocation7 + $0x3a0] sm:$0xff]
    %v190 = vld [vmem:[#allocation7 + $0x3a8] sm:$0xff]
    %v191 = vld [vmem:[#allocation7 + $0x3b0] sm:$0xff]
    %v192 = vld [vmem:[#allocation7 + $0x3b8] sm:$0xff]
    %v193 = vld [vmem:[#allocation7 + $0x3c0] sm:$0xff]
    %v194 = vld [vmem:[#allocation7 + $0x3c8] sm:$0xff]
    %v195 = vld [vmem:[#allocation7 + $0x3d0] sm:$0xff]
    %v196 = vld [vmem:[#allocation7 + $0x3d8] sm:$0xff]
    %v197 = vld [vmem:[#allocation7 + $0x3e0] sm:$0xff]
    %v198 = vld [vmem:[#allocation7 + $0x3e8] sm:$0xff]
    %v199 = vld [vmem:[#allocation7 + $0x3f0] sm:$0xff]
    %v200 = vld [vmem:[#allocation7 + $0x3f8] sm:$0xff]
    %v201 = vld [vmem:[#allocation7 + $0x400] sm:$0xff]
    %v202 = vld [vmem:[#allocation7 + $0x408] sm:$0xff]
    %v203 = vld [vmem:[#allocation7 + $0x410] sm:$0xff]
    %v204 = vld [vmem:[#allocation7 + $0x418] sm:$0xff]
    %v205 = vld [vmem:[#allocation7 + $0x420] sm:$0xff]
    %v206 = vld [vmem:[#allocation7 + $0x428] sm:$0xff]
    %v207 = vld [vmem:[#allocation7 + $0x430] sm:$0xff]
    %v208 = vld [vmem:[#allocation7 + $0x438] sm:$0xff]
    %v209 = vld [vmem:[#allocation7 + $0x440] sm:$0xff]
    %v210 = vld [vmem:[#allocation7 + $0x448] sm:$0xff]
    %v211 = vld [vmem:[#allocation7 + $0x450] sm:$0xff]
    %v212 = vld [vmem:[#allocation7 + $0x458] sm:$0xff]
    %v213 = vld [vmem:[#allocation7 + $0x460] sm:$0xff]
    %v214 = vld [vmem:[#allocation7 + $0x468] sm:$0xff]
    %v215 = vld [vmem:[#allocation7 + $0x470] sm:$0xff]
    %v216 = vld [vmem:[#allocation7 + $0x478] sm:$0xff]
    %v217 = vld [vmem:[#allocation7 + $0x480] sm:$0xff]
    %v218 = vld [vmem:[#allocation7 + $0x488] sm:$0xff]
    %v219 = vld [vmem:[#allocation7 + $0x490] sm:$0xff]
    %v220 = vld [vmem:[#allocation7 + $0x498] sm:$0xff]
    %v221 = vld [vmem:[#allocation7 + $0x4a0] sm:$0xff]
    %v222 = vld [vmem:[#allocation7 + $0x4a8] sm:$0xff]
    %v223 = vld [vmem:[#allocation7 + $0x4b0] sm:$0xff]
    %v224 = vld [vmem:[#allocation7 + $0x4b8] sm:$0xff]
    %v225 = vld [vmem:[#allocation7 + $0x4c0] sm:$0xff]
    %v226 = vld [vmem:[#allocation7 + $0x4c8] sm:$0xff]
    %v227 = vld [vmem:[#allocation7 + $0x4d0] sm:$0xff]
    %v228 = vld [vmem:[#allocation7 + $0x4d8] sm:$0xff]
    %v229 = vld [vmem:[#allocation7 + $0x4e0] sm:$0xff]
    %v230 = vld [vmem:[#allocation7 + $0x4e8] sm:$0xff]
    %v231 = vld [vmem:[#allocation7 + $0x4f0] sm:$0xff]
    %v232 = vld [vmem:[#allocation7 + $0x4f8] sm:$0xff]
    %v233 = vld [vmem:[#allocation7 + $0x500] sm:$0xff]
    %v234 = vld [vmem:[#allocation7 + $0x508] sm:$0xff]
    %v235 = vld [vmem:[#allocation7 + $0x510] sm:$0xff]
    %v236 = vld [vmem:[#allocation7 + $0x518] sm:$0xff]
    %v237 = vld [vmem:[#allocation7 + $0x520] sm:$0xff]
    %v238 = vld [vmem:[#allocation7 + $0x528] sm:$0xff]
    %v239 = vld [vmem:[#allocation7 + $0x530] sm:$0xff]
    %v240 = vld [vmem:[#allocation7 + $0x538] sm:$0xff]
    %v241 = vld [vmem:[#allocation7 + $0x540] sm:$0xff]
    %v242 = vld [vmem:[#allocation7 + $0x548] sm:$0xff]
    %v243 = vld [vmem:[#allocation7 + $0x550] sm:$0xff]
    %v244 = vld [vmem:[#allocation7 + $0x558] sm:$0xff]
    %v245 = vld [vmem:[#allocation7 + $0x560] sm:$0xff]
    %v246 = vld [vmem:[#allocation7 + $0x568] sm:$0xff]
    %v247 = vld [vmem:[#allocation7 + $0x570] sm:$0xff]
    %v248 = vld [vmem:[#allocation7 + $0x578] sm:$0xff]
    %v249 = vld [vmem:[#allocation7 + $0x580] sm:$0xff]
    %v250 = vld [vmem:[#allocation7 + $0x588] sm:$0xff]
    %v251 = vld [vmem:[#allocation7 + $0x590] sm:$0xff]
    %v252 = vld [vmem:[#allocation7 + $0x598] sm:$0xff]
    %v253 = vld [vmem:[#allocation7 + $0x5a0] sm:$0xff]
    %v254 = vld [vmem:[#allocation7 + $0x5a8] sm:$0xff]
    %v255 = vld [vmem:[#allocation7 + $0x5b0] sm:$0xff]
    %v256 = vld [vmem:[#allocation7 + $0x5b8] sm:$0xff]
    %v257 = vld [vmem:[#allocation7 + $0x5c0] sm:$0xff]
    %v258 = vld [vmem:[#allocation7 + $0x5c8] sm:$0xff]
    %v259 = vld [vmem:[#allocation7 + $0x5d0] sm:$0xff]
    %v260 = vld [vmem:[#allocation7 + $0x5d8] sm:$0xff]
    %v261 = vld [vmem:[#allocation7 + $0x5e0] sm:$0xff]
    %v262 = vld [vmem:[#allocation7 + $0x5e8] sm:$0xff]
    %v263 = vld [vmem:[#allocation7 + $0x5f0] sm:$0xff]
    %v264 = vld [vmem:[#allocation7 + $0x5f8] sm:$0xff]
    %v265 = vld [vmem:[#allocation7 + $0x600] sm:$0xff]
    %v266 = vld [vmem:[#allocation7 + $0x608] sm:$0xff]
    %v267 = vld [vmem:[#allocation7 + $0x610] sm:$0xff]
    %v268 = vld [vmem:[#allocation7 + $0x618] sm:$0xff]
    %v269 = vld [vmem:[#allocation7 + $0x620] sm:$0xff]
    %v270 = vld [vmem:[#allocation7 + $0x628] sm:$0xff]
    %v271 = vld [vmem:[#allocation7 + $0x630] sm:$0xff]
    %v272 = vld [vmem:[#allocation7 + $0x638] sm:$0xff]
    %v273 = vld [vmem:[#allocation7 + $0x640] sm:$0xff]
    %v274 = vld [vmem:[#allocation7 + $0x648] sm:$0xff]
    %v275 = vld [vmem:[#allocation7 + $0x650] sm:$0xff]
    %v276 = vld [vmem:[#allocation7 + $0x658] sm:$0xff]
    %v277 = vld [vmem:[#allocation7 + $0x660] sm:$0xff]
    %v278 = vld [vmem:[#allocation7 + $0x668] sm:$0xff]
    %v279 = vld [vmem:[#allocation7 + $0x670] sm:$0xff]
    %v280 = vld [vmem:[#allocation7 + $0x678] sm:$0xff]
    %v281 = vld [vmem:[#allocation7 + $0x680] sm:$0xff]
    %v282 = vld [vmem:[#allocation7 + $0x688] sm:$0xff]
    %v283 = vld [vmem:[#allocation7 + $0x690] sm:$0xff]
    %v284 = vld [vmem:[#allocation7 + $0x698] sm:$0xff]
    %v285 = vld [vmem:[#allocation7 + $0x6a0] sm:$0xff]
    %v286 = vld [vmem:[#allocation7 + $0x6a8] sm:$0xff]
    %v287 = vld [vmem:[#allocation7 + $0x6b0] sm:$0xff]
    %v288 = vld [vmem:[#allocation7 + $0x6b8] sm:$0xff]
    %v289 = vld [vmem:[#allocation7 + $0x6c0] sm:$0xff]
    %v290 = vld [vmem:[#allocation7 + $0x6c8] sm:$0xff]
    %v291 = vld [vmem:[#allocation7 + $0x6d0] sm:$0xff]
    %v292 = vld [vmem:[#allocation7 + $0x6d8] sm:$0xff]
    %v293 = vld [vmem:[#allocation7 + $0x6e0] sm:$0xff]
    %v294 = vld [vmem:[#allocation7 + $0x6e8] sm:$0xff]
    %v295 = vld [vmem:[#allocation7 + $0x6f0] sm:$0xff]
    %v296 = vld [vmem:[#allocation7 + $0x6f8] sm:$0xff]
    %v297 = vld [vmem:[#allocation7 + $0x700] sm:$0xff]
    %v298 = vld [vmem:[#allocation7 + $0x708] sm:$0xff]
    %v299 = vld [vmem:[#allocation7 + $0x710] sm:$0xff]
    %v300 = vld [vmem:[#allocation7 + $0x718] sm:$0xff]
    %v301 = vld [vmem:[#allocation7 + $0x720] sm:$0xff]
    %v302 = vld [vmem:[#allocation7 + $0x728] sm:$0xff]
    %v303 = vld [vmem:[#allocation7 + $0x730] sm:$0xff]
    %v304 = vld [vmem:[#allocation7 + $0x738] sm:$0xff]
    %v305 = vld [vmem:[#allocation7 + $0x740] sm:$0xff]
    %v306 = vld [vmem:[#allocation7 + $0x748] sm:$0xff]
    %v307 = vld [vmem:[#allocation7 + $0x750] sm:$0xff]
    %v308 = vld [vmem:[#allocation7 + $0x758] sm:$0xff]
    %v309 = vld [vmem:[#allocation7 + $0x760] sm:$0xff]
    %v310 = vld [vmem:[#allocation7 + $0x768] sm:$0xff]
    %v311 = vld [vmem:[#allocation7 + $0x770] sm:$0xff]
    %v312 = vld [vmem:[#allocation7 + $0x778] sm:$0xff]
    %v313 = vld [vmem:[#allocation7 + $0x780] sm:$0xff]
    %v314 = vld [vmem:[#allocation7 + $0x788] sm:$0xff]
    %v315 = vld [vmem:[#allocation7 + $0x790] sm:$0xff]
    %v316 = vld [vmem:[#allocation7 + $0x798] sm:$0xff]
    %v317 = vld [vmem:[#allocation7 + $0x7a0] sm:$0xff]
    %v318 = vld [vmem:[#allocation7 + $0x7a8] sm:$0xff]
    %v319 = vld [vmem:[#allocation7 + $0x7b0] sm:$0xff]
    %v320 = vld [vmem:[#allocation7 + $0x7b8] sm:$0xff]
    %v321 = vld [vmem:[#allocation7 + $0x7c0] sm:$0xff]
    %v322 = vld [vmem:[#allocation7 + $0x7c8] sm:$0xff]
    %v323 = vld [vmem:[#allocation7 + $0x7d0] sm:$0xff]
    %v324 = vld [vmem:[#allocation7 + $0x7d8] sm:$0xff]
    %v325 = vld [vmem:[#allocation7 + $0x7e0] sm:$0xff]
    %v326 = vld [vmem:[#allocation7 + $0x7e8] sm:$0xff]
    %v327 = vld [vmem:[#allocation7 + $0x7f0] sm:$0xff]
    %v328 = vld [vmem:[#allocation7 + $0x7f8] sm:$0xff]
    %v329 = vld [vmem:[#allocation7 + $0x800] sm:$0xff]
    %v330 = vld [vmem:[#allocation7 + $0x808] sm:$0xff]
    %v331 = vld [vmem:[#allocation7 + $0x810] sm:$0xff]
    %v332 = vld [vmem:[#allocation7 + $0x818] sm:$0xff]
    %v333 = vld [vmem:[#allocation7 + $0x820] sm:$0xff]
    %v334 = vld [vmem:[#allocation7 + $0x828] sm:$0xff]
    %v335 = vld [vmem:[#allocation7 + $0x830] sm:$0xff]
    %v336 = vld [vmem:[#allocation7 + $0x838] sm:$0xff]
    %v337 = vld [vmem:[#allocation7 + $0x840] sm:$0xff]
    %v338 = vld [vmem:[#allocation7 + $0x848] sm:$0xff]
    %v339 = vld [vmem:[#allocation7 + $0x850] sm:$0xff]
    %v340 = vld [vmem:[#allocation7 + $0x858] sm:$0xff]
    %v341 = vld [vmem:[#allocation7 + $0x860] sm:$0xff]
    %v342 = vld [vmem:[#allocation7 + $0x868] sm:$0xff]
    %v343 = vld [vmem:[#allocation7 + $0x870] sm:$0xff]
    %v344 = vld [vmem:[#allocation7 + $0x878] sm:$0xff]
    %v345 = vld [vmem:[#allocation7 + $0x880] sm:$0xff]
    %v346 = vld [vmem:[#allocation7 + $0x888] sm:$0xff]
    %v347 = vld [vmem:[#allocation7 + $0x890] sm:$0xff]
    %v348 = vld [vmem:[#allocation7 + $0x898] sm:$0xff]
    %v349 = vld [vmem:[#allocation7 + $0x8a0] sm:$0xff]
    %v350 = vld [vmem:[#allocation7 + $0x8a8] sm:$0xff]
    %v351 = vld [vmem:[#allocation7 + $0x8b0] sm:$0xff]
    %v352 = vld [vmem:[#allocation7 + $0x8b8] sm:$0xff]
    %v353 = vld [vmem:[#allocation7 + $0x8c0] sm:$0xff]
    %v354 = vld [vmem:[#allocation7 + $0x8c8] sm:$0xff]
    %v355 = vld [vmem:[#allocation7 + $0x8d0] sm:$0xff]
    %v356 = vld [vmem:[#allocation7 + $0x8d8] sm:$0xff]
    %v357 = vld [vmem:[#allocation7 + $0x8e0] sm:$0xff]
    %v358 = vld [vmem:[#allocation7 + $0x8e8] sm:$0xff]
    %v359 = vld [vmem:[#allocation7 + $0x8f0] sm:$0xff]
    %v360 = vld [vmem:[#allocation7 + $0x8f8] sm:$0xff]
    %v361 = vld [vmem:[#allocation7 + $0x900] sm:$0xff]
    %v362 = vld [vmem:[#allocation7 + $0x908] sm:$0xff]
    %v363 = vld [vmem:[#allocation7 + $0x910] sm:$0xff]
    %v364 = vld [vmem:[#allocation7 + $0x918] sm:$0xff]
    %v365 = vld [vmem:[#allocation7 + $0x920] sm:$0xff]
    %v366 = vld [vmem:[#allocation7 + $0x928] sm:$0xff]
    %v367 = vld [vmem:[#allocation7 + $0x930] sm:$0xff]
    %v368 = vld [vmem:[#allocation7 + $0x938] sm:$0xff]
    %v369 = vld [vmem:[#allocation7 + $0x940] sm:$0xff]
    %v370 = vld [vmem:[#allocation7 + $0x948] sm:$0xff]
    %v371 = vld [vmem:[#allocation7 + $0x950] sm:$0xff]
    %v372 = vld [vmem:[#allocation7 + $0x958] sm:$0xff]
    %v373 = vld [vmem:[#allocation7 + $0x960] sm:$0xff]
    %v374 = vld [vmem:[#allocation7 + $0x968] sm:$0xff]
    %v375 = vld [vmem:[#allocation7 + $0x970] sm:$0xff]
    %v376 = vld [vmem:[#allocation7 + $0x978] sm:$0xff]
    %v377 = vld [vmem:[#allocation7 + $0x980] sm:$0xff]
    %v378 = vld [vmem:[#allocation7 + $0x988] sm:$0xff]
    %v379 = vld [vmem:[#allocation7 + $0x990] sm:$0xff]
    %v380 = vld [vmem:[#allocation7 + $0x998] sm:$0xff]
    %v381 = vld [vmem:[#allocation7 + $0x9a0] sm:$0xff]
    %v382 = vld [vmem:[#allocation7 + $0x9a8] sm:$0xff]
    %v383 = vld [vmem:[#allocation7 + $0x9b0] sm:$0xff]
    %v384 = vld [vmem:[#allocation7 + $0x9b8] sm:$0xff]
    %v385 = vld [vmem:[#allocation7 + $0x9c0] sm:$0xff]
    %v386 = vld [vmem:[#allocation7 + $0x9c8] sm:$0xff]
    %v387 = vld [vmem:[#allocation7 + $0x9d0] sm:$0xff]
    %v388 = vld [vmem:[#allocation7 + $0x9d8] sm:$0xff]
    %v389 = vld [vmem:[#allocation7 + $0x9e0] sm:$0xff]
    %v390 = vld [vmem:[#allocation7 + $0x9e8] sm:$0xff]
    %v391 = vld [vmem:[#allocation7 + $0x9f0] sm:$0xff]
    %v392 = vld [vmem:[#allocation7 + $0x9f8] sm:$0xff]
    %v393 = vld [vmem:[#allocation7 + $0xa00] sm:$0xff]
    %v394 = vld [vmem:[#allocation7 + $0xa08] sm:$0xff]
    %v395 = vld [vmem:[#allocation7 + $0xa10] sm:$0xff]
    %v396 = vld [vmem:[#allocation7 + $0xa18] sm:$0xff]
    %v397 = vld [vmem:[#allocation7 + $0xa20] sm:$0xff]
    %v398 = vld [vmem:[#allocation7 + $0xa28] sm:$0xff]
    %v399 = vld [vmem:[#allocation7 + $0xa30] sm:$0xff]
    %v400 = vld [vmem:[#allocation7 + $0xa38] sm:$0xff]
    %v401 = vld [vmem:[#allocation7 + $0xa40] sm:$0xff]
    %v402 = vld [vmem:[#allocation7 + $0xa48] sm:$0xff]
    %v403 = vld [vmem:[#allocation7 + $0xa50] sm:$0xff]
    %v404 = vld [vmem:[#allocation7 + $0xa58] sm:$0xff]
    %v405 = vld [vmem:[#allocation7 + $0xa60] sm:$0xff]
    %v406 = vld [vmem:[#allocation7 + $0xa68] sm:$0xff]
    %v407 = vld [vmem:[#allocation7 + $0xa70] sm:$0xff]
    %v408 = vld [vmem:[#allocation7 + $0xa78] sm:$0xff]
    %v409 = vld [vmem:[#allocation7 + $0xa80] sm:$0xff]
    %v410 = vld [vmem:[#allocation7 + $0xa88] sm:$0xff]
    %v411 = vld [vmem:[#allocation7 + $0xa90] sm:$0xff]
    %v412 = vld [vmem:[#allocation7 + $0xa98] sm:$0xff]
    %v413 = vld [vmem:[#allocation7 + $0xaa0] sm:$0xff]
    %v414 = vld [vmem:[#allocation7 + $0xaa8] sm:$0xff]
    %v415 = vld [vmem:[#allocation7 + $0xab0] sm:$0xff]
    %v416 = vld [vmem:[#allocation7 + $0xab8] sm:$0xff]
    %v417 = vld [vmem:[#allocation7 + $0xac0] sm:$0xff]
    %v418 = vld [vmem:[#allocation7 + $0xac8] sm:$0xff]
    %v419 = vld [vmem:[#allocation7 + $0xad0] sm:$0xff]
    %v420 = vld [vmem:[#allocation7 + $0xad8] sm:$0xff]
    %v421 = vld [vmem:[#allocation7 + $0xae0] sm:$0xff]
    %v422 = vld [vmem:[#allocation7 + $0xae8] sm:$0xff]
    %v423 = vld [vmem:[#allocation7 + $0xaf0] sm:$0xff]
    %v424 = vld [vmem:[#allocation7 + $0xaf8] sm:$0xff]
    %v425 = vld [vmem:[#allocation7 + $0xb00] sm:$0xff]
    %v426 = vld [vmem:[#allocation7 + $0xb08] sm:$0xff]
    %v427 = vld [vmem:[#allocation7 + $0xb10] sm:$0xff]
    %v428 = vld [vmem:[#allocation7 + $0xb18] sm:$0xff]
    %v429 = vld [vmem:[#allocation7 + $0xb20] sm:$0xff]
    %v430 = vld [vmem:[#allocation7 + $0xb28] sm:$0xff]
    %v431 = vld [vmem:[#allocation7 + $0xb30] sm:$0xff]
    %v432 = vld [vmem:[#allocation7 + $0xb38] sm:$0xff]
    %v433 = vld [vmem:[#allocation7 + $0xb40] sm:$0xff]
    %v434 = vld [vmem:[#allocation7 + $0xb48] sm:$0xff]
    %v435 = vld [vmem:[#allocation7 + $0xb50] sm:$0xff]
    %v436 = vld [vmem:[#allocation7 + $0xb58] sm:$0xff]
    %v437 = vld [vmem:[#allocation7 + $0xb60] sm:$0xff]
    %v438 = vld [vmem:[#allocation7 + $0xb68] sm:$0xff]
    %v439 = vld [vmem:[#allocation7 + $0xb70] sm:$0xff]
    %v440 = vld [vmem:[#allocation7 + $0xb78] sm:$0xff]
    %v441 = vld [vmem:[#allocation7 + $0xb80] sm:$0xff]
    %v442 = vld [vmem:[#allocation7 + $0xb88] sm:$0xff]
    %v443 = vld [vmem:[#allocation7 + $0xb90] sm:$0xff]
    %v444 = vld [vmem:[#allocation7 + $0xb98] sm:$0xff]
    %v445 = vld [vmem:[#allocation7 + $0xba0] sm:$0xff]
    %v446 = vld [vmem:[#allocation7 + $0xba8] sm:$0xff]
    %v447 = vld [vmem:[#allocation7 + $0xbb0] sm:$0xff]
    %v448 = vld [vmem:[#allocation7 + $0xbb8] sm:$0xff]
    %v449 = vld [vmem:[#allocation7 + $0xbc0] sm:$0xff]
    %v450 = vld [vmem:[#allocation7 + $0xbc8] sm:$0xff]
    %v451 = vld [vmem:[#allocation7 + $0xbd0] sm:$0xff]
    %v452 = vld [vmem:[#allocation7 + $0xbd8] sm:$0xff]
    %v453 = vld [vmem:[#allocation7 + $0xbe0] sm:$0xff]
    %v454 = vld [vmem:[#allocation7 + $0xbe8] sm:$0xff]
    %v455 = vld [vmem:[#allocation7 + $0xbf0] sm:$0xff]
    %v456 = vld [vmem:[#allocation7 + $0xbf8] sm:$0xff]
    %v457 = vld [vmem:[#allocation7 + $0xc00] sm:$0xff]
    %v458 = vld [vmem:[#allocation7 + $0xc08] sm:$0xff]
    %v459 = vld [vmem:[#allocation7 + $0xc10] sm:$0xff]
    %v460 = vld [vmem:[#allocation7 + $0xc18] sm:$0xff]
    %v461 = vld [vmem:[#allocation7 + $0xc20] sm:$0xff]
    %v462 = vld [vmem:[#allocation7 + $0xc28] sm:$0xff]
    %v463 = vld [vmem:[#allocation7 + $0xc30] sm:$0xff]
    %v464 = vld [vmem:[#allocation7 + $0xc38] sm:$0xff]
    %v465 = vld [vmem:[#allocation7 + $0xc40] sm:$0xff]
    %v466 = vld [vmem:[#allocation7 + $0xc48] sm:$0xff]
    %v467 = vld [vmem:[#allocation7 + $0xc50] sm:$0xff]
    %v468 = vld [vmem:[#allocation7 + $0xc58] sm:$0xff]
    %v469 = vld [vmem:[#allocation7 + $0xc60] sm:$0xff]
    %v470 = vld [vmem:[#allocation7 + $0xc68] sm:$0xff]
    %v471 = vld [vmem:[#allocation7 + $0xc70] sm:$0xff]
    %v472 = vld [vmem:[#allocation7 + $0xc78] sm:$0xff]
    %v473 = vld [vmem:[#allocation7 + $0xc80] sm:$0xff]
    %v474 = vld [vmem:[#allocation7 + $0xc88] sm:$0xff]
    %v475 = vld [vmem:[#allocation7 + $0xc90] sm:$0xff]
    %v476 = vld [vmem:[#allocation7 + $0xc98] sm:$0xff]
    %v477 = vld [vmem:[#allocation7 + $0xca0] sm:$0xff]
    %v478 = vld [vmem:[#allocation7 + $0xca8] sm:$0xff]
    %v479 = vld [vmem:[#allocation7 + $0xcb0] sm:$0xff]
    %v480 = vld [vmem:[#allocation7 + $0xcb8] sm:$0xff]
    %v481 = vld [vmem:[#allocation7 + $0xcc0] sm:$0xff]
    %v482 = vld [vmem:[#allocation7 + $0xcc8] sm:$0xff]
    %v483 = vld [vmem:[#allocation7 + $0xcd0] sm:$0xff]
    %v484 = vld [vmem:[#allocation7 + $0xcd8] sm:$0xff]
    %v485 = vld [vmem:[#allocation7 + $0xce0] sm:$0xff]
    %v486 = vld [vmem:[#allocation7 + $0xce8] sm:$0xff]
    %v487 = vld [vmem:[#allocation7 + $0xcf0] sm:$0xff]
    %v488 = vld [vmem:[#allocation7 + $0xcf8] sm:$0xff]
    %v489 = vld [vmem:[#allocation7 + $0xd00] sm:$0xff]
    %v490 = vld [vmem:[#allocation7 + $0xd08] sm:$0xff]
    %v491 = vld [vmem:[#allocation7 + $0xd10] sm:$0xff]
    %v492 = vld [vmem:[#allocation7 + $0xd18] sm:$0xff]
    %v493 = vld [vmem:[#allocation7 + $0xd20] sm:$0xff]
    %v494 = vld [vmem:[#allocation7 + $0xd28] sm:$0xff]
    %v495 = vld [vmem:[#allocation7 + $0xd30] sm:$0xff]
    %v496 = vld [vmem:[#allocation7 + $0xd38] sm:$0xff]
    %v497 = vld [vmem:[#allocation7 + $0xd40] sm:$0xff]
    %v498 = vld [vmem:[#allocation7 + $0xd48] sm:$0xff]
    %v499 = vld [vmem:[#allocation7 + $0xd50] sm:$0xff]
    %v500 = vld [vmem:[#allocation7 + $0xd58] sm:$0xff]
    %v501 = vld [vmem:[#allocation7 + $0xd60] sm:$0xff]
    %v502 = vld [vmem:[#allocation7 + $0xd68] sm:$0xff]
    %v503 = vld [vmem:[#allocation7 + $0xd70] sm:$0xff]
    %v504 = vld [vmem:[#allocation7 + $0xd78] sm:$0xff]
    %v505 = vld [vmem:[#allocation7 + $0xd80] sm:$0xff]
    %v506 = vld [vmem:[#allocation7 + $0xd88] sm:$0xff]
    %v507 = vld [vmem:[#allocation7 + $0xd90] sm:$0xff]
    %v508 = vld [vmem:[#allocation7 + $0xd98] sm:$0xff]
    %v509 = vld [vmem:[#allocation7 + $0xda0] sm:$0xff]
    %v510 = vld [vmem:[#allocation7 + $0xda8] sm:$0xff]
    %v511 = vld [vmem:[#allocation7 + $0xdb0] sm:$0xff]
    %v512 = vld [vmem:[#allocation7 + $0xdb8] sm:$0xff]
    %v513 = vld [vmem:[#allocation7 + $0xdc0] sm:$0xff]
    %v514 = vld [vmem:[#allocation7 + $0xdc8] sm:$0xff]
    %v515 = vld [vmem:[#allocation7 + $0xdd0] sm:$0xff]
    %v516 = vld [vmem:[#allocation7 + $0xdd8] sm:$0xff]
    %v517 = vld [vmem:[#allocation7 + $0xde0] sm:$0xff]
    %v518 = vld [vmem:[#allocation7 + $0xde8] sm:$0xff]
    %v519 = vld [vmem:[#allocation7 + $0xdf0] sm:$0xff]
    %v520 = vld [vmem:[#allocation7 + $0xdf8] sm:$0xff]
    %v521 = vld [vmem:[#allocation7 + $0xe00] sm:$0xff]
    %v522 = vld [vmem:[#allocation7 + $0xe08] sm:$0xff]
    %v523 = vld [vmem:[#allocation7 + $0xe10] sm:$0xff]
    %v524 = vld [vmem:[#allocation7 + $0xe18] sm:$0xff]
    %v525 = vld [vmem:[#allocation7 + $0xe20] sm:$0xff]
    %v526 = vld [vmem:[#allocation7 + $0xe28] sm:$0xff]
    %v527 = vld [vmem:[#allocation7 + $0xe30] sm:$0xff]
    %v528 = vld [vmem:[#allocation7 + $0xe38] sm:$0xff]
    %v529 = vld [vmem:[#allocation7 + $0xe40] sm:$0xff]
    %v530 = vld [vmem:[#allocation7 + $0xe48] sm:$0xff]
    %v531 = vld [vmem:[#allocation7 + $0xe50] sm:$0xff]
    %v532 = vld [vmem:[#allocation7 + $0xe58] sm:$0xff]
    %v533 = vld [vmem:[#allocation7 + $0xe60] sm:$0xff]
    %v534 = vld [vmem:[#allocation7 + $0xe68] sm:$0xff]
    %v535 = vld [vmem:[#allocation7 + $0xe70] sm:$0xff]
    %v536 = vld [vmem:[#allocation7 + $0xe78] sm:$0xff]
    %v537 = vld [vmem:[#allocation7 + $0xe80] sm:$0xff]
    %v538 = vld [vmem:[#allocation7 + $0xe88] sm:$0xff]
    %v539 = vld [vmem:[#allocation7 + $0xe90] sm:$0xff]
    %v540 = vld [vmem:[#allocation7 + $0xe98] sm:$0xff]
    %v541 = vld [vmem:[#allocation7 + $0xea0] sm:$0xff]
    %v542 = vld [vmem:[#allocation7 + $0xea8] sm:$0xff]
    %v543 = vld [vmem:[#allocation7 + $0xeb0] sm:$0xff]
    %v544 = vld [vmem:[#allocation7 + $0xeb8] sm:$0xff]
    %v545 = vld [vmem:[#allocation7 + $0xec0] sm:$0xff]
    %v546 = vld [vmem:[#allocation7 + $0xec8] sm:$0xff]
    %v547 = vld [vmem:[#allocation7 + $0xed0] sm:$0xff]
    %v548 = vld [vmem:[#allocation7 + $0xed8] sm:$0xff]
    %v549 = vld [vmem:[#allocation7 + $0xee0] sm:$0xff]
    %v550 = vld [vmem:[#allocation7 + $0xee8] sm:$0xff]
    %v551 = vld [vmem:[#allocation7 + $0xef0] sm:$0xff]
    %v552 = vld [vmem:[#allocation7 + $0xef8] sm:$0xff]
    %v553 = vld [vmem:[#allocation7 + $0xf00] sm:$0xff]
    %v554 = vld [vmem:[#allocation7 + $0xf08] sm:$0xff]
    %v555 = vld [vmem:[#allocation7 + $0xf10] sm:$0xff]
    %v556 = vld [vmem:[#allocation7 + $0xf18] sm:$0xff]
    %v557 = vld [vmem:[#allocation7 + $0xf20] sm:$0xff]
    %v558 = vld [vmem:[#allocation7 + $0xf28] sm:$0xff]
    %v559 = vld [vmem:[#allocation7 + $0xf30] sm:$0xff]
    %v560 = vld [vmem:[#allocation7 + $0xf38] sm:$0xff]
    %v561 = vld [vmem:[#allocation7 + $0xf40] sm:$0xff]
    %v562 = vld [vmem:[#allocation7 + $0xf48] sm:$0xff]
    %v563 = vld [vmem:[#allocation7 + $0xf50] sm:$0xff]
    %v564 = vld [vmem:[#allocation7 + $0xf58] sm:$0xff]
    %v565 = vld [vmem:[#allocation7 + $0xf60] sm:$0xff]
    %v566 = vld [vmem:[#allocation7 + $0xf68] sm:$0xff]
    %v567 = vld [vmem:[#allocation7 + $0xf70] sm:$0xff]
    %v568 = vld [vmem:[#allocation7 + $0xf78] sm:$0xff]
    %v569 = vld [vmem:[#allocation7 + $0xf80] sm:$0xff]
    %v570 = vld [vmem:[#allocation7 + $0xf88] sm:$0xff]
    %v571 = vld [vmem:[#allocation7 + $0xf90] sm:$0xff]
    %v572 = vld [vmem:[#allocation7 + $0xf98] sm:$0xff]
    %v573 = vld [vmem:[#allocation7 + $0xfa0] sm:$0xff]
    %v574 = vld [vmem:[#allocation7 + $0xfa8] sm:$0xff]
    %v575 = vld [vmem:[#allocation7 + $0xfb0] sm:$0xff]
    %v576 = vld [vmem:[#allocation7 + $0xfb8] sm:$0xff]
    %v577 = vld [vmem:[#allocation7 + $0xfc0] sm:$0xff]
    %v578 = vld [vmem:[#allocation7 + $0xfc8] sm:$0xff]
    %v579 = vld [vmem:[#allocation7 + $0xfd0] sm:$0xff]
    %v580 = vld [vmem:[#allocation7 + $0xfd8] sm:$0xff]
    %v581 = vld [vmem:[#allocation7 + $0xfe0] sm:$0xff]
    %v582 = vld [vmem:[#allocation7 + $0xfe8] sm:$0xff]
    %v583 = vld [vmem:[#allocation7 + $0xff0] sm:$0xff]
    %v584 = vld [vmem:[#allocation7 + $0xff8] sm:$0xff]
    %v585 = vld [vmem:[#allocation7 + $0x1000] sm:$0xff]
    %v586 = vld [vmem:[#allocation7 + $0x1008] sm:$0xff]
    %v587 = vld [vmem:[#allocation7 + $0x1010] sm:$0xff]
    %v588 = vld [vmem:[#allocation7 + $0x1018] sm:$0xff]
    %v589 = vld [vmem:[#allocation7 + $0x1020] sm:$0xff]
    %v590 = vld [vmem:[#allocation7 + $0x1028] sm:$0xff]
    %v591 = vld [vmem:[#allocation7 + $0x1030] sm:$0xff]
    %v592 = vld [vmem:[#allocation7 + $0x1038] sm:$0xff]
    %v593 = vld [vmem:[#allocation7 + $0x1040] sm:$0xff]
    %v594 = vld [vmem:[#allocation7 + $0x1048] sm:$0xff]
    %v595 = vld [vmem:[#allocation7 + $0x1050] sm:$0xff]
    %v596 = vld [vmem:[#allocation7 + $0x1058] sm:$0xff]
    %v597 = vld [vmem:[#allocation7 + $0x1060] sm:$0xff]
    %v598 = vld [vmem:[#allocation7 + $0x1068] sm:$0xff]
    %v599 = vld [vmem:[#allocation7 + $0x1070] sm:$0xff]
    %v600 = vld [vmem:[#allocation7 + $0x1078] sm:$0xff]
    %v601 = vld [vmem:[#allocation7 + $0x1080] sm:$0xff]
    %v602 = vld [vmem:[#allocation7 + $0x1088] sm:$0xff]
    %v603 = vld [vmem:[#allocation7 + $0x1090] sm:$0xff]
    %v604 = vld [vmem:[#allocation7 + $0x1098] sm:$0xff]
    %v605 = vld [vmem:[#allocation7 + $0x10a0] sm:$0xff]
    %v606 = vld [vmem:[#allocation7 + $0x10a8] sm:$0xff]
    %v607 = vld [vmem:[#allocation7 + $0x10b0] sm:$0xff]
    %v608 = vld [vmem:[#allocation7 + $0x10b8] sm:$0xff]
    %v609 = vld [vmem:[#allocation7 + $0x10c0] sm:$0xff]
    %v610 = vld [vmem:[#allocation7 + $0x10c8] sm:$0xff]
    %v611 = vld [vmem:[#allocation7 + $0x10d0] sm:$0xff]
    %v612 = vld [vmem:[#allocation7 + $0x10d8] sm:$0xff]
    %v613 = vld [vmem:[#allocation7 + $0x10e0] sm:$0xff]
    %v614 = vld [vmem:[#allocation7 + $0x10e8] sm:$0xff]
    %v615 = vld [vmem:[#allocation7 + $0x10f0] sm:$0xff]
    %v616 = vld [vmem:[#allocation7 + $0x10f8] sm:$0xff]
    %v617 = vld [vmem:[#allocation7 + $0x1100] sm:$0xff]
    %v618 = vld [vmem:[#allocation7 + $0x1108] sm:$0xff]
    %v619 = vld [vmem:[#allocation7 + $0x1110] sm:$0xff]
    %v620 = vld [vmem:[#allocation7 + $0x1118] sm:$0xff]
    %v621 = vld [vmem:[#allocation7 + $0x1120] sm:$0xff]
    %v622 = vld [vmem:[#allocation7 + $0x1128] sm:$0xff]
    %v623 = vld [vmem:[#allocation7 + $0x1130] sm:$0xff]
    %v624 = vld [vmem:[#allocation7 + $0x1138] sm:$0xff]
    %v625 = vld [vmem:[#allocation7 + $0x1140] sm:$0xff]
    %v626 = vld [vmem:[#allocation7 + $0x1148] sm:$0xff]
    %v627 = vld [vmem:[#allocation7 + $0x1150] sm:$0xff]
    %v628 = vld [vmem:[#allocation7 + $0x1158] sm:$0xff]
    %v629 = vld [vmem:[#allocation7 + $0x1160] sm:$0xff]
    %v630 = vld [vmem:[#allocation7 + $0x1168] sm:$0xff]
    %v631 = vld [vmem:[#allocation7 + $0x1170] sm:$0xff]
    %v632 = vld [vmem:[#allocation7 + $0x1178] sm:$0xff]
    %v633 = vld [vmem:[#allocation7 + $0x1180] sm:$0xff]
    %v634 = vld [vmem:[#allocation7 + $0x1188] sm:$0xff]
    %v635 = vld [vmem:[#allocation7 + $0x1190] sm:$0xff]
    %v636 = vld [vmem:[#allocation7 + $0x1198] sm:$0xff]
    %v637 = vld [vmem:[#allocation7 + $0x11a0] sm:$0xff]
    %v638 = vld [vmem:[#allocation7 + $0x11a8] sm:$0xff]
    %v639 = vld [vmem:[#allocation7 + $0x11b0] sm:$0xff]
    %v640 = vld [vmem:[#allocation7 + $0x11b8] sm:$0xff]
    %v641 = vld [vmem:[#allocation7 + $0x11c0] sm:$0xff]
    %v642 = vld [vmem:[#allocation7 + $0x11c8] sm:$0xff]
    %v643 = vld [vmem:[#allocation7 + $0x11d0] sm:$0xff]
    %v644 = vld [vmem:[#allocation7 + $0x11d8] sm:$0xff]
    %v645 = vld [vmem:[#allocation7 + $0x11e0] sm:$0xff]
    %v646 = vld [vmem:[#allocation7 + $0x11e8] sm:$0xff]
    %v647 = vld [vmem:[#allocation7 + $0x11f0] sm:$0xff]
    %v648 = vld [vmem:[#allocation7 + $0x11f8] sm:$0xff]
    %v649 = vld [vmem:[#allocation7 + $0x1200] sm:$0xff]
    %v650 = vld [vmem:[#allocation7 + $0x1208] sm:$0xff]
    %v651 = vld [vmem:[#allocation7 + $0x1210] sm:$0xff]
    %v652 = vld [vmem:[#allocation7 + $0x1218] sm:$0xff]
    %v653 = vld [vmem:[#allocation7 + $0x1220] sm:$0xff]
    %v654 = vld [vmem:[#allocation7 + $0x1228] sm:$0xff]
    %v655 = vld [vmem:[#allocation7 + $0x1230] sm:$0xff]
    %v656 = vld [vmem:[#allocation7 + $0x1238] sm:$0xff]
    %v657 = vld [vmem:[#allocation7 + $0x1240] sm:$0xff]
    %v658 = vld [vmem:[#allocation7 + $0x1248] sm:$0xff]
    %v659 = vld [vmem:[#allocation7 + $0x1250] sm:$0xff]
    %v660 = vld [vmem:[#allocation7 + $0x1258] sm:$0xff]
    %v661 = vld [vmem:[#allocation7 + $0x1260] sm:$0xff]
    %v662 = vld [vmem:[#allocation7 + $0x1268] sm:$0xff]
    %v663 = vld [vmem:[#allocation7 + $0x1270] sm:$0xff]
    %v664 = vld [vmem:[#allocation7 + $0x1278] sm:$0xff]
    %v665 = vld [vmem:[#allocation7 + $0x1280] sm:$0xff]
    %v666 = vld [vmem:[#allocation7 + $0x1288] sm:$0xff]
    %v667 = vld [vmem:[#allocation7 + $0x1290] sm:$0xff]
    %v668 = vld [vmem:[#allocation7 + $0x1298] sm:$0xff]
    %v669 = vld [vmem:[#allocation7 + $0x12a0] sm:$0xff]
    %v670 = vld [vmem:[#allocation7 + $0x12a8] sm:$0xff]
    %v671 = vld [vmem:[#allocation7 + $0x12b0] sm:$0xff]
    %v672 = vld [vmem:[#allocation7 + $0x12b8] sm:$0xff]
    %v673 = vld [vmem:[#allocation7 + $0x12c0] sm:$0xff]
    %v674 = vld [vmem:[#allocation7 + $0x12c8] sm:$0xff]
    %v675 = vld [vmem:[#allocation7 + $0x12d0] sm:$0xff]
    %v676 = vld [vmem:[#allocation7 + $0x12d8] sm:$0xff]
    %v677 = vld [vmem:[#allocation7 + $0x12e0] sm:$0xff]
    %v678 = vld [vmem:[#allocation7 + $0x12e8] sm:$0xff]
    %v679 = vld [vmem:[#allocation7 + $0x12f0] sm:$0xff]
    %v680 = vld [vmem:[#allocation7 + $0x12f8] sm:$0xff]
    %v681 = vld [vmem:[#allocation7 + $0x1300] sm:$0xff]
    %v682 = vld [vmem:[#allocation7 + $0x1308] sm:$0xff]
    %v683 = vld [vmem:[#allocation7 + $0x1310] sm:$0xff]
    %v684 = vld [vmem:[#allocation7 + $0x1318] sm:$0xff]
    %v685 = vld [vmem:[#allocation7 + $0x1320] sm:$0xff]
    %v686 = vld [vmem:[#allocation7 + $0x1328] sm:$0xff]
    %v687 = vld [vmem:[#allocation7 + $0x1330] sm:$0xff]
    %v688 = vld [vmem:[#allocation7 + $0x1338] sm:$0xff]
    %v689 = vld [vmem:[#allocation7 + $0x1340] sm:$0xff]
    %v690 = vld [vmem:[#allocation7 + $0x1348] sm:$0xff]
    %v691 = vld [vmem:[#allocation7 + $0x1350] sm:$0xff]
    %v692 = vld [vmem:[#allocation7 + $0x1358] sm:$0xff]
    %v693 = vld [vmem:[#allocation7 + $0x1360] sm:$0xff]
    %v694 = vld [vmem:[#allocation7 + $0x1368] sm:$0xff]
    %v695 = vld [vmem:[#allocation7 + $0x1370] sm:$0xff]
    %v696 = vld [vmem:[#allocation7 + $0x1378] sm:$0xff]
    %v697 = vld [vmem:[#allocation7 + $0x1380] sm:$0xff]
    %v698 = vld [vmem:[#allocation7 + $0x1388] sm:$0xff]
    %v699 = vld [vmem:[#allocation7 + $0x1390] sm:$0xff]
    %v700 = vld [vmem:[#allocation7 + $0x1398] sm:$0xff]
    %v701 = vld [vmem:[#allocation7 + $0x13a0] sm:$0xff]
    %v702 = vld [vmem:[#allocation7 + $0x13a8] sm:$0xff]
    %v703 = vld [vmem:[#allocation7 + $0x13b0] sm:$0xff]
    %v704 = vld [vmem:[#allocation7 + $0x13b8] sm:$0xff]
    %v705 = vld [vmem:[#allocation7 + $0x13c0] sm:$0xff]
    %v706 = vld [vmem:[#allocation7 + $0x13c8] sm:$0xff]
    %v707 = vld [vmem:[#allocation7 + $0x13d0] sm:$0xff]
    %v708 = vld [vmem:[#allocation7 + $0x13d8] sm:$0xff]
    %v709 = vld [vmem:[#allocation7 + $0x13e0] sm:$0xff]
    %v710 = vld [vmem:[#allocation7 + $0x13e8] sm:$0xff]
    %v711 = vld [vmem:[#allocation7 + $0x13f0] sm:$0xff]
    %v712 = vld [vmem:[#allocation7 + $0x13f8] sm:$0xff]
    %v713 = vld [vmem:[#allocation7 + $0x1400] sm:$0xff]
    %v714 = vld [vmem:[#allocation7 + $0x1408] sm:$0xff]
    %v715 = vld [vmem:[#allocation7 + $0x1410] sm:$0xff]
    %v716 = vld [vmem:[#allocation7 + $0x1418] sm:$0xff]
    %v717 = vld [vmem:[#allocation7 + $0x1420] sm:$0xff]
    %v718 = vld [vmem:[#allocation7 + $0x1428] sm:$0xff]
    %v719 = vld [vmem:[#allocation7 + $0x1430] sm:$0xff]
    %v720 = vld [vmem:[#allocation7 + $0x1438] sm:$0xff]
    %v721 = vld [vmem:[#allocation7 + $0x1440] sm:$0xff]
    %v722 = vld [vmem:[#allocation7 + $0x1448] sm:$0xff]
    %v723 = vld [vmem:[#allocation7 + $0x1450] sm:$0xff]
    %v724 = vld [vmem:[#allocation7 + $0x1458] sm:$0xff]
    %v725 = vld [vmem:[#allocation7 + $0x1460] sm:$0xff]
    %v726 = vld [vmem:[#allocation7 + $0x1468] sm:$0xff]
    %v727 = vld [vmem:[#allocation7 + $0x1470] sm:$0xff]
    %v728 = vld [vmem:[#allocation7 + $0x1478] sm:$0xff]
    %v729 = vld [vmem:[#allocation7 + $0x1480] sm:$0xff]
    %v730 = vld [vmem:[#allocation7 + $0x1488] sm:$0xff]
    %v731 = vld [vmem:[#allocation7 + $0x1490] sm:$0xff]
    %v732 = vld [vmem:[#allocation7 + $0x1498] sm:$0xff]
    %v733 = vld [vmem:[#allocation7 + $0x14a0] sm:$0xff]
    %v734 = vld [vmem:[#allocation7 + $0x14a8] sm:$0xff]
    %v735 = vld [vmem:[#allocation7 + $0x14b0] sm:$0xff]
    %v736 = vld [vmem:[#allocation7 + $0x14b8] sm:$0xff]
    %v737 = vld [vmem:[#allocation7 + $0x14c0] sm:$0xff]
    %v738 = vld [vmem:[#allocation7 + $0x14c8] sm:$0xff]
    %v739 = vld [vmem:[#allocation7 + $0x14d0] sm:$0xff]
    %v740 = vld [vmem:[#allocation7 + $0x14d8] sm:$0xff]
    %v741 = vld [vmem:[#allocation7 + $0x14e0] sm:$0xff]
    %v742 = vld [vmem:[#allocation7 + $0x14e8] sm:$0xff]
    %v743 = vld [vmem:[#allocation7 + $0x14f0] sm:$0xff]
    %v744 = vld [vmem:[#allocation7 + $0x14f8] sm:$0xff]
    %v745 = vld [vmem:[#allocation7 + $0x1500] sm:$0xff]
    %v746 = vld [vmem:[#allocation7 + $0x1508] sm:$0xff]
    %v747 = vld [vmem:[#allocation7 + $0x1510] sm:$0xff]
    %v748 = vld [vmem:[#allocation7 + $0x1518] sm:$0xff]
    %v749 = vld [vmem:[#allocation7 + $0x1520] sm:$0xff]
    %v750 = vld [vmem:[#allocation7 + $0x1528] sm:$0xff]
    %v751 = vld [vmem:[#allocation7 + $0x1530] sm:$0xff]
    %v752 = vld [vmem:[#allocation7 + $0x1538] sm:$0xff]
    %v753 = vld [vmem:[#allocation7 + $0x1540] sm:$0xff]
    %v754 = vld [vmem:[#allocation7 + $0x1548] sm:$0xff]
    %v755 = vld [vmem:[#allocation7 + $0x1550] sm:$0xff]
    %v756 = vld [vmem:[#allocation7 + $0x1558] sm:$0xff]
    %v757 = vld [vmem:[#allocation7 + $0x1560] sm:$0xff]
    %v758 = vld [vmem:[#allocation7 + $0x1568] sm:$0xff]
    %v759 = vld [vmem:[#allocation7 + $0x1570] sm:$0xff]
    %v760 = vld [vmem:[#allocation7 + $0x1578] sm:$0xff]
    %v761 = vld [vmem:[#allocation7 + $0x1580] sm:$0xff]
    %v762 = vld [vmem:[#allocation7 + $0x1588] sm:$0xff]
    %v763 = vld [vmem:[#allocation7 + $0x1590] sm:$0xff]
    %v764 = vld [vmem:[#allocation7 + $0x1598] sm:$0xff]
    %v765 = vld [vmem:[#allocation7 + $0x15a0] sm:$0xff]
    %v766 = vld [vmem:[#allocation7 + $0x15a8] sm:$0xff]
    %v767 = vld [vmem:[#allocation7 + $0x15b0] sm:$0xff]
    %v768 = vld [vmem:[#allocation7 + $0x15b8] sm:$0xff]
    %v769 = vld [vmem:[#allocation7 + $0x15c0] sm:$0xff]
    %v770 = vld [vmem:[#allocation7 + $0x15c8] sm:$0xff]
    %v771 = vld [vmem:[#allocation7 + $0x15d0] sm:$0xff]
    %v772 = vld [vmem:[#allocation7 + $0x15d8] sm:$0xff]
    %v773 = vld [vmem:[#allocation8] sm:$0xff]
    %v774 = vld [vmem:[#allocation8 + $0x8] sm:$0xff]
    %v775 = vld [vmem:[#allocation8 + $0x10] sm:$0xff]
    %v776 = vld [vmem:[#allocation8 + $0x18] sm:$0xff]
    %v777 = vld [vmem:[#allocation8 + $0x20] sm:$0xff]
    %v778 = vld [vmem:[#allocation8 + $0x28] sm:$0xff]
    %v779 = vld [vmem:[#allocation8 + $0x30] sm:$0xff]
    %v780 = vld [vmem:[#allocation8 + $0x38] sm:$0xff]
    %v781 = vld [vmem:[#allocation8 + $0x40] sm:$0xff]
    %v782 = vld [vmem:[#allocation8 + $0x48] sm:$0xff]
    %v783 = vld [vmem:[#allocation8 + $0x50] sm:$0xff]
    %v784 = vld [vmem:[#allocation8 + $0x58] sm:$0xff]
    %v785 = vld [vmem:[#allocation8 + $0x60] sm:$0xff]
    %v786 = vld [vmem:[#allocation8 + $0x68] sm:$0xff]
    %v787 = vld [vmem:[#allocation8 + $0x70] sm:$0xff]
    %v788 = vld [vmem:[#allocation8 + $0x78] sm:$0xff]
    %v789 = vld [vmem:[#allocation8 + $0x80] sm:$0xff]
    %v790 = vld [vmem:[#allocation8 + $0x88] sm:$0xff]
    %v791 = vld [vmem:[#allocation8 + $0x90] sm:$0xff]
    %v792 = vld [vmem:[#allocation8 + $0x98] sm:$0xff]
    %v793 = vld [vmem:[#allocation8 + $0xa0] sm:$0xff]
    %v794 = vld [vmem:[#allocation8 + $0xa8] sm:$0xff]
    %v795 = vld [vmem:[#allocation8 + $0xb0] sm:$0xff]
    %v796 = vld [vmem:[#allocation8 + $0xb8] sm:$0xff]
    %v797 = vld [vmem:[#allocation8 + $0xc0] sm:$0xff]
    %v798 = vld [vmem:[#allocation8 + $0xc8] sm:$0xff]
    %v799 = vld [vmem:[#allocation8 + $0xd0] sm:$0xff]
    %v800 = vld [vmem:[#allocation8 + $0xd8] sm:$0xff]
    %v801 = vld [vmem:[#allocation8 + $0xe0] sm:$0xff]
    %v802 = vld [vmem:[#allocation8 + $0xe8] sm:$0xff]
    %v803 = vld [vmem:[#allocation8 + $0xf0] sm:$0xff]
    %v804 = vld [vmem:[#allocation8 + $0xf8] sm:$0xff]
    %v805 = vld [vmem:[#allocation8 + $0x100] sm:$0xff]
    %v806 = vld [vmem:[#allocation8 + $0x108] sm:$0xff]
    %v807 = vld [vmem:[#allocation8 + $0x110] sm:$0xff]
    %v808 = vld [vmem:[#allocation8 + $0x118] sm:$0xff]
    %v809 = vld [vmem:[#allocation8 + $0x120] sm:$0xff]
    %v810 = vld [vmem:[#allocation8 + $0x128] sm:$0xff]
    %v811 = vld [vmem:[#allocation8 + $0x130] sm:$0xff]
    %v812 = vld [vmem:[#allocation8 + $0x138] sm:$0xff]
    %v813 = vld [vmem:[#allocation8 + $0x140] sm:$0xff]
    %v814 = vld [vmem:[#allocation8 + $0x148] sm:$0xff]
    %v815 = vld [vmem:[#allocation8 + $0x150] sm:$0xff]
    %v816 = vld [vmem:[#allocation8 + $0x158] sm:$0xff]
    %v817 = vld [vmem:[#allocation8 + $0x160] sm:$0xff]
    %v818 = vld [vmem:[#allocation8 + $0x168] sm:$0xff]
    %v819 = vld [vmem:[#allocation8 + $0x170] sm:$0xff]
    %v820 = vld [vmem:[#allocation8 + $0x178] sm:$0xff]
    %v821 = vld [vmem:[#allocation8 + $0x180] sm:$0xff]
    %v822 = vld [vmem:[#allocation8 + $0x188] sm:$0xff]
    %v823 = vld [vmem:[#allocation8 + $0x190] sm:$0xff]
    %v824 = vld [vmem:[#allocation8 + $0x198] sm:$0xff]
    %v825 = vld [vmem:[#allocation8 + $0x1a0] sm:$0xff]
    %v826 = vld [vmem:[#allocation8 + $0x1a8] sm:$0xff]
    %v827 = vld [vmem:[#allocation8 + $0x1b0] sm:$0xff]
    %v828 = vld [vmem:[#allocation8 + $0x1b8] sm:$0xff]
    %v829 = vld [vmem:[#allocation8 + $0x1c0] sm:$0xff]
    %v830 = vld [vmem:[#allocation8 + $0x1c8] sm:$0xff]
    %v831 = vld [vmem:[#allocation8 + $0x1d0] sm:$0xff]
    %v832 = vld [vmem:[#allocation8 + $0x1d8] sm:$0xff]
    %v833 = vld [vmem:[#allocation8 + $0x1e0] sm:$0xff]
    %v834 = vld [vmem:[#allocation8 + $0x1e8] sm:$0xff]
    %v835 = vld [vmem:[#allocation8 + $0x1f0] sm:$0xff]
    %v836 = vld [vmem:[#allocation8 + $0x1f8] sm:$0xff]
    %v837 = vld [vmem:[#allocation8 + $0x200] sm:$0xff]
    %v838 = vld [vmem:[#allocation8 + $0x208] sm:$0xff]
    %v839 = vld [vmem:[#allocation8 + $0x210] sm:$0xff]
    %v840 = vld [vmem:[#allocation8 + $0x218] sm:$0xff]
    %v841 = vld [vmem:[#allocation8 + $0x220] sm:$0xff]
    %v842 = vld [vmem:[#allocation8 + $0x228] sm:$0xff]
    %v843 = vld [vmem:[#allocation8 + $0x230] sm:$0xff]
    %v844 = vld [vmem:[#allocation8 + $0x238] sm:$0xff]
    %v845 = vld [vmem:[#allocation8 + $0x240] sm:$0xff]
    %v846 = vld [vmem:[#allocation8 + $0x248] sm:$0xff]
    %v847 = vld [vmem:[#allocation8 + $0x250] sm:$0xff]
    %v848 = vld [vmem:[#allocation8 + $0x258] sm:$0xff]
    %v849 = vld [vmem:[#allocation8 + $0x260] sm:$0xff]
    %v850 = vld [vmem:[#allocation8 + $0x268] sm:$0xff]
    %v851 = vld [vmem:[#allocation8 + $0x270] sm:$0xff]
    %v852 = vld [vmem:[#allocation8 + $0x278] sm:$0xff]
    %v853 = vld [vmem:[#allocation8 + $0x280] sm:$0xff]
    %v854 = vld [vmem:[#allocation8 + $0x288] sm:$0xff]
    %v855 = vld [vmem:[#allocation8 + $0x290] sm:$0xff]
    %v856 = vld [vmem:[#allocation8 + $0x298] sm:$0xff]
    %v857 = vld [vmem:[#allocation8 + $0x2a0] sm:$0xff]
    %v858 = vld [vmem:[#allocation8 + $0x2a8] sm:$0xff]
    %v859 = vld [vmem:[#allocation8 + $0x2b0] sm:$0xff]
    %v860 = vld [vmem:[#allocation8 + $0x2b8] sm:$0xff]
    %v861 = vld [vmem:[#allocation8 + $0x2c0] sm:$0xff]
    %v862 = vld [vmem:[#allocation8 + $0x2c8] sm:$0xff]
    %v863 = vld [vmem:[#allocation8 + $0x2d0] sm:$0xff]
    %v864 = vld [vmem:[#allocation8 + $0x2d8] sm:$0xff]
    %v865 = vld [vmem:[#allocation8 + $0x2e0] sm:$0xff]
    %v866 = vld [vmem:[#allocation8 + $0x2e8] sm:$0xff]
    %v867 = vld [vmem:[#allocation8 + $0x2f0] sm:$0xff]
    %v868 = vld [vmem:[#allocation8 + $0x2f8] sm:$0xff]
    %v869 = vld [vmem:[#allocation8 + $0x300] sm:$0xff]
    %v870 = vld [vmem:[#allocation8 + $0x308] sm:$0xff]
    %v871 = vld [vmem:[#allocation8 + $0x310] sm:$0xff]
    %v872 = vld [vmem:[#allocation8 + $0x318] sm:$0xff]
    %v873 = vld [vmem:[#allocation8 + $0x320] sm:$0xff]
    %v874 = vld [vmem:[#allocation8 + $0x328] sm:$0xff]
    %v875 = vld [vmem:[#allocation8 + $0x330] sm:$0xff]
    %v876 = vld [vmem:[#allocation8 + $0x338] sm:$0xff]
    %v877 = vld [vmem:[#allocation8 + $0x340] sm:$0xff]
    %v878 = vld [vmem:[#allocation8 + $0x348] sm:$0xff]
    %v879 = vld [vmem:[#allocation8 + $0x350] sm:$0xff]
    %v880 = vld [vmem:[#allocation8 + $0x358] sm:$0xff]
    %v881 = vld [vmem:[#allocation8 + $0x360] sm:$0xff]
    %v882 = vld [vmem:[#allocation8 + $0x368] sm:$0xff]
    %v883 = vld [vmem:[#allocation8 + $0x370] sm:$0xff]
    %v884 = vld [vmem:[#allocation8 + $0x378] sm:$0xff]
    %v885 = vld [vmem:[#allocation8 + $0x380] sm:$0xff]
    %v886 = vld [vmem:[#allocation8 + $0x388] sm:$0xff]
    %v887 = vld [vmem:[#allocation8 + $0x390] sm:$0xff]
    %v888 = vld [vmem:[#allocation8 + $0x398] sm:$0xff]
    %v889 = vld [vmem:[#allocation8 + $0x3a0] sm:$0xff]
    %v890 = vld [vmem:[#allocation8 + $0x3a8] sm:$0xff]
    %v891 = vld [vmem:[#allocation8 + $0x3b0] sm:$0xff]
    %v892 = vld [vmem:[#allocation8 + $0x3b8] sm:$0xff]
    %v893 = vld [vmem:[#allocation8 + $0x3c0] sm:$0xff]
    %v894 = vld [vmem:[#allocation8 + $0x3c8] sm:$0xff]
    %v895 = vld [vmem:[#allocation8 + $0x3d0] sm:$0xff]
    %v896 = vld [vmem:[#allocation8 + $0x3d8] sm:$0xff]
    %v897 = vld [vmem:[#allocation8 + $0x3e0] sm:$0xff]
    %v898 = vld [vmem:[#allocation8 + $0x3e8] sm:$0xff]
    %v899 = vld [vmem:[#allocation8 + $0x3f0] sm:$0xff]
    %v900 = vld [vmem:[#allocation8 + $0x3f8] sm:$0xff]
    %v901 = vld [vmem:[#allocation8 + $0x400] sm:$0xff]
    %v902 = vld [vmem:[#allocation8 + $0x408] sm:$0xff]
    %v903 = vld [vmem:[#allocation8 + $0x410] sm:$0xff]
    %v904 = vld [vmem:[#allocation8 + $0x418] sm:$0xff]
    %v905 = vld [vmem:[#allocation8 + $0x420] sm:$0xff]
    %v906 = vld [vmem:[#allocation8 + $0x428] sm:$0xff]
    %v907 = vld [vmem:[#allocation8 + $0x430] sm:$0xff]
    %v908 = vld [vmem:[#allocation8 + $0x438] sm:$0xff]
    %v909 = vld [vmem:[#allocation8 + $0x440] sm:$0xff]
    %v910 = vld [vmem:[#allocation8 + $0x448] sm:$0xff]
    %v911 = vld [vmem:[#allocation8 + $0x450] sm:$0xff]
    %v912 = vld [vmem:[#allocation8 + $0x458] sm:$0xff]
    %v913 = vld [vmem:[#allocation8 + $0x460] sm:$0xff]
    %v914 = vld [vmem:[#allocation8 + $0x468] sm:$0xff]
    %v915 = vld [vmem:[#allocation8 + $0x470] sm:$0xff]
    %v916 = vld [vmem:[#allocation8 + $0x478] sm:$0xff]
    %v917 = vld [vmem:[#allocation8 + $0x480] sm:$0xff]
    %v918 = vld [vmem:[#allocation8 + $0x488] sm:$0xff]
    %v919 = vld [vmem:[#allocation8 + $0x490] sm:$0xff]
    %v920 = vld [vmem:[#allocation8 + $0x498] sm:$0xff]
    %v921 = vld [vmem:[#allocation8 + $0x4a0] sm:$0xff]
    %v922 = vld [vmem:[#allocation8 + $0x4a8] sm:$0xff]
    %v923 = vld [vmem:[#allocation8 + $0x4b0] sm:$0xff]
    %v924 = vld [vmem:[#allocation8 + $0x4b8] sm:$0xff]
    %v925 = vld [vmem:[#allocation8 + $0x4c0] sm:$0xff]
    %v926 = vld [vmem:[#allocation8 + $0x4c8] sm:$0xff]
    %v927 = vld [vmem:[#allocation8 + $0x4d0] sm:$0xff]
    %v928 = vld [vmem:[#allocation8 + $0x4d8] sm:$0xff]
    %v929 = vld [vmem:[#allocation8 + $0x4e0] sm:$0xff]
    %v930 = vld [vmem:[#allocation8 + $0x4e8] sm:$0xff]
    %v931 = vld [vmem:[#allocation8 + $0x4f0] sm:$0xff]
    %v932 = vld [vmem:[#allocation8 + $0x4f8] sm:$0xff]
    %v933 = vld [vmem:[#allocation8 + $0x500] sm:$0xff]
    %v934 = vld [vmem:[#allocation8 + $0x508] sm:$0xff]
    %v935 = vld [vmem:[#allocation8 + $0x510] sm:$0xff]
    %v936 = vld [vmem:[#allocation8 + $0x518] sm:$0xff]
    %v937 = vld [vmem:[#allocation8 + $0x520] sm:$0xff]
    %v938 = vld [vmem:[#allocation8 + $0x528] sm:$0xff]
    %v939 = vld [vmem:[#allocation8 + $0x530] sm:$0xff]
    %v940 = vld [vmem:[#allocation8 + $0x538] sm:$0xff]
    %v941 = vld [vmem:[#allocation8 + $0x540] sm:$0xff]
    %v942 = vld [vmem:[#allocation8 + $0x548] sm:$0xff]
    %v943 = vld [vmem:[#allocation8 + $0x550] sm:$0xff]
    %v944 = vld [vmem:[#allocation8 + $0x558] sm:$0xff]
    %v945 = vld [vmem:[#allocation8 + $0x560] sm:$0xff]
    %v946 = vld [vmem:[#allocation8 + $0x568] sm:$0xff]
    %v947 = vld [vmem:[#allocation8 + $0x570] sm:$0xff]
    %v948 = vld [vmem:[#allocation8 + $0x578] sm:$0xff]
    %v949 = vld [vmem:[#allocation8 + $0x580] sm:$0xff]
    %v950 = vld [vmem:[#allocation8 + $0x588] sm:$0xff]
    %v951 = vld [vmem:[#allocation8 + $0x590] sm:$0xff]
    %v952 = vld [vmem:[#allocation8 + $0x598] sm:$0xff]
    %v953 = vld [vmem:[#allocation8 + $0x5a0] sm:$0xff]
    %v954 = vld [vmem:[#allocation8 + $0x5a8] sm:$0xff]
    %v955 = vld [vmem:[#allocation8 + $0x5b0] sm:$0xff]
    %v956 = vld [vmem:[#allocation8 + $0x5b8] sm:$0xff]
    %v957 = vld [vmem:[#allocation8 + $0x5c0] sm:$0xff]
    %v958 = vld [vmem:[#allocation8 + $0x5c8] sm:$0xff]
    %v959 = vld [vmem:[#allocation8 + $0x5d0] sm:$0xff]
    %v960 = vld [vmem:[#allocation8 + $0x5d8] sm:$0xff]
    %v961 = vld [vmem:[#allocation8 + $0x5e0] sm:$0xff]
    %v962 = vld [vmem:[#allocation8 + $0x5e8] sm:$0xff]
    %v963 = vld [vmem:[#allocation8 + $0x5f0] sm:$0xff]
    %v964 = vld [vmem:[#allocation8 + $0x5f8] sm:$0xff]
    %v965 = vld [vmem:[#allocation8 + $0x600] sm:$0xff]
    %v966 = vld [vmem:[#allocation8 + $0x608] sm:$0xff]
    %v967 = vld [vmem:[#allocation8 + $0x610] sm:$0xff]
    %v968 = vld [vmem:[#allocation8 + $0x618] sm:$0xff]
    %v969 = vld [vmem:[#allocation8 + $0x620] sm:$0xff]
    %v970 = vld [vmem:[#allocation8 + $0x628] sm:$0xff]
    %v971 = vld [vmem:[#allocation8 + $0x630] sm:$0xff]
    %v972 = vld [vmem:[#allocation8 + $0x638] sm:$0xff]
    %v973 = vld [vmem:[#allocation8 + $0x640] sm:$0xff]
    %v974 = vld [vmem:[#allocation8 + $0x648] sm:$0xff]
    %v975 = vld [vmem:[#allocation8 + $0x650] sm:$0xff]
    %v976 = vld [vmem:[#allocation8 + $0x658] sm:$0xff]
    %v977 = vld [vmem:[#allocation8 + $0x660] sm:$0xff]
    %v978 = vld [vmem:[#allocation8 + $0x668] sm:$0xff]
    %v979 = vld [vmem:[#allocation8 + $0x670] sm:$0xff]
    %v980 = vld [vmem:[#allocation8 + $0x678] sm:$0xff]
    %v981 = vld [vmem:[#allocation8 + $0x680] sm:$0xff]
    %v982 = vld [vmem:[#allocation8 + $0x688] sm:$0xff]
    %v983 = vld [vmem:[#allocation8 + $0x690] sm:$0xff]
    %v984 = vld [vmem:[#allocation8 + $0x698] sm:$0xff]
    %v985 = vld [vmem:[#allocation8 + $0x6a0] sm:$0xff]
    %v986 = vld [vmem:[#allocation8 + $0x6a8] sm:$0xff]
    %v987 = vld [vmem:[#allocation8 + $0x6b0] sm:$0xff]
    %v988 = vld [vmem:[#allocation8 + $0x6b8] sm:$0xff]
    %v989 = vld [vmem:[#allocation8 + $0x6c0] sm:$0xff]
    %v990 = vld [vmem:[#allocation8 + $0x6c8] sm:$0xff]
    %v991 = vld [vmem:[#allocation8 + $0x6d0] sm:$0xff]
    %v992 = vld [vmem:[#allocation8 + $0x6d8] sm:$0xff]
    %v993 = vld [vmem:[#allocation8 + $0x6e0] sm:$0xff]
    %v994 = vld [vmem:[#allocation8 + $0x6e8] sm:$0xff]
    %v995 = vld [vmem:[#allocation8 + $0x6f0] sm:$0xff]
    %v996 = vld [vmem:[#allocation8 + $0x6f8] sm:$0xff]
    %v997 = vld [vmem:[#allocation8 + $0x700] sm:$0xff]
    %v998 = vld [vmem:[#allocation8 + $0x708] sm:$0xff]
    %v999 = vld [vmem:[#allocation8 + $0x710] sm:$0xff]
    %v1000 = vld [vmem:[#allocation8 + $0x718] sm:$0xff]
    %v1001 = vld [vmem:[#allocation8 + $0x720] sm:$0xff]
    %v1002 = vld [vmem:[#allocation8 + $0x728] sm:$0xff]
    %v1003 = vld [vmem:[#allocation8 + $0x730] sm:$0xff]
    %v1004 = vld [vmem:[#allocation8 + $0x738] sm:$0xff]
    %v1005 = vld [vmem:[#allocation8 + $0x740] sm:$0xff]
    %v1006 = vld [vmem:[#allocation8 + $0x748] sm:$0xff]
    %v1007 = vld [vmem:[#allocation8 + $0x750] sm:$0xff]
    %v1008 = vld [vmem:[#allocation8 + $0x758] sm:$0xff]
    %v1009 = vld [vmem:[#allocation8 + $0x760] sm:$0xff]
    %v1010 = vld [vmem:[#allocation8 + $0x768] sm:$0xff]
    %v1011 = vld [vmem:[#allocation8 + $0x770] sm:$0xff]
    %v1012 = vld [vmem:[#allocation8 + $0x778] sm:$0xff]
    %v1013 = vld [vmem:[#allocation8 + $0x780] sm:$0xff]
    %v1014 = vld [vmem:[#allocation8 + $0x788] sm:$0xff]
    %v1015 = vld [vmem:[#allocation8 + $0x790] sm:$0xff]
    %v1016 = vld [vmem:[#allocation8 + $0x798] sm:$0xff]
    %v1017 = vld [vmem:[#allocation8 + $0x7a0] sm:$0xff]
    %v1018 = vld [vmem:[#allocation8 + $0x7a8] sm:$0xff]
    %v1019 = vld [vmem:[#allocation8 + $0x7b0] sm:$0xff]
    %v1020 = vld [vmem:[#allocation8 + $0x7b8] sm:$0xff]
    %v1021 = vld [vmem:[#allocation8 + $0x7c0] sm:$0xff]
    %v1022 = vld [vmem:[#allocation8 + $0x7c8] sm:$0xff]
    %v1023 = vld [vmem:[#allocation8 + $0x7d0] sm:$0xff]
    %v1024 = vld [vmem:[#allocation8 + $0x7d8] sm:$0xff]
    %v1025 = vld [vmem:[#allocation8 + $0x7e0] sm:$0xff]
    %v1026 = vld [vmem:[#allocation8 + $0x7e8] sm:$0xff]
    %v1027 = vld [vmem:[#allocation8 + $0x7f0] sm:$0xff]
    %v1028 = vld [vmem:[#allocation8 + $0x7f8] sm:$0xff]
    %v1029 = vld [vmem:[#allocation8 + $0x800] sm:$0xff]
    %v1030 = vld [vmem:[#allocation8 + $0x808] sm:$0xff]
    %v1031 = vld [vmem:[#allocation8 + $0x810] sm:$0xff]
    %v1032 = vld [vmem:[#allocation8 + $0x818] sm:$0xff]
    %v1033 = vld [vmem:[#allocation8 + $0x820] sm:$0xff]
    %v1034 = vld [vmem:[#allocation8 + $0x828] sm:$0xff]
    %v1035 = vld [vmem:[#allocation8 + $0x830] sm:$0xff]
    %v1036 = vld [vmem:[#allocation8 + $0x838] sm:$0xff]
    %v1037 = vld [vmem:[#allocation8 + $0x840] sm:$0xff]
    %v1038 = vld [vmem:[#allocation8 + $0x848] sm:$0xff]
    %v1039 = vld [vmem:[#allocation8 + $0x850] sm:$0xff]
    %v1040 = vld [vmem:[#allocation8 + $0x858] sm:$0xff]
    %v1041 = vld [vmem:[#allocation8 + $0x860] sm:$0xff]
    %v1042 = vld [vmem:[#allocation8 + $0x868] sm:$0xff]
    %v1043 = vld [vmem:[#allocation8 + $0x870] sm:$0xff]
    %v1044 = vld [vmem:[#allocation8 + $0x878] sm:$0xff]
    %v1045 = vld [vmem:[#allocation8 + $0x880] sm:$0xff]
    %v1046 = vld [vmem:[#allocation8 + $0x888] sm:$0xff]
    %v1047 = vld [vmem:[#allocation8 + $0x890] sm:$0xff]
    %v1048 = vld [vmem:[#allocation8 + $0x898] sm:$0xff]
    %v1049 = vld [vmem:[#allocation8 + $0x8a0] sm:$0xff]
    %v1050 = vld [vmem:[#allocation8 + $0x8a8] sm:$0xff]
    %v1051 = vld [vmem:[#allocation8 + $0x8b0] sm:$0xff]
    %v1052 = vld [vmem:[#allocation8 + $0x8b8] sm:$0xff]
    %v1053 = vld [vmem:[#allocation8 + $0x8c0] sm:$0xff]
    %v1054 = vld [vmem:[#allocation8 + $0x8c8] sm:$0xff]
    %v1055 = vld [vmem:[#allocation8 + $0x8d0] sm:$0xff]
    %v1056 = vld [vmem:[#allocation8 + $0x8d8] sm:$0xff]
    %v1057 = vld [vmem:[#allocation8 + $0x8e0] sm:$0xff]
    %v1058 = vld [vmem:[#allocation8 + $0x8e8] sm:$0xff]
    %v1059 = vld [vmem:[#allocation8 + $0x8f0] sm:$0xff]
    %v1060 = vld [vmem:[#allocation8 + $0x8f8] sm:$0xff]
    %v1061 = vld [vmem:[#allocation8 + $0x900] sm:$0xff]
    %v1062 = vld [vmem:[#allocation8 + $0x908] sm:$0xff]
    %v1063 = vld [vmem:[#allocation8 + $0x910] sm:$0xff]
    %v1064 = vld [vmem:[#allocation8 + $0x918] sm:$0xff]
    %v1065 = vld [vmem:[#allocation8 + $0x920] sm:$0xff]
    %v1066 = vld [vmem:[#allocation8 + $0x928] sm:$0xff]
    %v1067 = vld [vmem:[#allocation8 + $0x930] sm:$0xff]
    %v1068 = vld [vmem:[#allocation8 + $0x938] sm:$0xff]
    %v1069 = vld [vmem:[#allocation8 + $0x940] sm:$0xff]
    %v1070 = vld [vmem:[#allocation8 + $0x948] sm:$0xff]
    %v1071 = vld [vmem:[#allocation8 + $0x950] sm:$0xff]
    %v1072 = vld [vmem:[#allocation8 + $0x958] sm:$0xff]
    %v1073 = vld [vmem:[#allocation8 + $0x960] sm:$0xff]
    %v1074 = vld [vmem:[#allocation8 + $0x968] sm:$0xff]
    %v1075 = vld [vmem:[#allocation8 + $0x970] sm:$0xff]
    %v1076 = vld [vmem:[#allocation8 + $0x978] sm:$0xff]
    %v1077 = vld [vmem:[#allocation8 + $0x980] sm:$0xff]
    %v1078 = vld [vmem:[#allocation8 + $0x988] sm:$0xff]
    %v1079 = vld [vmem:[#allocation8 + $0x990] sm:$0xff]
    %v1080 = vld [vmem:[#allocation8 + $0x998] sm:$0xff]
    %v1081 = vld [vmem:[#allocation8 + $0x9a0] sm:$0xff]
    %v1082 = vld [vmem:[#allocation8 + $0x9a8] sm:$0xff]
    %v1083 = vld [vmem:[#allocation8 + $0x9b0] sm:$0xff]
    %v1084 = vld [vmem:[#allocation8 + $0x9b8] sm:$0xff]
    %v1085 = vld [vmem:[#allocation8 + $0x9c0] sm:$0xff]
    %v1086 = vld [vmem:[#allocation8 + $0x9c8] sm:$0xff]
    %v1087 = vld [vmem:[#allocation8 + $0x9d0] sm:$0xff]
    %v1088 = vld [vmem:[#allocation8 + $0x9d8] sm:$0xff]
    %v1089 = vld [vmem:[#allocation8 + $0x9e0] sm:$0xff]
    %v1090 = vld [vmem:[#allocation8 + $0x9e8] sm:$0xff]
    %v1091 = vld [vmem:[#allocation8 + $0x9f0] sm:$0xff]
    %v1092 = vld [vmem:[#allocation8 + $0x9f8] sm:$0xff]
    %v1093 = vld [vmem:[#allocation8 + $0xa00] sm:$0xff]
    %v1094 = vld [vmem:[#allocation8 + $0xa08] sm:$0xff]
    %v1095 = vld [vmem:[#allocation8 + $0xa10] sm:$0xff]
    %v1096 = vld [vmem:[#allocation8 + $0xa18] sm:$0xff]
    %v1097 = vld [vmem:[#allocation8 + $0xa20] sm:$0xff]
    %v1098 = vld [vmem:[#allocation8 + $0xa28] sm:$0xff]
    %v1099 = vld [vmem:[#allocation8 + $0xa30] sm:$0xff]
    %v1100 = vld [vmem:[#allocation8 + $0xa38] sm:$0xff]
    %v1101 = vld [vmem:[#allocation8 + $0xa40] sm:$0xff]
    %v1102 = vld [vmem:[#allocation8 + $0xa48] sm:$0xff]
    %v1103 = vld [vmem:[#allocation8 + $0xa50] sm:$0xff]
    %v1104 = vld [vmem:[#allocation8 + $0xa58] sm:$0xff]
    %v1105 = vld [vmem:[#allocation8 + $0xa60] sm:$0xff]
    %v1106 = vld [vmem:[#allocation8 + $0xa68] sm:$0xff]
    %v1107 = vld [vmem:[#allocation8 + $0xa70] sm:$0xff]
    %v1108 = vld [vmem:[#allocation8 + $0xa78] sm:$0xff]
    %v1109 = vld [vmem:[#allocation8 + $0xa80] sm:$0xff]
    %v1110 = vld [vmem:[#allocation8 + $0xa88] sm:$0xff]
    %v1111 = vld [vmem:[#allocation8 + $0xa90] sm:$0xff]
    %v1112 = vld [vmem:[#allocation8 + $0xa98] sm:$0xff]
    %v1113 = vld [vmem:[#allocation8 + $0xaa0] sm:$0xff]
    %v1114 = vld [vmem:[#allocation8 + $0xaa8] sm:$0xff]
    %v1115 = vld [vmem:[#allocation8 + $0xab0] sm:$0xff]
    %v1116 = vld [vmem:[#allocation8 + $0xab8] sm:$0xff]
    %v1117 = vld [vmem:[#allocation8 + $0xac0] sm:$0xff]
    %v1118 = vld [vmem:[#allocation8 + $0xac8] sm:$0xff]
    %v1119 = vld [vmem:[#allocation8 + $0xad0] sm:$0xff]
    %v1120 = vld [vmem:[#allocation8 + $0xad8] sm:$0xff]
    %v1121 = vld [vmem:[#allocation8 + $0xae0] sm:$0xff]
    %v1122 = vld [vmem:[#allocation8 + $0xae8] sm:$0xff]
    %v1123 = vld [vmem:[#allocation8 + $0xaf0] sm:$0xff]
    %v1124 = vld [vmem:[#allocation8 + $0xaf8] sm:$0xff]
    %v1125 = vld [vmem:[#allocation8 + $0xb00] sm:$0xff]
    %v1126 = vld [vmem:[#allocation8 + $0xb08] sm:$0xff]
    %v1127 = vld [vmem:[#allocation8 + $0xb10] sm:$0xff]
    %v1128 = vld [vmem:[#allocation8 + $0xb18] sm:$0xff]
    %v1129 = vld [vmem:[#allocation8 + $0xb20] sm:$0xff]
    %v1130 = vld [vmem:[#allocation8 + $0xb28] sm:$0xff]
    %v1131 = vld [vmem:[#allocation8 + $0xb30] sm:$0xff]
    %v1132 = vld [vmem:[#allocation8 + $0xb38] sm:$0xff]
    %v1133 = vld [vmem:[#allocation8 + $0xb40] sm:$0xff]
    %v1134 = vld [vmem:[#allocation8 + $0xb48] sm:$0xff]
    %v1135 = vld [vmem:[#allocation8 + $0xb50] sm:$0xff]
    %v1136 = vld [vmem:[#allocation8 + $0xb58] sm:$0xff]
    %v1137 = vld [vmem:[#allocation8 + $0xb60] sm:$0xff]
    %v1138 = vld [vmem:[#allocation8 + $0xb68] sm:$0xff]
    %v1139 = vld [vmem:[#allocation8 + $0xb70] sm:$0xff]
    %v1140 = vld [vmem:[#allocation8 + $0xb78] sm:$0xff]
    %v1141 = vld [vmem:[#allocation8 + $0xb80] sm:$0xff]
    %v1142 = vld [vmem:[#allocation8 + $0xb88] sm:$0xff]
    %v1143 = vld [vmem:[#allocation8 + $0xb90] sm:$0xff]
    %v1144 = vld [vmem:[#allocation8 + $0xb98] sm:$0xff]
    %v1145 = vld [vmem:[#allocation8 + $0xba0] sm:$0xff]
    %v1146 = vld [vmem:[#allocation8 + $0xba8] sm:$0xff]
    %v1147 = vld [vmem:[#allocation8 + $0xbb0] sm:$0xff]
    %v1148 = vld [vmem:[#allocation8 + $0xbb8] sm:$0xff]
    %v1149 = vld [vmem:[#allocation8 + $0xbc0] sm:$0xff]
    %v1150 = vld [vmem:[#allocation8 + $0xbc8] sm:$0xff]
    %v1151 = vld [vmem:[#allocation8 + $0xbd0] sm:$0xff]
    %v1152 = vld [vmem:[#allocation8 + $0xbd8] sm:$0xff]
    %v1153 = vld [vmem:[#allocation8 + $0xbe0] sm:$0xff]
    %v1154 = vld [vmem:[#allocation8 + $0xbe8] sm:$0xff]
    %v1155 = vld [vmem:[#allocation8 + $0xbf0] sm:$0xff]
    %v1156 = vld [vmem:[#allocation8 + $0xbf8] sm:$0xff]
    %v1157 = vld [vmem:[#allocation8 + $0xc00] sm:$0xff]
    %v1158 = vld [vmem:[#allocation8 + $0xc08] sm:$0xff]
    %v1159 = vld [vmem:[#allocation8 + $0xc10] sm:$0xff]
    %v1160 = vld [vmem:[#allocation8 + $0xc18] sm:$0xff]
    %v1161 = vld [vmem:[#allocation8 + $0xc20] sm:$0xff]
    %v1162 = vld [vmem:[#allocation8 + $0xc28] sm:$0xff]
    %v1163 = vld [vmem:[#allocation8 + $0xc30] sm:$0xff]
    %v1164 = vld [vmem:[#allocation8 + $0xc38] sm:$0xff]
    %v1165 = vld [vmem:[#allocation8 + $0xc40] sm:$0xff]
    %v1166 = vld [vmem:[#allocation8 + $0xc48] sm:$0xff]
    %v1167 = vld [vmem:[#allocation8 + $0xc50] sm:$0xff]
    %v1168 = vld [vmem:[#allocation8 + $0xc58] sm:$0xff]
    %v1169 = vld [vmem:[#allocation8 + $0xc60] sm:$0xff]
    %v1170 = vld [vmem:[#allocation8 + $0xc68] sm:$0xff]
    %v1171 = vld [vmem:[#allocation8 + $0xc70] sm:$0xff]
    %v1172 = vld [vmem:[#allocation8 + $0xc78] sm:$0xff]
    %v1173 = vld [vmem:[#allocation8 + $0xc80] sm:$0xff]
    %v1174 = vld [vmem:[#allocation8 + $0xc88] sm:$0xff]
    %v1175 = vld [vmem:[#allocation8 + $0xc90] sm:$0xff]
    %v1176 = vld [vmem:[#allocation8 + $0xc98] sm:$0xff]
    %v1177 = vld [vmem:[#allocation8 + $0xca0] sm:$0xff]
    %v1178 = vld [vmem:[#allocation8 + $0xca8] sm:$0xff]
    %v1179 = vld [vmem:[#allocation8 + $0xcb0] sm:$0xff]
    %v1180 = vld [vmem:[#allocation8 + $0xcb8] sm:$0xff]
    %v1181 = vld [vmem:[#allocation8 + $0xcc0] sm:$0xff]
    %v1182 = vld [vmem:[#allocation8 + $0xcc8] sm:$0xff]
    %v1183 = vld [vmem:[#allocation8 + $0xcd0] sm:$0xff]
    %v1184 = vld [vmem:[#allocation8 + $0xcd8] sm:$0xff]
    %v1185 = vld [vmem:[#allocation8 + $0xce0] sm:$0xff]
    %v1186 = vld [vmem:[#allocation8 + $0xce8] sm:$0xff]
    %v1187 = vld [vmem:[#allocation8 + $0xcf0] sm:$0xff]
    %v1188 = vld [vmem:[#allocation8 + $0xcf8] sm:$0xff]
    %v1189 = vld [vmem:[#allocation8 + $0xd00] sm:$0xff]
    %v1190 = vld [vmem:[#allocation8 + $0xd08] sm:$0xff]
    %v1191 = vld [vmem:[#allocation8 + $0xd10] sm:$0xff]
    %v1192 = vld [vmem:[#allocation8 + $0xd18] sm:$0xff]
    %v1193 = vld [vmem:[#allocation8 + $0xd20] sm:$0xff]
    %v1194 = vld [vmem:[#allocation8 + $0xd28] sm:$0xff]
    %v1195 = vld [vmem:[#allocation8 + $0xd30] sm:$0xff]
    %v1196 = vld [vmem:[#allocation8 + $0xd38] sm:$0xff]
    %v1197 = vld [vmem:[#allocation8 + $0xd40] sm:$0xff]
    %v1198 = vld [vmem:[#allocation8 + $0xd48] sm:$0xff]
    %v1199 = vld [vmem:[#allocation8 + $0xd50] sm:$0xff]
    %v1200 = vld [vmem:[#allocation8 + $0xd58] sm:$0xff]
    %v1201 = vld [vmem:[#allocation8 + $0xd60] sm:$0xff]
    %v1202 = vld [vmem:[#allocation8 + $0xd68] sm:$0xff]
    %v1203 = vld [vmem:[#allocation8 + $0xd70] sm:$0xff]
    %v1204 = vld [vmem:[#allocation8 + $0xd78] sm:$0xff]
    %v1205 = vld [vmem:[#allocation8 + $0xd80] sm:$0xff]
    %v1206 = vld [vmem:[#allocation8 + $0xd88] sm:$0xff]
    %v1207 = vld [vmem:[#allocation8 + $0xd90] sm:$0xff]
    %v1208 = vld [vmem:[#allocation8 + $0xd98] sm:$0xff]
    %v1209 = vld [vmem:[#allocation8 + $0xda0] sm:$0xff]
    %v1210 = vld [vmem:[#allocation8 + $0xda8] sm:$0xff]
    %v1211 = vld [vmem:[#allocation8 + $0xdb0] sm:$0xff]
    %v1212 = vld [vmem:[#allocation8 + $0xdb8] sm:$0xff]
    %v1213 = vld [vmem:[#allocation8 + $0xdc0] sm:$0xff]
    %v1214 = vld [vmem:[#allocation8 + $0xdc8] sm:$0xff]
    %v1215 = vld [vmem:[#allocation8 + $0xdd0] sm:$0xff]
    %v1216 = vld [vmem:[#allocation8 + $0xdd8] sm:$0xff]
    %v1217 = vld [vmem:[#allocation8 + $0xde0] sm:$0xff]
    %v1218 = vld [vmem:[#allocation8 + $0xde8] sm:$0xff]
    %v1219 = vld [vmem:[#allocation8 + $0xdf0] sm:$0xff]
    %v1220 = vld [vmem:[#allocation8 + $0xdf8] sm:$0xff]
    %v1221 = vld [vmem:[#allocation8 + $0xe00] sm:$0xff]
    %v1222 = vld [vmem:[#allocation8 + $0xe08] sm:$0xff]
    %v1223 = vld [vmem:[#allocation8 + $0xe10] sm:$0xff]
    %v1224 = vld [vmem:[#allocation8 + $0xe18] sm:$0xff]
    %v1225 = vld [vmem:[#allocation8 + $0xe20] sm:$0xff]
    %v1226 = vld [vmem:[#allocation8 + $0xe28] sm:$0xff]
    %v1227 = vld [vmem:[#allocation8 + $0xe30] sm:$0xff]
    %v1228 = vld [vmem:[#allocation8 + $0xe38] sm:$0xff]
    %v1229 = vld [vmem:[#allocation8 + $0xe40] sm:$0xff]
    %v1230 = vld [vmem:[#allocation8 + $0xe48] sm:$0xff]
    %v1231 = vld [vmem:[#allocation8 + $0xe50] sm:$0xff]
    %v1232 = vld [vmem:[#allocation8 + $0xe58] sm:$0xff]
    %v1233 = vld [vmem:[#allocation8 + $0xe60] sm:$0xff]
    %v1234 = vld [vmem:[#allocation8 + $0xe68] sm:$0xff]
    %v1235 = vld [vmem:[#allocation8 + $0xe70] sm:$0xff]
    %v1236 = vld [vmem:[#allocation8 + $0xe78] sm:$0xff]
    %v1237 = vld [vmem:[#allocation8 + $0xe80] sm:$0xff]
    %v1238 = vld [vmem:[#allocation8 + $0xe88] sm:$0xff]
    %v1239 = vld [vmem:[#allocation8 + $0xe90] sm:$0xff]
    %v1240 = vld [vmem:[#allocation8 + $0xe98] sm:$0xff]
    %v1241 = vld [vmem:[#allocation8 + $0xea0] sm:$0xff]
    %v1242 = vld [vmem:[#allocation8 + $0xea8] sm:$0xff]
    %v1243 = vld [vmem:[#allocation8 + $0xeb0] sm:$0xff]
    %v1244 = vld [vmem:[#allocation8 + $0xeb8] sm:$0xff]
    %v1245 = vld [vmem:[#allocation8 + $0xec0] sm:$0xff]
    %v1246 = vld [vmem:[#allocation8 + $0xec8] sm:$0xff]
    %v1247 = vld [vmem:[#allocation8 + $0xed0] sm:$0xff]
    %v1248 = vld [vmem:[#allocation8 + $0xed8] sm:$0xff]
    %v1249 = vld [vmem:[#allocation8 + $0xee0] sm:$0xff]
    %v1250 = vld [vmem:[#allocation8 + $0xee8] sm:$0xff]
    %v1251 = vld [vmem:[#allocation8 + $0xef0] sm:$0xff]
    %v1252 = vld [vmem:[#allocation8 + $0xef8] sm:$0xff]
    %v1253 = vld [vmem:[#allocation8 + $0xf00] sm:$0xff]
    %v1254 = vld [vmem:[#allocation8 + $0xf08] sm:$0xff]
    %v1255 = vld [vmem:[#allocation8 + $0xf10] sm:$0xff]
    %v1256 = vld [vmem:[#allocation8 + $0xf18] sm:$0xff]
    %v1257 = vld [vmem:[#allocation8 + $0xf20] sm:$0xff]
    %v1258 = vld [vmem:[#allocation8 + $0xf28] sm:$0xff]
    %v1259 = vld [vmem:[#allocation8 + $0xf30] sm:$0xff]
    %v1260 = vld [vmem:[#allocation8 + $0xf38] sm:$0xff]
    %v1261 = vld [vmem:[#allocation8 + $0xf40] sm:$0xff]
    %v1262 = vld [vmem:[#allocation8 + $0xf48] sm:$0xff]
    %v1263 = vld [vmem:[#allocation8 + $0xf50] sm:$0xff]
    %v1264 = vld [vmem:[#allocation8 + $0xf58] sm:$0xff]
    %v1265 = vld [vmem:[#allocation8 + $0xf60] sm:$0xff]
    %v1266 = vld [vmem:[#allocation8 + $0xf68] sm:$0xff]
    %v1267 = vld [vmem:[#allocation8 + $0xf70] sm:$0xff]
    %v1268 = vld [vmem:[#allocation8 + $0xf78] sm:$0xff]
    %v1269 = vld [vmem:[#allocation8 + $0xf80] sm:$0xff]
    %v1270 = vld [vmem:[#allocation8 + $0xf88] sm:$0xff]
    %v1271 = vld [vmem:[#allocation8 + $0xf90] sm:$0xff]
    %v1272 = vld [vmem:[#allocation8 + $0xf98] sm:$0xff]
    %v1273 = vld [vmem:[#allocation8 + $0xfa0] sm:$0xff]
    %v1274 = vld [vmem:[#allocation8 + $0xfa8] sm:$0xff]
    %v1275 = vld [vmem:[#allocation8 + $0xfb0] sm:$0xff]
    %v1276 = vld [vmem:[#allocation8 + $0xfb8] sm:$0xff]
    %v1277 = vld [vmem:[#allocation8 + $0xfc0] sm:$0xff]
    %v1278 = vld [vmem:[#allocation8 + $0xfc8] sm:$0xff]
    %v1279 = vld [vmem:[#allocation8 + $0xfd0] sm:$0xff]
    %v1280 = vld [vmem:[#allocation8 + $0xfd8] sm:$0xff]
    %v1281 = vld [vmem:[#allocation8 + $0xfe0] sm:$0xff]
    %v1282 = vld [vmem:[#allocation8 + $0xfe8] sm:$0xff]
    %v1283 = vld [vmem:[#allocation8 + $0xff0] sm:$0xff]
    %v1284 = vld [vmem:[#allocation8 + $0xff8] sm:$0xff]
    %v1285 = vld [vmem:[#allocation8 + $0x1000] sm:$0xff]
    %v1286 = vld [vmem:[#allocation8 + $0x1008] sm:$0xff]
    %v1287 = vld [vmem:[#allocation8 + $0x1010] sm:$0xff]
    %v1288 = vld [vmem:[#allocation8 + $0x1018] sm:$0xff]
    %v1289 = vld [vmem:[#allocation8 + $0x1020] sm:$0xff]
    %v1290 = vld [vmem:[#allocation8 + $0x1028] sm:$0xff]
    %v1291 = vld [vmem:[#allocation8 + $0x1030] sm:$0xff]
    %v1292 = vld [vmem:[#allocation8 + $0x1038] sm:$0xff]
    %v1293 = vld [vmem:[#allocation8 + $0x1040] sm:$0xff]
    %v1294 = vld [vmem:[#allocation8 + $0x1048] sm:$0xff]
    %v1295 = vld [vmem:[#allocation8 + $0x1050] sm:$0xff]
    %v1296 = vld [vmem:[#allocation8 + $0x1058] sm:$0xff]
    %v1297 = vld [vmem:[#allocation8 + $0x1060] sm:$0xff]
    %v1298 = vld [vmem:[#allocation8 + $0x1068] sm:$0xff]
    %v1299 = vld [vmem:[#allocation8 + $0x1070] sm:$0xff]
    %v1300 = vld [vmem:[#allocation8 + $0x1078] sm:$0xff]
    %v1301 = vld [vmem:[#allocation8 + $0x1080] sm:$0xff]
    %v1302 = vld [vmem:[#allocation8 + $0x1088] sm:$0xff]
    %v1303 = vld [vmem:[#allocation8 + $0x1090] sm:$0xff]
    %v1304 = vld [vmem:[#allocation8 + $0x1098] sm:$0xff]
    %v1305 = vld [vmem:[#allocation8 + $0x10a0] sm:$0xff]
    %v1306 = vld [vmem:[#allocation8 + $0x10a8] sm:$0xff]
    %v1307 = vld [vmem:[#allocation8 + $0x10b0] sm:$0xff]
    %v1308 = vld [vmem:[#allocation8 + $0x10b8] sm:$0xff]
    %v1309 = vld [vmem:[#allocation8 + $0x10c0] sm:$0xff]
    %v1310 = vld [vmem:[#allocation8 + $0x10c8] sm:$0xff]
    %v1311 = vld [vmem:[#allocation8 + $0x10d0] sm:$0xff]
    %v1312 = vld [vmem:[#allocation8 + $0x10d8] sm:$0xff]
    %v1313 = vld [vmem:[#allocation8 + $0x10e0] sm:$0xff]
    %v1314 = vld [vmem:[#allocation8 + $0x10e8] sm:$0xff]
    %v1315 = vld [vmem:[#allocation8 + $0x10f0] sm:$0xff]
    %v1316 = vld [vmem:[#allocation8 + $0x10f8] sm:$0xff]
    %v1317 = vld [vmem:[#allocation8 + $0x1100] sm:$0xff]
    %v1318 = vld [vmem:[#allocation8 + $0x1108] sm:$0xff]
    %v1319 = vld [vmem:[#allocation8 + $0x1110] sm:$0xff]
    %v1320 = vld [vmem:[#allocation8 + $0x1118] sm:$0xff]
    %v1321 = vld [vmem:[#allocation8 + $0x1120] sm:$0xff]
    %v1322 = vld [vmem:[#allocation8 + $0x1128] sm:$0xff]
    %v1323 = vld [vmem:[#allocation8 + $0x1130] sm:$0xff]
    %v1324 = vld [vmem:[#allocation8 + $0x1138] sm:$0xff]
    %v1325 = vld [vmem:[#allocation8 + $0x1140] sm:$0xff]
    %v1326 = vld [vmem:[#allocation8 + $0x1148] sm:$0xff]
    %v1327 = vld [vmem:[#allocation8 + $0x1150] sm:$0xff]
    %v1328 = vld [vmem:[#allocation8 + $0x1158] sm:$0xff]
    %v1329 = vld [vmem:[#allocation8 + $0x1160] sm:$0xff]
    %v1330 = vld [vmem:[#allocation8 + $0x1168] sm:$0xff]
    %v1331 = vld [vmem:[#allocation8 + $0x1170] sm:$0xff]
    %v1332 = vld [vmem:[#allocation8 + $0x1178] sm:$0xff]
    %v1333 = vld [vmem:[#allocation8 + $0x1180] sm:$0xff]
    %v1334 = vld [vmem:[#allocation8 + $0x1188] sm:$0xff]
    %v1335 = vld [vmem:[#allocation8 + $0x1190] sm:$0xff]
    %v1336 = vld [vmem:[#allocation8 + $0x1198] sm:$0xff]
    %v1337 = vld [vmem:[#allocation8 + $0x11a0] sm:$0xff]
    %v1338 = vld [vmem:[#allocation8 + $0x11a8] sm:$0xff]
    %v1339 = vld [vmem:[#allocation8 + $0x11b0] sm:$0xff]
    %v1340 = vld [vmem:[#allocation8 + $0x11b8] sm:$0xff]
    %v1341 = vld [vmem:[#allocation8 + $0x11c0] sm:$0xff]
    %v1342 = vld [vmem:[#allocation8 + $0x11c8] sm:$0xff]
    %v1343 = vld [vmem:[#allocation8 + $0x11d0] sm:$0xff]
    %v1344 = vld [vmem:[#allocation8 + $0x11d8] sm:$0xff]
    %v1345 = vld [vmem:[#allocation8 + $0x11e0] sm:$0xff]
    %v1346 = vld [vmem:[#allocation8 + $0x11e8] sm:$0xff]
    %v1347 = vld [vmem:[#allocation8 + $0x11f0] sm:$0xff]
    %v1348 = vld [vmem:[#allocation8 + $0x11f8] sm:$0xff]
    %v1349 = vld [vmem:[#allocation8 + $0x1200] sm:$0xff]
    %v1350 = vld [vmem:[#allocation8 + $0x1208] sm:$0xff]
    %v1351 = vld [vmem:[#allocation8 + $0x1210] sm:$0xff]
    %v1352 = vld [vmem:[#allocation8 + $0x1218] sm:$0xff]
    %v1353 = vld [vmem:[#allocation8 + $0x1220] sm:$0xff]
    %v1354 = vld [vmem:[#allocation8 + $0x1228] sm:$0xff]
    %v1355 = vld [vmem:[#allocation8 + $0x1230] sm:$0xff]
    %v1356 = vld [vmem:[#allocation8 + $0x1238] sm:$0xff]
    %v1357 = vld [vmem:[#allocation8 + $0x1240] sm:$0xff]
    %v1358 = vld [vmem:[#allocation8 + $0x1248] sm:$0xff]
    %v1359 = vld [vmem:[#allocation8 + $0x1250] sm:$0xff]
    %v1360 = vld [vmem:[#allocation8 + $0x1258] sm:$0xff]
    %v1361 = vld [vmem:[#allocation8 + $0x1260] sm:$0xff]
    %v1362 = vld [vmem:[#allocation8 + $0x1268] sm:$0xff]
    %v1363 = vld [vmem:[#allocation8 + $0x1270] sm:$0xff]
    %v1364 = vld [vmem:[#allocation8 + $0x1278] sm:$0xff]
    %v1365 = vld [vmem:[#allocation8 + $0x1280] sm:$0xff]
    %v1366 = vld [vmem:[#allocation8 + $0x1288] sm:$0xff]
    %v1367 = vld [vmem:[#allocation8 + $0x1290] sm:$0xff]
    %v1368 = vld [vmem:[#allocation8 + $0x1298] sm:$0xff]
    %v1369 = vld [vmem:[#allocation8 + $0x12a0] sm:$0xff]
    %v1370 = vld [vmem:[#allocation8 + $0x12a8] sm:$0xff]
    %v1371 = vld [vmem:[#allocation8 + $0x12b0] sm:$0xff]
    %v1372 = vld [vmem:[#allocation8 + $0x12b8] sm:$0xff]
    %v1373 = vld [vmem:[#allocation8 + $0x12c0] sm:$0xff]
    %v1374 = vld [vmem:[#allocation8 + $0x12c8] sm:$0xff]
    %v1375 = vld [vmem:[#allocation8 + $0x12d0] sm:$0xff]
    %v1376 = vld [vmem:[#allocation8 + $0x12d8] sm:$0xff]
    %v1377 = vld [vmem:[#allocation8 + $0x12e0] sm:$0xff]
    %v1378 = vld [vmem:[#allocation8 + $0x12e8] sm:$0xff]
    %v1379 = vld [vmem:[#allocation8 + $0x12f0] sm:$0xff]
    %v1380 = vld [vmem:[#allocation8 + $0x12f8] sm:$0xff]
    %v1381 = vld [vmem:[#allocation8 + $0x1300] sm:$0xff]
    %v1382 = vld [vmem:[#allocation8 + $0x1308] sm:$0xff]
    %v1383 = vld [vmem:[#allocation8 + $0x1310] sm:$0xff]
    %v1384 = vld [vmem:[#allocation8 + $0x1318] sm:$0xff]
    %v1385 = vld [vmem:[#allocation8 + $0x1320] sm:$0xff]
    %v1386 = vld [vmem:[#allocation8 + $0x1328] sm:$0xff]
    %v1387 = vld [vmem:[#allocation8 + $0x1330] sm:$0xff]
    %v1388 = vld [vmem:[#allocation8 + $0x1338] sm:$0xff]
    %v1389 = vld [vmem:[#allocation8 + $0x1340] sm:$0xff]
    %v1390 = vld [vmem:[#allocation8 + $0x1348] sm:$0xff]
    %v1391 = vld [vmem:[#allocation8 + $0x1350] sm:$0xff]
    %v1392 = vld [vmem:[#allocation8 + $0x1358] sm:$0xff]
    %v1393 = vld [vmem:[#allocation8 + $0x1360] sm:$0xff]
    %v1394 = vld [vmem:[#allocation8 + $0x1368] sm:$0xff]
    %v1395 = vld [vmem:[#allocation8 + $0x1370] sm:$0xff]
    %v1396 = vld [vmem:[#allocation8 + $0x1378] sm:$0xff]
    %v1397 = vld [vmem:[#allocation8 + $0x1380] sm:$0xff]
    %v1398 = vld [vmem:[#allocation8 + $0x1388] sm:$0xff]
    %v1399 = vld [vmem:[#allocation8 + $0x1390] sm:$0xff]
    %v1400 = vld [vmem:[#allocation8 + $0x1398] sm:$0xff]
    %v1401 = vld [vmem:[#allocation8 + $0x13a0] sm:$0xff]
    %v1402 = vld [vmem:[#allocation8 + $0x13a8] sm:$0xff]
    %v1403 = vld [vmem:[#allocation8 + $0x13b0] sm:$0xff]
    %v1404 = vld [vmem:[#allocation8 + $0x13b8] sm:$0xff]
    %v1405 = vld [vmem:[#allocation8 + $0x13c0] sm:$0xff]
    %v1406 = vld [vmem:[#allocation8 + $0x13c8] sm:$0xff]
    %v1407 = vld [vmem:[#allocation8 + $0x13d0] sm:$0xff]
    %v1408 = vld [vmem:[#allocation8 + $0x13d8] sm:$0xff]
    %v1409 = vld [vmem:[#allocation8 + $0x13e0] sm:$0xff]
    %v1410 = vld [vmem:[#allocation8 + $0x13e8] sm:$0xff]
    %v1411 = vld [vmem:[#allocation8 + $0x13f0] sm:$0xff]
    %v1412 = vld [vmem:[#allocation8 + $0x13f8] sm:$0xff]
    %v1413 = vld [vmem:[#allocation8 + $0x1400] sm:$0xff]
    %v1414 = vld [vmem:[#allocation8 + $0x1408] sm:$0xff]
    %v1415 = vld [vmem:[#allocation8 + $0x1410] sm:$0xff]
    %v1416 = vld [vmem:[#allocation8 + $0x1418] sm:$0xff]
    %v1417 = vld [vmem:[#allocation8 + $0x1420] sm:$0xff]
    %v1418 = vld [vmem:[#allocation8 + $0x1428] sm:$0xff]
    %v1419 = vld [vmem:[#allocation8 + $0x1430] sm:$0xff]
    %v1420 = vld [vmem:[#allocation8 + $0x1438] sm:$0xff]
    %v1421 = vld [vmem:[#allocation8 + $0x1440] sm:$0xff]
    %v1422 = vld [vmem:[#allocation8 + $0x1448] sm:$0xff]
    %v1423 = vld [vmem:[#allocation8 + $0x1450] sm:$0xff]
    %v1424 = vld [vmem:[#allocation8 + $0x1458] sm:$0xff]
    %v1425 = vld [vmem:[#allocation8 + $0x1460] sm:$0xff]
    %v1426 = vld [vmem:[#allocation8 + $0x1468] sm:$0xff]
    %v1427 = vld [vmem:[#allocation8 + $0x1470] sm:$0xff]
    %v1428 = vld [vmem:[#allocation8 + $0x1478] sm:$0xff]
    %v1429 = vld [vmem:[#allocation8 + $0x1480] sm:$0xff]
    %v1430 = vld [vmem:[#allocation8 + $0x1488] sm:$0xff]
    %v1431 = vld [vmem:[#allocation8 + $0x1490] sm:$0xff]
    %v1432 = vld [vmem:[#allocation8 + $0x1498] sm:$0xff]
    %v1433 = vld [vmem:[#allocation8 + $0x14a0] sm:$0xff]
    %v1434 = vld [vmem:[#allocation8 + $0x14a8] sm:$0xff]
    %v1435 = vld [vmem:[#allocation8 + $0x14b0] sm:$0xff]
    %v1436 = vld [vmem:[#allocation8 + $0x14b8] sm:$0xff]
    %v1437 = vld [vmem:[#allocation8 + $0x14c0] sm:$0xff]
    %v1438 = vld [vmem:[#allocation8 + $0x14c8] sm:$0xff]
    %v1439 = vld [vmem:[#allocation8 + $0x14d0] sm:$0xff]
    %v1440 = vld [vmem:[#allocation8 + $0x14d8] sm:$0xff]
    %v1441 = vld [vmem:[#allocation8 + $0x14e0] sm:$0xff]
    %v1442 = vld [vmem:[#allocation8 + $0x14e8] sm:$0xff]
    %v1443 = vld [vmem:[#allocation8 + $0x14f0] sm:$0xff]
    %v1444 = vld [vmem:[#allocation8 + $0x14f8] sm:$0xff]
    %v1445 = vld [vmem:[#allocation8 + $0x1500] sm:$0xff]
    %v1446 = vld [vmem:[#allocation8 + $0x1508] sm:$0xff]
    %v1447 = vld [vmem:[#allocation8 + $0x1510] sm:$0xff]
    %v1448 = vld [vmem:[#allocation8 + $0x1518] sm:$0xff]
    %v1449 = vld [vmem:[#allocation8 + $0x1520] sm:$0xff]
    %v1450 = vld [vmem:[#allocation8 + $0x1528] sm:$0xff]
    %v1451 = vld [vmem:[#allocation8 + $0x1530] sm:$0xff]
    %v1452 = vld [vmem:[#allocation8 + $0x1538] sm:$0xff]
    %v1453 = vld [vmem:[#allocation8 + $0x1540] sm:$0xff]
    %v1454 = vld [vmem:[#allocation8 + $0x1548] sm:$0xff]
    %v1455 = vld [vmem:[#allocation8 + $0x1550] sm:$0xff]
    %v1456 = vld [vmem:[#allocation8 + $0x1558] sm:$0xff]
    %v1457 = vld [vmem:[#allocation8 + $0x1560] sm:$0xff]
    %v1458 = vld [vmem:[#allocation8 + $0x1568] sm:$0xff]
    %v1459 = vld [vmem:[#allocation8 + $0x1570] sm:$0xff]
    %v1460 = vld [vmem:[#allocation8 + $0x1578] sm:$0xff]
    %v1461 = vld [vmem:[#allocation8 + $0x1580] sm:$0xff]
    %v1462 = vld [vmem:[#allocation8 + $0x1588] sm:$0xff]
    %v1463 = vld [vmem:[#allocation8 + $0x1590] sm:$0xff]
    %v1464 = vld [vmem:[#allocation8 + $0x1598] sm:$0xff]
    %v1465 = vld [vmem:[#allocation8 + $0x15a0] sm:$0xff]
    %v1466 = vld [vmem:[#allocation8 + $0x15a8] sm:$0xff]
    %v1467 = vld [vmem:[#allocation8 + $0x15b0] sm:$0xff]
    %v1468 = vld [vmem:[#allocation8 + $0x15b8] sm:$0xff]
    %v1469 = vld [vmem:[#allocation8 + $0x15c0] sm:$0xff]
    %v1470 = vld [vmem:[#allocation8 + $0x15c8] sm:$0xff]
    %v1471 = vld [vmem:[#allocation8 + $0x15d0] sm:$0xff]
    %v1472 = vld [vmem:[#allocation8 + $0x15d8] sm:$0xff]
    %v1473 = vld [vmem:[#allocation2] sm:$0xff]
    %v1474 = vld [vmem:[#allocation2 + $0x8] sm:$0xff]
    %v1475 = vld [vmem:[#allocation2 + $0x10] sm:$0xff]
    %v1476 = vld [vmem:[#allocation2 + $0x18] sm:$0xff]
    %v1477 = vld [vmem:[#allocation2 + $0x20] sm:$0xff]
    %v1478 = vld [vmem:[#allocation2 + $0x28] sm:$0xff]
    %v1479 = vld [vmem:[#allocation2 + $0x30] sm:$0xff]
    %v1480 = vld [vmem:[#allocation2 + $0x38] sm:$0xff]
    %v1481 = vld [vmem:[#allocation2 + $0x40] sm:$0xff]
    %v1482 = vld [vmem:[#allocation2 + $0x48] sm:$0xff]
    %v1483 = vld [vmem:[#allocation2 + $0x50] sm:$0xff]
    %v1484 = vld [vmem:[#allocation2 + $0x58] sm:$0xff]
    %v1485 = vld [vmem:[#allocation2 + $0x60] sm:$0xff]
    %v1486 = vld [vmem:[#allocation2 + $0x68] sm:$0xff]
    %v1487 = vld [vmem:[#allocation5] sm:$0xff]
    %v1488 = vld [vmem:[#allocation5 + $0x8] sm:$0xff]
    %v1489 = vld [vmem:[#allocation5 + $0x10] sm:$0xff]
    %v1490 = vld [vmem:[#allocation5 + $0x18] sm:$0xff]
    %v1491 = vld [vmem:[#allocation5 + $0x20] sm:$0xff]
    %v1492 = vld [vmem:[#allocation5 + $0x28] sm:$0xff]
    %v1493 = vld [vmem:[#allocation5 + $0x30] sm:$0xff]
    %v1494 = vld [vmem:[#allocation5 + $0x38] sm:$0xff]
    %v1495 = vld [vmem:[#allocation5 + $0x40] sm:$0xff]
    %v1496 = vld [vmem:[#allocation5 + $0x48] sm:$0xff]
    %v1497 = vld [vmem:[#allocation5 + $0x50] sm:$0xff]
    %v1498 = vld [vmem:[#allocation5 + $0x58] sm:$0xff]
    %v1499 = vld [vmem:[#allocation5 + $0x60] sm:$0xff]
    %v1500 = vld [vmem:[#allocation5 + $0x68] sm:$0xff]
    %vm1501 = vcmask 261120
    %v1503 = vsel %vm1501, %v1493, 0
    %v1506 = vsel %vm1501, %v1500, 0
    %1508 = vmatprep.subr.mxu0 %v879
    %1509 = vmatpush1.msra.mxu0 %v878
    %1510 = vmatprep.subr.mxu0 %v872
    %1511 = vmatpush1.msra.mxu0 %v871
    %1512 = vmatprep.subr.mxu0 %v865
    %1513 = vmatpush1.msra.mxu0 %v864
    %1514 = vmatprep.subr.mxu0 %v858
    %1515 = vmatpush1.msra.mxu0 %v857
    %1516 = vmatprep.subr.mxu0 %v851
    %1517 = vmatpush1.msra.mxu0 %v850
    %1518 = vmatprep.subr.mxu0 %v844
    %1519 = vmatpush1.msra.mxu0 %v843
    %1520 = vmatprep.subr.mxu0 %v837
    %1521 = vmatpush1.msra.mxu0 %v836
    %1522 = vmatprep.subr.mxu0 %v830
    %1523 = vmatpush1.msra.mxu0 %v829
    %1524 = vmatprep.subr.mxu0 %v823
    %1525 = vmatpush1.msra.mxu0 %v822
    %1526 = vmatprep.subr.mxu0 %v816
    %1527 = vmatpush1.msra.mxu0 %v815
    %1528 = vmatprep.subr.mxu0 %v809
    %1529 = vmatpush1.msra.mxu0 %v808
    %1530 = vmatprep.subr.mxu0 %v802
    %1531 = vmatpush1.msra.mxu0 %v801
    %1532 = vmatprep.subr.mxu0 %v795
    %1533 = vmatpush1.msra.mxu0 %v794
    %1534 = vmatprep.subr.mxu0 %v788
    %1535 = vmatpush1.msra.mxu0 %v787
    %1536 = vmatprep.subr.mxu0 %v781
    %1537 = vmatpush1.msra.mxu0 %v780
    %1538 = vmatprep.subr.mxu0 %v774
    %1539 = vmatpush1.msra.mxu0 %v773
    %1540 = vmatprep.subr.mxu0 %v991
    %1541 = vmatpush2.msra.mxu0 %v990
    %1542 = vmatprep.subr.mxu0 %v984
    %1543 = vmatpush2.msra.mxu0 %v983
    %1544 = vmatprep.subr.mxu0 %v977
    %1545 = vmatpush2.msra.mxu0 %v976
    %1546 = vmatprep.subr.mxu0 %v970
    %1547 = vmatpush2.msra.mxu0 %v969
    %1548 = vmatprep.subr.mxu0 %v963
    %1549 = vmatpush2.msra.mxu0 %v962
    %1550 = vmatprep.subr.mxu0 %v956
    %1551 = vmatpush2.msra.mxu0 %v955
    %1552 = vmatprep.subr.mxu0 %v949
    %1553 = vmatpush2.msra.mxu0 %v948
    %1554 = vmatprep.subr.mxu0 %v942
    %1555 = vmatpush2.msra.mxu0 %v941
    %1556 = vmatprep.subr.mxu0 %v935
    %1557 = vmatpush2.msra.mxu0 %v934
    %1558 = vmatprep.subr.mxu0 %v928
    %1559 = vmatpush2.msra.mxu0 %v927
    %1560 = vmatprep.subr.mxu0 %v921
    %1561 = vmatpush2.msra.mxu0 %v920
    %1562 = vmatprep.subr.mxu0 %v914
    %1563 = vmatpush2.msra.mxu0 %v913
    %1564 = vmatprep.subr.mxu0 %v907
    %1565 = vmatpush2.msra.mxu0 %v906
    %1566 = vmatprep.subr.mxu0 %v900
    %1567 = vmatpush2.msra.mxu0 %v899
    %1568 = vmatprep.subr.mxu0 %v893
    %1569 = vmatpush2.msra.mxu0 %v892
    %1570 = vmatprep.subr.mxu0 %v886
    %1571 = vmatpush2.msra.mxu0 %v885
    %1572 = vmatprep.mubr.f32.mxu0 %v1488
    %1573 = vmatmul.mubr.f32.gmra.mxu0 %v1487
    %v1574 = vpop.f32.mrf.mxu0
    %v1575 = vadd.f32 0.0, %v1574
    %v1576 = vpop.f32.mrf.mxu0
    %v1577 = vadd.f32 0.0, %v1576
    %1578 = vmatprep.mubr.f32.mxu0 %v1495
    %1579 = vmatmul.mubr.f32.gmra.mxu0 %v1494
    %v1580 = vpop.f32.mrf.mxu0
    %v1581 = vadd.f32 0.0, %v1580
    %v1582 = vpop.f32.mrf.mxu0
    %v1583 = vadd.f32 0.0, %v1582
    %1584 = vdwg.mxu0
    %1585 = vmatprep.subr.mxu0 %v1103
    %1586 = vmatpush1.msra.mxu0 %v1102
    %1587 = vmatprep.subr.mxu0 %v1096
    %1588 = vmatpush1.msra.mxu0 %v1095
    %1589 = vmatprep.subr.mxu0 %v1089
    %1590 = vmatpush1.msra.mxu0 %v1088
    %1591 = vmatprep.subr.mxu0 %v1082
    %1592 = vmatpush1.msra.mxu0 %v1081
    %1593 = vmatprep.subr.mxu0 %v1075
    %1594 = vmatpush1.msra.mxu0 %v1074
    %1595 = vmatprep.subr.mxu0 %v1068
    %1596 = vmatpush1.msra.mxu0 %v1067
    %1597 = vmatprep.subr.mxu0 %v1061
    %1598 = vmatpush1.msra.mxu0 %v1060
    %1599 = vmatprep.subr.mxu0 %v1054
    %1600 = vmatpush1.msra.mxu0 %v1053
    %1601 = vmatprep.subr.mxu0 %v1047
    %1602 = vmatpush1.msra.mxu0 %v1046
    %1603 = vmatprep.subr.mxu0 %v1040
    %1604 = vmatpush1.msra.mxu0 %v1039
    %1605 = vmatprep.subr.mxu0 %v1033
    %1606 = vmatpush1.msra.mxu0 %v1032
    %1607 = vmatprep.subr.mxu0 %v1026
    %1608 = vmatpush1.msra.mxu0 %v1025
    %1609 = vmatprep.subr.mxu0 %v1019
    %1610 = vmatpush1.msra.mxu0 %v1018
    %1611 = vmatprep.subr.mxu0 %v1012
    %1612 = vmatpush1.msra.mxu0 %v1011
    %1613 = vmatprep.subr.mxu0 %v1005
    %1614 = vmatpush1.msra.mxu0 %v1004
    %1615 = vmatprep.subr.mxu0 %v998
    %1616 = vmatpush1.msra.mxu0 %v997
    %1617 = vmatprep.subr.mxu0 %v1215
    %1618 = vmatpush2.msra.mxu0 %v1214
    %1619 = vmatprep.subr.mxu0 %v1208
    %1620 = vmatpush2.msra.mxu0 %v1207
    %1621 = vmatprep.subr.mxu0 %v1201
    %1622 = vmatpush2.msra.mxu0 %v1200
    %1623 = vmatprep.subr.mxu0 %v1194
    %1624 = vmatpush2.msra.mxu0 %v1193
    %1625 = vmatprep.subr.mxu0 %v1187
    %1626 = vmatpush2.msra.mxu0 %v1186
    %1627 = vmatprep.subr.mxu0 %v1180
    %1628 = vmatpush2.msra.mxu0 %v1179
    %1629 = vmatprep.subr.mxu0 %v1173
    %1630 = vmatpush2.msra.mxu0 %v1172
    %1631 = vmatprep.subr.mxu0 %v1166
    %1632 = vmatpush2.msra.mxu0 %v1165
    %1633 = vmatprep.subr.mxu0 %v1159
    %1634 = vmatpush2.msra.mxu0 %v1158
    %1635 = vmatprep.subr.mxu0 %v1152
    %1636 = vmatpush2.msra.mxu0 %v1151
    %1637 = vmatprep.subr.mxu0 %v1145
    %1638 = vmatpush2.msra.mxu0 %v1144
    %1639 = vmatprep.subr.mxu0 %v1138
    %1640 = vmatpush2.msra.mxu0 %v1137
    %1641 = vmatprep.subr.mxu0 %v1131
    %1642 = vmatpush2.msra.mxu0 %v1130
    %1643 = vmatprep.subr.mxu0 %v1124
    %1644 = vmatpush2.msra.mxu0 %v1123
    %1645 = vmatprep.subr.mxu0 %v1117
    %1646 = vmatpush2.msra.mxu0 %v1116
    %1647 = vmatprep.subr.mxu0 %v1110
    %1648 = vmatpush2.msra.mxu0 %v1109
    %1649 = vmatprep.mubr.f32.mxu0 %v1490
    %1650 = vmatmul.mubr.f32.gmra.mxu0 %v1489
    %v1651 = vpop.f32.mrf.mxu0
    %v1652 = vadd.f32 %v1575, %v1651
    %v1653 = vpop.f32.mrf.mxu0
    %v1654 = vadd.f32 %v1577, %v1653
    %1655 = vmatprep.mubr.f32.mxu0 %v1497
    %1656 = vmatmul.mubr.f32.gmra.mxu0 %v1496
    %v1657 = vpop.f32.mrf.mxu0
    %v1658 = vadd.f32 %v1581, %v1657
    %v1659 = vpop.f32.mrf.mxu0
    %v1660 = vadd.f32 %v1583, %v1659
    %1661 = vdwg.mxu0
    %1662 = vmatprep.subr.mxu0 %v1327
    %1663 = vmatpush1.msra.mxu0 %v1326
    %1664 = vmatprep.subr.mxu0 %v1320
    %1665 = vmatpush1.msra.mxu0 %v1319
    %1666 = vmatprep.subr.mxu0 %v1313
    %1667 = vmatpush1.msra.mxu0 %v1312
    %1668 = vmatprep.subr.mxu0 %v1306
    %1669 = vmatpush1.msra.mxu0 %v1305
    %1670 = vmatprep.subr.mxu0 %v1299
    %1671 = vmatpush1.msra.mxu0 %v1298
    %1672 = vmatprep.subr.mxu0 %v1292
    %1673 = vmatpush1.msra.mxu0 %v1291
    %1674 = vmatprep.subr.mxu0 %v1285
    %1675 = vmatpush1.msra.mxu0 %v1284
    %1676 = vmatprep.subr.mxu0 %v1278
    %1677 = vmatpush1.msra.mxu0 %v1277
    %1678 = vmatprep.subr.mxu0 %v1271
    %1679 = vmatpush1.msra.mxu0 %v1270
    %1680 = vmatprep.subr.mxu0 %v1264
    %1681 = vmatpush1.msra.mxu0 %v1263
    %1682 = vmatprep.subr.mxu0 %v1257
    %1683 = vmatpush1.msra.mxu0 %v1256
    %1684 = vmatprep.subr.mxu0 %v1250
    %1685 = vmatpush1.msra.mxu0 %v1249
    %1686 = vmatprep.subr.mxu0 %v1243
    %1687 = vmatpush1.msra.mxu0 %v1242
    %1688 = vmatprep.subr.mxu0 %v1236
    %1689 = vmatpush1.msra.mxu0 %v1235
    %1690 = vmatprep.subr.mxu0 %v1229
    %1691 = vmatpush1.msra.mxu0 %v1228
    %1692 = vmatprep.subr.mxu0 %v1222
    %1693 = vmatpush1.msra.mxu0 %v1221
    %1694 = vmatprep.subr.mxu0 %v1439
    %1695 = vmatpush2.msra.mxu0 %v1438
    %1696 = vmatprep.subr.mxu0 %v1432
    %1697 = vmatpush2.msra.mxu0 %v1431
    %1698 = vmatprep.subr.mxu0 %v1425
    %1699 = vmatpush2.msra.mxu0 %v1424
    %1700 = vmatprep.subr.mxu0 %v1418
    %1701 = vmatpush2.msra.mxu0 %v1417
    %1702 = vmatprep.subr.mxu0 %v1411
    %1703 = vmatpush2.msra.mxu0 %v1410
    %1704 = vmatprep.subr.mxu0 %v1404
    %1705 = vmatpush2.msra.mxu0 %v1403
    %1706 = vmatprep.subr.mxu0 %v1397
    %1707 = vmatpush2.msra.mxu0 %v1396
    %1708 = vmatprep.subr.mxu0 %v1390
    %1709 = vmatpush2.msra.mxu0 %v1389
    %1710 = vmatprep.subr.mxu0 %v1383
    %1711 = vmatpush2.msra.mxu0 %v1382
    %1712 = vmatprep.subr.mxu0 %v1376
    %1713 = vmatpush2.msra.mxu0 %v1375
    %1714 = vmatprep.subr.mxu0 %v1369
    %1715 = vmatpush2.msra.mxu0 %v1368
    %1716 = vmatprep.subr.mxu0 %v1362
    %1717 = vmatpush2.msra.mxu0 %v1361
    %1718 = vmatprep.subr.mxu0 %v1355
    %1719 = vmatpush2.msra.mxu0 %v1354
    %1720 = vmatprep.subr.mxu0 %v1348
    %1721 = vmatpush2.msra.mxu0 %v1347
    %1722 = vmatprep.subr.mxu0 %v1341
    %1723 = vmatpush2.msra.mxu0 %v1340
    %1724 = vmatprep.subr.mxu0 %v1334
    %1725 = vmatpush2.msra.mxu0 %v1333
    %1726 = vmatprep.mubr.f32.mxu0 %v1492
    %1727 = vmatmul.mubr.f32.gmra.mxu0 %v1491
    %v1728 = vpop.f32.mrf.mxu0
    %v1729 = vadd.f32 %v1652, %v1728
    %v1730 = vpop.f32.mrf.mxu0
    %v1731 = vadd.f32 %v1654, %v1730
    %1732 = vmatprep.mubr.f32.mxu0 %v1499
    %1733 = vmatmul.mubr.f32.gmra.mxu0 %v1498
    %v1734 = vpop.f32.mrf.mxu0
    %v1735 = vadd.f32 %v1658, %v1734
    %v1736 = vpop.f32.mrf.mxu0
    %v1737 = vadd.f32 %v1660, %v1736
    %1738 = vdwg.mxu0
    %1739 = vmatprep.subr.mxu0 0.0
    %1740 = vmatpush1.msra.mxu0 0.0
    %1741 = vmatprep.subr.mxu0 0.0
    %1742 = vmatpush1.msra.mxu0 0.0
    %1743 = vmatprep.subr.mxu0 0.0
    %1744 = vmatpush1.msra.mxu0 0.0
    %1745 = vmatprep.subr.mxu0 0.0
    %1746 = vmatpush1.msra.mxu0 0.0
    %1747 = vmatprep.subr.mxu0 0.0
    %1748 = vmatpush1.msra.mxu0 0.0
    %1749 = vmatprep.subr.mxu0 0.0
    %1750 = vmatpush1.msra.mxu0 0.0
    %1751 = vmatprep.subr.mxu0 0.0
    %1752 = vmatpush1.msra.mxu0 0.0
    %1753 = vmatprep.subr.mxu0 0.0
    %1754 = vmatpush1.msra.mxu0 0.0
    %1755 = vmatprep.subr.mxu0 0.0
    %1756 = vmatpush1.msra.mxu0 0.0
    %1757 = vmatprep.subr.mxu0 0.0
    %1758 = vmatpush1.msra.mxu0 0.0
    %1759 = vmatprep.subr.mxu0 0.0
    %1760 = vmatpush1.msra.mxu0 0.0
    %1761 = vmatprep.subr.mxu0 0.0
    %1762 = vmatpush1.msra.mxu0 0.0
    %1763 = vmatprep.subr.mxu0 %v1467
    %1764 = vmatpush1.msra.mxu0 %v1466
    %1765 = vmatprep.subr.mxu0 %v1460
    %1766 = vmatpush1.msra.mxu0 %v1459
    %1767 = vmatprep.subr.mxu0 %v1453
    %1768 = vmatpush1.msra.mxu0 %v1452
    %1769 = vmatprep.subr.mxu0 %v1446
    %1770 = vmatpush1.msra.mxu0 %v1445
    %1771 = vmatprep.subr.mxu0 0.0
    %1772 = vmatpush2.msra.mxu0 0.0
    %1773 = vmatprep.subr.mxu0 0.0
    %1774 = vmatpush2.msra.mxu0 0.0
    %1775 = vmatprep.subr.mxu0 0.0
    %1776 = vmatpush2.msra.mxu0 0.0
    %1777 = vmatprep.subr.mxu0 0.0
    %1778 = vmatpush2.msra.mxu0 0.0
    %1779 = vmatprep.subr.mxu0 0.0
    %1780 = vmatpush2.msra.mxu0 0.0
    %1781 = vmatprep.subr.mxu0 0.0
    %1782 = vmatpush2.msra.mxu0 0.0
    %1783 = vmatprep.subr.mxu0 0.0
    %1784 = vmatpush2.msra.mxu0 0.0
    %1785 = vmatprep.subr.mxu0 0.0
    %1786 = vmatpush2.msra.mxu0 0.0
    %1787 = vmatprep.subr.mxu0 0.0
    %1788 = vmatpush2.msra.mxu0 0.0
    %1789 = vmatprep.subr.mxu0 0.0
    %1790 = vmatpush2.msra.mxu0 0.0
    %1791 = vmatprep.subr.mxu0 0.0
    %1792 = vmatpush2.msra.mxu0 0.0
    %1793 = vmatprep.subr.mxu0 0.0
    %1794 = vmatpush2.msra.mxu0 0.0
    %1795 = vmatprep.subr.mxu0 0.0
    %1796 = vmatpush2.msra.mxu0 0.0
    %1797 = vmatprep.subr.mxu0 0.0
    %1798 = vmatpush2.msra.mxu0 0.0
    %1799 = vmatprep.subr.mxu0 0.0
    %1800 = vmatpush2.msra.mxu0 0.0
    %1801 = vmatprep.subr.mxu0 0.0
    %1802 = vmatpush2.msra.mxu0 0.0
    %1803 = vmatprep.mubr.f32.mxu0 0.0
    %1804 = vmatmul.mubr.f32.gmra.mxu0 %v1503
    %v1805 = vpop.f32.mrf.mxu0
    %v1806 = vadd.f32 %v1729, %v1805
    %v1807 = vpop.f32.mrf.mxu0
    %v1808 = vadd.f32 %v1731, %v1807
    %1809 = vmatprep.mubr.f32.mxu0 0.0
    %1810 = vmatmul.mubr.f32.gmra.mxu0 %v1506
    %v1811 = vpop.f32.mrf.mxu0
    %v1812 = vadd.f32 %v1735, %v1811
    %v1813 = vpop.f32.mrf.mxu0
    %v1814 = vadd.f32 %v1737, %v1813
    %1815 = vdwg.mxu0
    %1816 = vmatprep.subr.mxu0 %v881
    %1817 = vmatpush1.msra.mxu0 %v880
    %1818 = vmatprep.subr.mxu0 %v874
    %1819 = vmatpush1.msra.mxu0 %v873
    %1820 = vmatprep.subr.mxu0 %v867
    %1821 = vmatpush1.msra.mxu0 %v866
    %1822 = vmatprep.subr.mxu0 %v860
    %1823 = vmatpush1.msra.mxu0 %v859
    %1824 = vmatprep.subr.mxu0 %v853
    %1825 = vmatpush1.msra.mxu0 %v852
    %1826 = vmatprep.subr.mxu0 %v846
    %1827 = vmatpush1.msra.mxu0 %v845
    %1828 = vmatprep.subr.mxu0 %v839
    %1829 = vmatpush1.msra.mxu0 %v838
    %1830 = vmatprep.subr.mxu0 %v832
    %1831 = vmatpush1.msra.mxu0 %v831
    %1832 = vmatprep.subr.mxu0 %v825
    %1833 = vmatpush1.msra.mxu0 %v824
    %1834 = vmatprep.subr.mxu0 %v818
    %1835 = vmatpush1.msra.mxu0 %v817
    %1836 = vmatprep.subr.mxu0 %v811
    %1837 = vmatpush1.msra.mxu0 %v810
    %1838 = vmatprep.subr.mxu0 %v804
    %1839 = vmatpush1.msra.mxu0 %v803
    %1840 = vmatprep.subr.mxu0 %v797
    %1841 = vmatpush1.msra.mxu0 %v796
    %1842 = vmatprep.subr.mxu0 %v790
    %1843 = vmatpush1.msra.mxu0 %v789
    %1844 = vmatprep.subr.mxu0 %v783
    %1845 = vmatpush1.msra.mxu0 %v782
    %1846 = vmatprep.subr.mxu0 %v776
    %1847 = vmatpush1.msra.mxu0 %v775
    %1848 = vmatprep.subr.mxu0 %v993
    %1849 = vmatpush2.msra.mxu0 %v992
    %1850 = vmatprep.subr.mxu0 %v986
    %1851 = vmatpush2.msra.mxu0 %v985
    %1852 = vmatprep.subr.mxu0 %v979
    %1853 = vmatpush2.msra.mxu0 %v978
    %1854 = vmatprep.subr.mxu0 %v972
    %1855 = vmatpush2.msra.mxu0 %v971
    %1856 = vmatprep.subr.mxu0 %v965
    %1857 = vmatpush2.msra.mxu0 %v964
    %1858 = vmatprep.subr.mxu0 %v958
    %1859 = vmatpush2.msra.mxu0 %v957
    %1860 = vmatprep.subr.mxu0 %v951
    %1861 = vmatpush2.msra.mxu0 %v950
    %1862 = vmatprep.subr.mxu0 %v944
    %1863 = vmatpush2.msra.mxu0 %v943
    %1864 = vmatprep.subr.mxu0 %v937
    %1865 = vmatpush2.msra.mxu0 %v936
    %1866 = vmatprep.subr.mxu0 %v930
    %1867 = vmatpush2.msra.mxu0 %v929
    %1868 = vmatprep.subr.mxu0 %v923
    %1869 = vmatpush2.msra.mxu0 %v922
    %1870 = vmatprep.subr.mxu0 %v916
    %1871 = vmatpush2.msra.mxu0 %v915
    %1872 = vmatprep.subr.mxu0 %v909
    %1873 = vmatpush2.msra.mxu0 %v908
    %1874 = vmatprep.subr.mxu0 %v902
    %1875 = vmatpush2.msra.mxu0 %v901
    %1876 = vmatprep.subr.mxu0 %v895
    %1877 = vmatpush2.msra.mxu0 %v894
    %1878 = vmatprep.subr.mxu0 %v888
    %1879 = vmatpush2.msra.mxu0 %v887
    %1880 = vmatprep.mubr.f32.mxu0 %v1488
    %1881 = vmatmul.mubr.f32.gmra.mxu0 %v1487
    %v1882 = vpop.f32.mrf.mxu0
    %v1883 = vadd.f32 0.0, %v1882
    %v1884 = vpop.f32.mrf.mxu0
    %v1885 = vadd.f32 0.0, %v1884
    %1886 = vmatprep.mubr.f32.mxu0 %v1495
    %1887 = vmatmul.mubr.f32.gmra.mxu0 %v1494
    %v1888 = vpop.f32.mrf.mxu0
    %v1889 = vadd.f32 0.0, %v1888
    %v1890 = vpop.f32.mrf.mxu0
    %v1891 = vadd.f32 0.0, %v1890
    %1892 = vdwg.mxu0
    %1893 = vmatprep.subr.mxu0 %v1105
    %1894 = vmatpush1.msra.mxu0 %v1104
    %1895 = vmatprep.subr.mxu0 %v1098
    %1896 = vmatpush1.msra.mxu0 %v1097
    %1897 = vmatprep.subr.mxu0 %v1091
    %1898 = vmatpush1.msra.mxu0 %v1090
    %1899 = vmatprep.subr.mxu0 %v1084
    %1900 = vmatpush1.msra.mxu0 %v1083
    %1901 = vmatprep.subr.mxu0 %v1077
    %1902 = vmatpush1.msra.mxu0 %v1076
    %1903 = vmatprep.subr.mxu0 %v1070
    %1904 = vmatpush1.msra.mxu0 %v1069
    %1905 = vmatprep.subr.mxu0 %v1063
    %1906 = vmatpush1.msra.mxu0 %v1062
    %1907 = vmatprep.subr.mxu0 %v1056
    %1908 = vmatpush1.msra.mxu0 %v1055
    %1909 = vmatprep.subr.mxu0 %v1049
    %1910 = vmatpush1.msra.mxu0 %v1048
    %1911 = vmatprep.subr.mxu0 %v1042
    %1912 = vmatpush1.msra.mxu0 %v1041
    %1913 = vmatprep.subr.mxu0 %v1035
    %1914 = vmatpush1.msra.mxu0 %v1034
    %1915 = vmatprep.subr.mxu0 %v1028
    %1916 = vmatpush1.msra.mxu0 %v1027
    %1917 = vmatprep.subr.mxu0 %v1021
    %1918 = vmatpush1.msra.mxu0 %v1020
    %1919 = vmatprep.subr.mxu0 %v1014
    %1920 = vmatpush1.msra.mxu0 %v1013
    %1921 = vmatprep.subr.mxu0 %v1007
    %1922 = vmatpush1.msra.mxu0 %v1006
    %1923 = vmatprep.subr.mxu0 %v1000
    %1924 = vmatpush1.msra.mxu0 %v999
    %1925 = vmatprep.subr.mxu0 %v1217
    %1926 = vmatpush2.msra.mxu0 %v1216
    %1927 = vmatprep.subr.mxu0 %v1210
    %1928 = vmatpush2.msra.mxu0 %v1209
    %1929 = vmatprep.subr.mxu0 %v1203
    %1930 = vmatpush2.msra.mxu0 %v1202
    %1931 = vmatprep.subr.mxu0 %v1196
    %1932 = vmatpush2.msra.mxu0 %v1195
    %1933 = vmatprep.subr.mxu0 %v1189
    %1934 = vmatpush2.msra.mxu0 %v1188
    %1935 = vmatprep.subr.mxu0 %v1182
    %1936 = vmatpush2.msra.mxu0 %v1181
    %1937 = vmatprep.subr.mxu0 %v1175
    %1938 = vmatpush2.msra.mxu0 %v1174
    %1939 = vmatprep.subr.mxu0 %v1168
    %1940 = vmatpush2.msra.mxu0 %v1167
    %1941 = vmatprep.subr.mxu0 %v1161
    %1942 = vmatpush2.msra.mxu0 %v1160
    %1943 = vmatprep.subr.mxu0 %v1154
    %1944 = vmatpush2.msra.mxu0 %v1153
    %1945 = vmatprep.subr.mxu0 %v1147
    %1946 = vmatpush2.msra.mxu0 %v1146
    %1947 = vmatprep.subr.mxu0 %v1140
    %1948 = vmatpush2.msra.mxu0 %v1139
    %1949 = vmatprep.subr.mxu0 %v1133
    %1950 = vmatpush2.msra.mxu0 %v1132
    %1951 = vmatprep.subr.mxu0 %v1126
    %1952 = vmatpush2.msra.mxu0 %v1125
    %1953 = vmatprep.subr.mxu0 %v1119
    %1954 = vmatpush2.msra.mxu0 %v1118
    %1955 = vmatprep.subr.mxu0 %v1112
    %1956 = vmatpush2.msra.mxu0 %v1111
    %1957 = vmatprep.mubr.f32.mxu0 %v1490
    %1958 = vmatmul.mubr.f32.gmra.mxu0 %v1489
    %v1959 = vpop.f32.mrf.mxu0
    %v1960 = vadd.f32 %v1883, %v1959
    %v1961 = vpop.f32.mrf.mxu0
    %v1962 = vadd.f32 %v1885, %v1961
    %1963 = vmatprep.mubr.f32.mxu0 %v1497
    %1964 = vmatmul.mubr.f32.gmra.mxu0 %v1496
    %v1965 = vpop.f32.mrf.mxu0
    %v1966 = vadd.f32 %v1889, %v1965
    %v1967 = vpop.f32.mrf.mxu0
    %v1968 = vadd.f32 %v1891, %v1967
    %1969 = vdwg.mxu0
    %1970 = vmatprep.subr.mxu0 %v1329
    %1971 = vmatpush1.msra.mxu0 %v1328
    %1972 = vmatprep.subr.mxu0 %v1322
    %1973 = vmatpush1.msra.mxu0 %v1321
    %1974 = vmatprep.subr.mxu0 %v1315
    %1975 = vmatpush1.msra.mxu0 %v1314
    %1976 = vmatprep.subr.mxu0 %v1308
    %1977 = vmatpush1.msra.mxu0 %v1307
    %1978 = vmatprep.subr.mxu0 %v1301
    %1979 = vmatpush1.msra.mxu0 %v1300
    %1980 = vmatprep.subr.mxu0 %v1294
    %1981 = vmatpush1.msra.mxu0 %v1293
    %1982 = vmatprep.subr.mxu0 %v1287
    %1983 = vmatpush1.msra.mxu0 %v1286
    %1984 = vmatprep.subr.mxu0 %v1280
    %1985 = vmatpush1.msra.mxu0 %v1279
    %1986 = vmatprep.subr.mxu0 %v1273
    %1987 = vmatpush1.msra.mxu0 %v1272
    %1988 = vmatprep.subr.mxu0 %v1266
    %1989 = vmatpush1.msra.mxu0 %v1265
    %1990 = vmatprep.subr.mxu0 %v1259
    %1991 = vmatpush1.msra.mxu0 %v1258
    %1992 = vmatprep.subr.mxu0 %v1252
    %1993 = vmatpush1.msra.mxu0 %v1251
    %1994 = vmatprep.subr.mxu0 %v1245
    %1995 = vmatpush1.msra.mxu0 %v1244
    %1996 = vmatprep.subr.mxu0 %v1238
    %1997 = vmatpush1.msra.mxu0 %v1237
    %1998 = vmatprep.subr.mxu0 %v1231
    %1999 = vmatpush1.msra.mxu0 %v1230
    %2000 = vmatprep.subr.mxu0 %v1224
    %2001 = vmatpush1.msra.mxu0 %v1223
    %2002 = vmatprep.subr.mxu0 %v1441
    %2003 = vmatpush2.msra.mxu0 %v1440
    %2004 = vmatprep.subr.mxu0 %v1434
    %2005 = vmatpush2.msra.mxu0 %v1433
    %2006 = vmatprep.subr.mxu0 %v1427
    %2007 = vmatpush2.msra.mxu0 %v1426
    %2008 = vmatprep.subr.mxu0 %v1420
    %2009 = vmatpush2.msra.mxu0 %v1419
    %2010 = vmatprep.subr.mxu0 %v1413
    %2011 = vmatpush2.msra.mxu0 %v1412
    %2012 = vmatprep.subr.mxu0 %v1406
    %2013 = vmatpush2.msra.mxu0 %v1405
    %2014 = vmatprep.subr.mxu0 %v1399
    %2015 = vmatpush2.msra.mxu0 %v1398
    %2016 = vmatprep.subr.mxu0 %v1392
    %2017 = vmatpush2.msra.mxu0 %v1391
    %2018 = vmatprep.subr.mxu0 %v1385
    %2019 = vmatpush2.msra.mxu0 %v1384
    %2020 = vmatprep.subr.mxu0 %v1378
    %2021 = vmatpush2.msra.mxu0 %v1377
    %2022 = vmatprep.subr.mxu0 %v1371
    %2023 = vmatpush2.msra.mxu0 %v1370
    %2024 = vmatprep.subr.mxu0 %v1364
    %2025 = vmatpush2.msra.mxu0 %v1363
    %2026 = vmatprep.subr.mxu0 %v1357
    %2027 = vmatpush2.msra.mxu0 %v1356
    %2028 = vmatprep.subr.mxu0 %v1350
    %2029 = vmatpush2.msra.mxu0 %v1349
    %2030 = vmatprep.subr.mxu0 %v1343
    %2031 = vmatpush2.msra.mxu0 %v1342
    %2032 = vmatprep.subr.mxu0 %v1336
    %2033 = vmatpush2.msra.mxu0 %v1335
    %2034 = vmatprep.mubr.f32.mxu0 %v1492
    %2035 = vmatmul.mubr.f32.gmra.mxu0 %v1491
    %v2036 = vpop.f32.mrf.mxu0
    %v2037 = vadd.f32 %v1960, %v2036
    %v2038 = vpop.f32.mrf.mxu0
    %v2039 = vadd.f32 %v1962, %v2038
    %2040 = vmatprep.mubr.f32.mxu0 %v1499
    %2041 = vmatmul.mubr.f32.gmra.mxu0 %v1498
    %v2042 = vpop.f32.mrf.mxu0
    %v2043 = vadd.f32 %v1966, %v2042
    %v2044 = vpop.f32.mrf.mxu0
    %v2045 = vadd.f32 %v1968, %v2044
    %2046 = vdwg.mxu0
    %2047 = vmatprep.subr.mxu0 0.0
    %2048 = vmatpush1.msra.mxu0 0.0
    %2049 = vmatprep.subr.mxu0 0.0
    %2050 = vmatpush1.msra.mxu0 0.0
    %2051 = vmatprep.subr.mxu0 0.0
    %2052 = vmatpush1.msra.mxu0 0.0
    %2053 = vmatprep.subr.mxu0 0.0
    %2054 = vmatpush1.msra.mxu0 0.0
    %2055 = vmatprep.subr.mxu0 0.0
    %2056 = vmatpush1.msra.mxu0 0.0
    %2057 = vmatprep.subr.mxu0 0.0
    %2058 = vmatpush1.msra.mxu0 0.0
    %2059 = vmatprep.subr.mxu0 0.0
    %2060 = vmatpush1.msra.mxu0 0.0
    %2061 = vmatprep.subr.mxu0 0.0
    %2062 = vmatpush1.msra.mxu0 0.0
    %2063 = vmatprep.subr.mxu0 0.0
    %2064 = vmatpush1.msra.mxu0 0.0
    %2065 = vmatprep.subr.mxu0 0.0
    %2066 = vmatpush1.msra.mxu0 0.0
    %2067 = vmatprep.subr.mxu0 0.0
    %2068 = vmatpush1.msra.mxu0 0.0
    %2069 = vmatprep.subr.mxu0 0.0
    %2070 = vmatpush1.msra.mxu0 0.0
    %2071 = vmatprep.subr.mxu0 %v1469
    %2072 = vmatpush1.msra.mxu0 %v1468
    %2073 = vmatprep.subr.mxu0 %v1462
    %2074 = vmatpush1.msra.mxu0 %v1461
    %2075 = vmatprep.subr.mxu0 %v1455
    %2076 = vmatpush1.msra.mxu0 %v1454
    %2077 = vmatprep.subr.mxu0 %v1448
    %2078 = vmatpush1.msra.mxu0 %v1447
    %2079 = vmatprep.subr.mxu0 0.0
    %2080 = vmatpush2.msra.mxu0 0.0
    %2081 = vmatprep.subr.mxu0 0.0
    %2082 = vmatpush2.msra.mxu0 0.0
    %2083 = vmatprep.subr.mxu0 0.0
    %2084 = vmatpush2.msra.mxu0 0.0
    %2085 = vmatprep.subr.mxu0 0.0
    %2086 = vmatpush2.msra.mxu0 0.0
    %2087 = vmatprep.subr.mxu0 0.0
    %2088 = vmatpush2.msra.mxu0 0.0
    %2089 = vmatprep.subr.mxu0 0.0
    %2090 = vmatpush2.msra.mxu0 0.0
    %2091 = vmatprep.subr.mxu0 0.0
    %2092 = vmatpush2.msra.mxu0 0.0
    %2093 = vmatprep.subr.mxu0 0.0
    %2094 = vmatpush2.msra.mxu0 0.0
    %2095 = vmatprep.subr.mxu0 0.0
    %2096 = vmatpush2.msra.mxu0 0.0
    %2097 = vmatprep.subr.mxu0 0.0
    %2098 = vmatpush2.msra.mxu0 0.0
    %2099 = vmatprep.subr.mxu0 0.0
    %2100 = vmatpush2.msra.mxu0 0.0
    %2101 = vmatprep.subr.mxu0 0.0
    %2102 = vmatpush2.msra.mxu0 0.0
    %2103 = vmatprep.subr.mxu0 0.0
    %2104 = vmatpush2.msra.mxu0 0.0
    %2105 = vmatprep.subr.mxu0 0.0
    %2106 = vmatpush2.msra.mxu0 0.0
    %2107 = vmatprep.subr.mxu0 0.0
    %2108 = vmatpush2.msra.mxu0 0.0
    %2109 = vmatprep.subr.mxu0 0.0
    %2110 = vmatpush2.msra.mxu0 0.0
    %2111 = vmatprep.mubr.f32.mxu0 0.0
    %2112 = vmatmul.mubr.f32.gmra.mxu0 %v1503
    %v2113 = vpop.f32.mrf.mxu0
    %v2114 = vadd.f32 %v2037, %v2113
    %v2115 = vpop.f32.mrf.mxu0
    %v2116 = vadd.f32 %v2039, %v2115
    %2117 = vmatprep.mubr.f32.mxu0 0.0
    %2118 = vmatmul.mubr.f32.gmra.mxu0 %v1506
    %v2119 = vpop.f32.mrf.mxu0
    %v2120 = vadd.f32 %v2043, %v2119
    %v2121 = vpop.f32.mrf.mxu0
    %v2122 = vadd.f32 %v2045, %v2121
    %2123 = vdwg.mxu0
    %2124 = vmatprep.subr.mxu0 %v883
    %2125 = vmatpush1.msra.mxu0 %v882
    %2126 = vmatprep.subr.mxu0 %v876
    %2127 = vmatpush1.msra.mxu0 %v875
    %2128 = vmatprep.subr.mxu0 %v869
    %2129 = vmatpush1.msra.mxu0 %v868
    %2130 = vmatprep.subr.mxu0 %v862
    %2131 = vmatpush1.msra.mxu0 %v861
    %2132 = vmatprep.subr.mxu0 %v855
    %2133 = vmatpush1.msra.mxu0 %v854
    %2134 = vmatprep.subr.mxu0 %v848
    %2135 = vmatpush1.msra.mxu0 %v847
    %2136 = vmatprep.subr.mxu0 %v841
    %2137 = vmatpush1.msra.mxu0 %v840
    %2138 = vmatprep.subr.mxu0 %v834
    %2139 = vmatpush1.msra.mxu0 %v833
    %2140 = vmatprep.subr.mxu0 %v827
    %2141 = vmatpush1.msra.mxu0 %v826
    %2142 = vmatprep.subr.mxu0 %v820
    %2143 = vmatpush1.msra.mxu0 %v819
    %2144 = vmatprep.subr.mxu0 %v813
    %2145 = vmatpush1.msra.mxu0 %v812
    %2146 = vmatprep.subr.mxu0 %v806
    %2147 = vmatpush1.msra.mxu0 %v805
    %2148 = vmatprep.subr.mxu0 %v799
    %2149 = vmatpush1.msra.mxu0 %v798
    %2150 = vmatprep.subr.mxu0 %v792
    %2151 = vmatpush1.msra.mxu0 %v791
    %2152 = vmatprep.subr.mxu0 %v785
    %2153 = vmatpush1.msra.mxu0 %v784
    %2154 = vmatprep.subr.mxu0 %v778
    %2155 = vmatpush1.msra.mxu0 %v777
    %2156 = vmatprep.subr.mxu0 %v995
    %2157 = vmatpush2.msra.mxu0 %v994
    %2158 = vmatprep.subr.mxu0 %v988
    %2159 = vmatpush2.msra.mxu0 %v987
    %2160 = vmatprep.subr.mxu0 %v981
    %2161 = vmatpush2.msra.mxu0 %v980
    %2162 = vmatprep.subr.mxu0 %v974
    %2163 = vmatpush2.msra.mxu0 %v973
    %2164 = vmatprep.subr.mxu0 %v967
    %2165 = vmatpush2.msra.mxu0 %v966
    %2166 = vmatprep.subr.mxu0 %v960
    %2167 = vmatpush2.msra.mxu0 %v959
    %2168 = vmatprep.subr.mxu0 %v953
    %2169 = vmatpush2.msra.mxu0 %v952
    %2170 = vmatprep.subr.mxu0 %v946
    %2171 = vmatpush2.msra.mxu0 %v945
    %2172 = vmatprep.subr.mxu0 %v939
    %2173 = vmatpush2.msra.mxu0 %v938
    %2174 = vmatprep.subr.mxu0 %v932
    %2175 = vmatpush2.msra.mxu0 %v931
    %2176 = vmatprep.subr.mxu0 %v925
    %2177 = vmatpush2.msra.mxu0 %v924
    %2178 = vmatprep.subr.mxu0 %v918
    %2179 = vmatpush2.msra.mxu0 %v917
    %2180 = vmatprep.subr.mxu0 %v911
    %2181 = vmatpush2.msra.mxu0 %v910
    %2182 = vmatprep.subr.mxu0 %v904
    %2183 = vmatpush2.msra.mxu0 %v903
    %2184 = vmatprep.subr.mxu0 %v897
    %2185 = vmatpush2.msra.mxu0 %v896
    %2186 = vmatprep.subr.mxu0 %v890
    %2187 = vmatpush2.msra.mxu0 %v889
    %2188 = vmatprep.mubr.f32.mxu0 %v1488
    %2189 = vmatmul.mubr.f32.gmra.mxu0 %v1487
    %v2190 = vpop.f32.mrf.mxu0
    %v2191 = vadd.f32 0.0, %v2190
    %v2192 = vpop.f32.mrf.mxu0
    %v2193 = vadd.f32 0.0, %v2192
    %2194 = vmatprep.mubr.f32.mxu0 %v1495
    %2195 = vmatmul.mubr.f32.gmra.mxu0 %v1494
    %v2196 = vpop.f32.mrf.mxu0
    %v2197 = vadd.f32 0.0, %v2196
    %v2198 = vpop.f32.mrf.mxu0
    %v2199 = vadd.f32 0.0, %v2198
    %2200 = vdwg.mxu0
    %2201 = vmatprep.subr.mxu0 %v1107
    %2202 = vmatpush1.msra.mxu0 %v1106
    %2203 = vmatprep.subr.mxu0 %v1100
    %2204 = vmatpush1.msra.mxu0 %v1099
    %2205 = vmatprep.subr.mxu0 %v1093
    %2206 = vmatpush1.msra.mxu0 %v1092
    %2207 = vmatprep.subr.mxu0 %v1086
    %2208 = vmatpush1.msra.mxu0 %v1085
    %2209 = vmatprep.subr.mxu0 %v1079
    %2210 = vmatpush1.msra.mxu0 %v1078
    %2211 = vmatprep.subr.mxu0 %v1072
    %2212 = vmatpush1.msra.mxu0 %v1071
    %2213 = vmatprep.subr.mxu0 %v1065
    %2214 = vmatpush1.msra.mxu0 %v1064
    %2215 = vmatprep.subr.mxu0 %v1058
    %2216 = vmatpush1.msra.mxu0 %v1057
    %2217 = vmatprep.subr.mxu0 %v1051
    %2218 = vmatpush1.msra.mxu0 %v1050
    %2219 = vmatprep.subr.mxu0 %v1044
    %2220 = vmatpush1.msra.mxu0 %v1043
    %2221 = vmatprep.subr.mxu0 %v1037
    %2222 = vmatpush1.msra.mxu0 %v1036
    %2223 = vmatprep.subr.mxu0 %v1030
    %2224 = vmatpush1.msra.mxu0 %v1029
    %2225 = vmatprep.subr.mxu0 %v1023
    %2226 = vmatpush1.msra.mxu0 %v1022
    %2227 = vmatprep.subr.mxu0 %v1016
    %2228 = vmatpush1.msra.mxu0 %v1015
    %2229 = vmatprep.subr.mxu0 %v1009
    %2230 = vmatpush1.msra.mxu0 %v1008
    %2231 = vmatprep.subr.mxu0 %v1002
    %2232 = vmatpush1.msra.mxu0 %v1001
    %2233 = vmatprep.subr.mxu0 %v1219
    %2234 = vmatpush2.msra.mxu0 %v1218
    %2235 = vmatprep.subr.mxu0 %v1212
    %2236 = vmatpush2.msra.mxu0 %v1211
    %2237 = vmatprep.subr.mxu0 %v1205
    %2238 = vmatpush2.msra.mxu0 %v1204
    %2239 = vmatprep.subr.mxu0 %v1198
    %2240 = vmatpush2.msra.mxu0 %v1197
    %2241 = vmatprep.subr.mxu0 %v1191
    %2242 = vmatpush2.msra.mxu0 %v1190
    %2243 = vmatprep.subr.mxu0 %v1184
    %2244 = vmatpush2.msra.mxu0 %v1183
    %2245 = vmatprep.subr.mxu0 %v1177
    %2246 = vmatpush2.msra.mxu0 %v1176
    %2247 = vmatprep.subr.mxu0 %v1170
    %2248 = vmatpush2.msra.mxu0 %v1169
    %2249 = vmatprep.subr.mxu0 %v1163
    %2250 = vmatpush2.msra.mxu0 %v1162
    %2251 = vmatprep.subr.mxu0 %v1156
    %2252 = vmatpush2.msra.mxu0 %v1155
    %2253 = vmatprep.subr.mxu0 %v1149
    %2254 = vmatpush2.msra.mxu0 %v1148
    %2255 = vmatprep.subr.mxu0 %v1142
    %2256 = vmatpush2.msra.mxu0 %v1141
    %2257 = vmatprep.subr.mxu0 %v1135
    %2258 = vmatpush2.msra.mxu0 %v1134
    %2259 = vmatprep.subr.mxu0 %v1128
    %2260 = vmatpush2.msra.mxu0 %v1127
    %2261 = vmatprep.subr.mxu0 %v1121
    %2262 = vmatpush2.msra.mxu0 %v1120
    %2263 = vmatprep.subr.mxu0 %v1114
    %2264 = vmatpush2.msra.mxu0 %v1113
    %2265 = vmatprep.mubr.f32.mxu0 %v1490
    %2266 = vmatmul.mubr.f32.gmra.mxu0 %v1489
    %v2267 = vpop.f32.mrf.mxu0
    %v2268 = vadd.f32 %v2191, %v2267
    %v2269 = vpop.f32.mrf.mxu0
    %v2270 = vadd.f32 %v2193, %v2269
    %2271 = vmatprep.mubr.f32.mxu0 %v1497
    %2272 = vmatmul.mubr.f32.gmra.mxu0 %v1496
    %v2273 = vpop.f32.mrf.mxu0
    %v2274 = vadd.f32 %v2197, %v2273
    %v2275 = vpop.f32.mrf.mxu0
    %v2276 = vadd.f32 %v2199, %v2275
    %2277 = vdwg.mxu0
    %2278 = vmatprep.subr.mxu0 %v1331
    %2279 = vmatpush1.msra.mxu0 %v1330
    %2280 = vmatprep.subr.mxu0 %v1324
    %2281 = vmatpush1.msra.mxu0 %v1323
    %2282 = vmatprep.subr.mxu0 %v1317
    %2283 = vmatpush1.msra.mxu0 %v1316
    %2284 = vmatprep.subr.mxu0 %v1310
    %2285 = vmatpush1.msra.mxu0 %v1309
    %2286 = vmatprep.subr.mxu0 %v1303
    %2287 = vmatpush1.msra.mxu0 %v1302
    %2288 = vmatprep.subr.mxu0 %v1296
    %2289 = vmatpush1.msra.mxu0 %v1295
    %2290 = vmatprep.subr.mxu0 %v1289
    %2291 = vmatpush1.msra.mxu0 %v1288
    %2292 = vmatprep.subr.mxu0 %v1282
    %2293 = vmatpush1.msra.mxu0 %v1281
    %2294 = vmatprep.subr.mxu0 %v1275
    %2295 = vmatpush1.msra.mxu0 %v1274
    %2296 = vmatprep.subr.mxu0 %v1268
    %2297 = vmatpush1.msra.mxu0 %v1267
    %2298 = vmatprep.subr.mxu0 %v1261
    %2299 = vmatpush1.msra.mxu0 %v1260
    %2300 = vmatprep.subr.mxu0 %v1254
    %2301 = vmatpush1.msra.mxu0 %v1253
    %2302 = vmatprep.subr.mxu0 %v1247
    %2303 = vmatpush1.msra.mxu0 %v1246
    %2304 = vmatprep.subr.mxu0 %v1240
    %2305 = vmatpush1.msra.mxu0 %v1239
    %2306 = vmatprep.subr.mxu0 %v1233
    %2307 = vmatpush1.msra.mxu0 %v1232
    %2308 = vmatprep.subr.mxu0 %v1226
    %2309 = vmatpush1.msra.mxu0 %v1225
    %2310 = vmatprep.subr.mxu0 %v1443
    %2311 = vmatpush2.msra.mxu0 %v1442
    %2312 = vmatprep.subr.mxu0 %v1436
    %2313 = vmatpush2.msra.mxu0 %v1435
    %2314 = vmatprep.subr.mxu0 %v1429
    %2315 = vmatpush2.msra.mxu0 %v1428
    %2316 = vmatprep.subr.mxu0 %v1422
    %2317 = vmatpush2.msra.mxu0 %v1421
    %2318 = vmatprep.subr.mxu0 %v1415
    %2319 = vmatpush2.msra.mxu0 %v1414
    %2320 = vmatprep.subr.mxu0 %v1408
    %2321 = vmatpush2.msra.mxu0 %v1407
    %2322 = vmatprep.subr.mxu0 %v1401
    %2323 = vmatpush2.msra.mxu0 %v1400
    %2324 = vmatprep.subr.mxu0 %v1394
    %2325 = vmatpush2.msra.mxu0 %v1393
    %2326 = vmatprep.subr.mxu0 %v1387
    %2327 = vmatpush2.msra.mxu0 %v1386
    %2328 = vmatprep.subr.mxu0 %v1380
    %2329 = vmatpush2.msra.mxu0 %v1379
    %2330 = vmatprep.subr.mxu0 %v1373
    %2331 = vmatpush2.msra.mxu0 %v1372
    %2332 = vmatprep.subr.mxu0 %v1366
    %2333 = vmatpush2.msra.mxu0 %v1365
    %2334 = vmatprep.subr.mxu0 %v1359
    %2335 = vmatpush2.msra.mxu0 %v1358
    %2336 = vmatprep.subr.mxu0 %v1352
    %2337 = vmatpush2.msra.mxu0 %v1351
    %2338 = vmatprep.subr.mxu0 %v1345
    %2339 = vmatpush2.msra.mxu0 %v1344
    %2340 = vmatprep.subr.mxu0 %v1338
    %2341 = vmatpush2.msra.mxu0 %v1337
    %2342 = vmatprep.mubr.f32.mxu0 %v1492
    %2343 = vmatmul.mubr.f32.gmra.mxu0 %v1491
    %v2344 = vpop.f32.mrf.mxu0
    %v2345 = vadd.f32 %v2268, %v2344
    %v2346 = vpop.f32.mrf.mxu0
    %v2347 = vadd.f32 %v2270, %v2346
    %2348 = vmatprep.mubr.f32.mxu0 %v1499
    %2349 = vmatmul.mubr.f32.gmra.mxu0 %v1498
    %v2350 = vpop.f32.mrf.mxu0
    %v2351 = vadd.f32 %v2274, %v2350
    %v2352 = vpop.f32.mrf.mxu0
    %v2353 = vadd.f32 %v2276, %v2352
    %2354 = vdwg.mxu0
    %2355 = vmatprep.subr.mxu0 0.0
    %2356 = vmatpush1.msra.mxu0 0.0
    %2357 = vmatprep.subr.mxu0 0.0
    %2358 = vmatpush1.msra.mxu0 0.0
    %2359 = vmatprep.subr.mxu0 0.0
    %2360 = vmatpush1.msra.mxu0 0.0
    %2361 = vmatprep.subr.mxu0 0.0
    %2362 = vmatpush1.msra.mxu0 0.0
    %2363 = vmatprep.subr.mxu0 0.0
    %2364 = vmatpush1.msra.mxu0 0.0
    %2365 = vmatprep.subr.mxu0 0.0
    %2366 = vmatpush1.msra.mxu0 0.0
    %2367 = vmatprep.subr.mxu0 0.0
    %2368 = vmatpush1.msra.mxu0 0.0
    %2369 = vmatprep.subr.mxu0 0.0
    %2370 = vmatpush1.msra.mxu0 0.0
    %2371 = vmatprep.subr.mxu0 0.0
    %2372 = vmatpush1.msra.mxu0 0.0
    %2373 = vmatprep.subr.mxu0 0.0
    %2374 = vmatpush1.msra.mxu0 0.0
    %2375 = vmatprep.subr.mxu0 0.0
    %2376 = vmatpush1.msra.mxu0 0.0
    %2377 = vmatprep.subr.mxu0 0.0
    %2378 = vmatpush1.msra.mxu0 0.0
    %2379 = vmatprep.subr.mxu0 %v1471
    %2380 = vmatpush1.msra.mxu0 %v1470
    %2381 = vmatprep.subr.mxu0 %v1464
    %2382 = vmatpush1.msra.mxu0 %v1463
    %2383 = vmatprep.subr.mxu0 %v1457
    %2384 = vmatpush1.msra.mxu0 %v1456
    %2385 = vmatprep.subr.mxu0 %v1450
    %2386 = vmatpush1.msra.mxu0 %v1449
    %2387 = vmatprep.subr.mxu0 0.0
    %2388 = vmatpush2.msra.mxu0 0.0
    %2389 = vmatprep.subr.mxu0 0.0
    %2390 = vmatpush2.msra.mxu0 0.0
    %2391 = vmatprep.subr.mxu0 0.0
    %2392 = vmatpush2.msra.mxu0 0.0
    %2393 = vmatprep.subr.mxu0 0.0
    %2394 = vmatpush2.msra.mxu0 0.0
    %2395 = vmatprep.subr.mxu0 0.0
    %2396 = vmatpush2.msra.mxu0 0.0
    %2397 = vmatprep.subr.mxu0 0.0
    %2398 = vmatpush2.msra.mxu0 0.0
    %2399 = vmatprep.subr.mxu0 0.0
    %2400 = vmatpush2.msra.mxu0 0.0
    %2401 = vmatprep.subr.mxu0 0.0
    %2402 = vmatpush2.msra.mxu0 0.0
    %2403 = vmatprep.subr.mxu0 0.0
    %2404 = vmatpush2.msra.mxu0 0.0
    %2405 = vmatprep.subr.mxu0 0.0
    %2406 = vmatpush2.msra.mxu0 0.0
    %2407 = vmatprep.subr.mxu0 0.0
    %2408 = vmatpush2.msra.mxu0 0.0
    %2409 = vmatprep.subr.mxu0 0.0
    %2410 = vmatpush2.msra.mxu0 0.0
    %2411 = vmatprep.subr.mxu0 0.0
    %2412 = vmatpush2.msra.mxu0 0.0
    %2413 = vmatprep.subr.mxu0 0.0
    %2414 = vmatpush2.msra.mxu0 0.0
    %2415 = vmatprep.subr.mxu0 0.0
    %2416 = vmatpush2.msra.mxu0 0.0
    %2417 = vmatprep.subr.mxu0 0.0
    %2418 = vmatpush2.msra.mxu0 0.0
    %2419 = vmatprep.mubr.f32.mxu0 0.0
    %2420 = vmatmul.mubr.f32.gmra.mxu0 %v1503
    %v2421 = vpop.f32.mrf.mxu0
    %v2422 = vadd.f32 %v2345, %v2421
    %v2423 = vpop.f32.mrf.mxu0
    %v2424 = vadd.f32 %v2347, %v2423
    %2425 = vmatprep.mubr.f32.mxu0 0.0
    %2426 = vmatmul.mubr.f32.gmra.mxu0 %v1506
    %v2427 = vpop.f32.mrf.mxu0
    %v2428 = vadd.f32 %v2351, %v2427
    %v2429 = vpop.f32.mrf.mxu0
    %v2430 = vadd.f32 %v2353, %v2429
    %2431 = vdwg.mxu0
    %2432 = vmatprep.subr.mxu0 0.0
    %2433 = vmatpush1.msra.mxu0 %v884
    %2434 = vmatprep.subr.mxu0 0.0
    %2435 = vmatpush1.msra.mxu0 %v877
    %2436 = vmatprep.subr.mxu0 0.0
    %2437 = vmatpush1.msra.mxu0 %v870
    %2438 = vmatprep.subr.mxu0 0.0
    %2439 = vmatpush1.msra.mxu0 %v863
    %2440 = vmatprep.subr.mxu0 0.0
    %2441 = vmatpush1.msra.mxu0 %v856
    %2442 = vmatprep.subr.mxu0 0.0
    %2443 = vmatpush1.msra.mxu0 %v849
    %2444 = vmatprep.subr.mxu0 0.0
    %2445 = vmatpush1.msra.mxu0 %v842
    %2446 = vmatprep.subr.mxu0 0.0
    %2447 = vmatpush1.msra.mxu0 %v835
    %2448 = vmatprep.subr.mxu0 0.0
    %2449 = vmatpush1.msra.mxu0 %v828
    %2450 = vmatprep.subr.mxu0 0.0
    %2451 = vmatpush1.msra.mxu0 %v821
    %2452 = vmatprep.subr.mxu0 0.0
    %2453 = vmatpush1.msra.mxu0 %v814
    %2454 = vmatprep.subr.mxu0 0.0
    %2455 = vmatpush1.msra.mxu0 %v807
    %2456 = vmatprep.subr.mxu0 0.0
    %2457 = vmatpush1.msra.mxu0 %v800
    %2458 = vmatprep.subr.mxu0 0.0
    %2459 = vmatpush1.msra.mxu0 %v793
    %2460 = vmatprep.subr.mxu0 0.0
    %2461 = vmatpush1.msra.mxu0 %v786
    %2462 = vmatprep.subr.mxu0 0.0
    %2463 = vmatpush1.msra.mxu0 %v779
    %2464 = vmatprep.subr.mxu0 0.0
    %2465 = vmatpush2.msra.mxu0 %v996
    %2466 = vmatprep.subr.mxu0 0.0
    %2467 = vmatpush2.msra.mxu0 %v989
    %2468 = vmatprep.subr.mxu0 0.0
    %2469 = vmatpush2.msra.mxu0 %v982
    %2470 = vmatprep.subr.mxu0 0.0
    %2471 = vmatpush2.msra.mxu0 %v975
    %2472 = vmatprep.subr.mxu0 0.0
    %2473 = vmatpush2.msra.mxu0 %v968
    %2474 = vmatprep.subr.mxu0 0.0
    %2475 = vmatpush2.msra.mxu0 %v961
    %2476 = vmatprep.subr.mxu0 0.0
    %2477 = vmatpush2.msra.mxu0 %v954
    %2478 = vmatprep.subr.mxu0 0.0
    %2479 = vmatpush2.msra.mxu0 %v947
    %2480 = vmatprep.subr.mxu0 0.0
    %2481 = vmatpush2.msra.mxu0 %v940
    %2482 = vmatprep.subr.mxu0 0.0
    %2483 = vmatpush2.msra.mxu0 %v933
    %2484 = vmatprep.subr.mxu0 0.0
    %2485 = vmatpush2.msra.mxu0 %v926
    %2486 = vmatprep.subr.mxu0 0.0
    %2487 = vmatpush2.msra.mxu0 %v919
    %2488 = vmatprep.subr.mxu0 0.0
    %2489 = vmatpush2.msra.mxu0 %v912
    %2490 = vmatprep.subr.mxu0 0.0
    %2491 = vmatpush2.msra.mxu0 %v905
    %2492 = vmatprep.subr.mxu0 0.0
    %2493 = vmatpush2.msra.mxu0 %v898
    %2494 = vmatprep.subr.mxu0 0.0
    %2495 = vmatpush2.msra.mxu0 %v891
    %2496 = vmatprep.mubr.f32.mxu0 %v1488
    %2497 = vmatmul.mubr.f32.gmra.mxu0 %v1487
    %v2498 = vpop.f32.mrf.mxu0
    %v2499 = vadd.f32 0.0, %v2498
    %v2500 = vpop.f32.mrf.mxu0
    %2501 = vmatprep.mubr.f32.mxu0 %v1495
    %2502 = vmatmul.mubr.f32.gmra.mxu0 %v1494
    %v2503 = vpop.f32.mrf.mxu0
    %v2504 = vadd.f32 0.0, %v2503
    %v2505 = vpop.f32.mrf.mxu0
    %2506 = vdwg.mxu0
    %2507 = vmatprep.subr.mxu0 0.0
    %2508 = vmatpush1.msra.mxu0 %v1108
    %2509 = vmatprep.subr.mxu0 0.0
    %2510 = vmatpush1.msra.mxu0 %v1101
    %2511 = vmatprep.subr.mxu0 0.0
    %2512 = vmatpush1.msra.mxu0 %v1094
    %2513 = vmatprep.subr.mxu0 0.0
    %2514 = vmatpush1.msra.mxu0 %v1087
    %2515 = vmatprep.subr.mxu0 0.0
    %2516 = vmatpush1.msra.mxu0 %v1080
    %2517 = vmatprep.subr.mxu0 0.0
    %2518 = vmatpush1.msra.mxu0 %v1073
    %2519 = vmatprep.subr.mxu0 0.0
    %2520 = vmatpush1.msra.mxu0 %v1066
    %2521 = vmatprep.subr.mxu0 0.0
    %2522 = vmatpush1.msra.mxu0 %v1059
    %2523 = vmatprep.subr.mxu0 0.0
    %2524 = vmatpush1.msra.mxu0 %v1052
    %2525 = vmatprep.subr.mxu0 0.0
    %2526 = vmatpush1.msra.mxu0 %v1045
    %2527 = vmatprep.subr.mxu0 0.0
    %2528 = vmatpush1.msra.mxu0 %v1038
    %2529 = vmatprep.subr.mxu0 0.0
    %2530 = vmatpush1.msra.mxu0 %v1031
    %2531 = vmatprep.subr.mxu0 0.0
    %2532 = vmatpush1.msra.mxu0 %v1024
    %2533 = vmatprep.subr.mxu0 0.0
    %2534 = vmatpush1.msra.mxu0 %v1017
    %2535 = vmatprep.subr.mxu0 0.0
    %2536 = vmatpush1.msra.mxu0 %v1010
    %2537 = vmatprep.subr.mxu0 0.0
    %2538 = vmatpush1.msra.mxu0 %v1003
    %2539 = vmatprep.subr.mxu0 0.0
    %2540 = vmatpush2.msra.mxu0 %v1220
    %2541 = vmatprep.subr.mxu0 0.0
    %2542 = vmatpush2.msra.mxu0 %v1213
    %2543 = vmatprep.subr.mxu0 0.0
    %2544 = vmatpush2.msra.mxu0 %v1206
    %2545 = vmatprep.subr.mxu0 0.0
    %2546 = vmatpush2.msra.mxu0 %v1199
    %2547 = vmatprep.subr.mxu0 0.0
    %2548 = vmatpush2.msra.mxu0 %v1192
    %2549 = vmatprep.subr.mxu0 0.0
    %2550 = vmatpush2.msra.mxu0 %v1185
    %2551 = vmatprep.subr.mxu0 0.0
    %2552 = vmatpush2.msra.mxu0 %v1178
    %2553 = vmatprep.subr.mxu0 0.0
    %2554 = vmatpush2.msra.mxu0 %v1171
    %2555 = vmatprep.subr.mxu0 0.0
    %2556 = vmatpush2.msra.mxu0 %v1164
    %2557 = vmatprep.subr.mxu0 0.0
    %2558 = vmatpush2.msra.mxu0 %v1157
    %2559 = vmatprep.subr.mxu0 0.0
    %2560 = vmatpush2.msra.mxu0 %v1150
    %2561 = vmatprep.subr.mxu0 0.0
    %2562 = vmatpush2.msra.mxu0 %v1143
    %2563 = vmatprep.subr.mxu0 0.0
    %2564 = vmatpush2.msra.mxu0 %v1136
    %2565 = vmatprep.subr.mxu0 0.0
    %2566 = vmatpush2.msra.mxu0 %v1129
    %2567 = vmatprep.subr.mxu0 0.0
    %2568 = vmatpush2.msra.mxu0 %v1122
    %2569 = vmatprep.subr.mxu0 0.0
    %2570 = vmatpush2.msra.mxu0 %v1115
    %2571 = vmatprep.mubr.f32.mxu0 %v1490
    %2572 = vmatmul.mubr.f32.gmra.mxu0 %v1489
    %v2573 = vpop.f32.mrf.mxu0
    %v2574 = vadd.f32 %v2499, %v2573
    %v2575 = vpop.f32.mrf.mxu0
    %2576 = vmatprep.mubr.f32.mxu0 %v1497
    %2577 = vmatmul.mubr.f32.gmra.mxu0 %v1496
    %v2578 = vpop.f32.mrf.mxu0
    %v2579 = vadd.f32 %v2504, %v2578
    %v2580 = vpop.f32.mrf.mxu0
    %2581 = vdwg.mxu0
    %2582 = vmatprep.subr.mxu0 0.0
    %2583 = vmatpush1.msra.mxu0 %v1332
    %2584 = vmatprep.subr.mxu0 0.0
    %2585 = vmatpush1.msra.mxu0 %v1325
    %2586 = vmatprep.subr.mxu0 0.0
    %2587 = vmatpush1.msra.mxu0 %v1318
    %2588 = vmatprep.subr.mxu0 0.0
    %2589 = vmatpush1.msra.mxu0 %v1311
    %2590 = vmatprep.subr.mxu0 0.0
    %2591 = vmatpush1.msra.mxu0 %v1304
    %2592 = vmatprep.subr.mxu0 0.0
    %2593 = vmatpush1.msra.mxu0 %v1297
    %2594 = vmatprep.subr.mxu0 0.0
    %2595 = vmatpush1.msra.mxu0 %v1290
    %2596 = vmatprep.subr.mxu0 0.0
    %2597 = vmatpush1.msra.mxu0 %v1283
    %2598 = vmatprep.subr.mxu0 0.0
    %2599 = vmatpush1.msra.mxu0 %v1276
    %2600 = vmatprep.subr.mxu0 0.0
    %2601 = vmatpush1.msra.mxu0 %v1269
    %2602 = vmatprep.subr.mxu0 0.0
    %2603 = vmatpush1.msra.mxu0 %v1262
    %2604 = vmatprep.subr.mxu0 0.0
    %2605 = vmatpush1.msra.mxu0 %v1255
    %2606 = vmatprep.subr.mxu0 0.0
    %2607 = vmatpush1.msra.mxu0 %v1248
    %2608 = vmatprep.subr.mxu0 0.0
    %2609 = vmatpush1.msra.mxu0 %v1241
    %2610 = vmatprep.subr.mxu0 0.0
    %2611 = vmatpush1.msra.mxu0 %v1234
    %2612 = vmatprep.subr.mxu0 0.0
    %2613 = vmatpush1.msra.mxu0 %v1227
    %2614 = vmatprep.subr.mxu0 0.0
    %2615 = vmatpush2.msra.mxu0 %v1444
    %2616 = vmatprep.subr.mxu0 0.0
    %2617 = vmatpush2.msra.mxu0 %v1437
    %2618 = vmatprep.subr.mxu0 0.0
    %2619 = vmatpush2.msra.mxu0 %v1430
    %2620 = vmatprep.subr.mxu0 0.0
    %2621 = vmatpush2.msra.mxu0 %v1423
    %2622 = vmatprep.subr.mxu0 0.0
    %2623 = vmatpush2.msra.mxu0 %v1416
    %2624 = vmatprep.subr.mxu0 0.0
    %2625 = vmatpush2.msra.mxu0 %v1409
    %2626 = vmatprep.subr.mxu0 0.0
    %2627 = vmatpush2.msra.mxu0 %v1402
    %2628 = vmatprep.subr.mxu0 0.0
    %2629 = vmatpush2.msra.mxu0 %v1395
    %2630 = vmatprep.subr.mxu0 0.0
    %2631 = vmatpush2.msra.mxu0 %v1388
    %2632 = vmatprep.subr.mxu0 0.0
    %2633 = vmatpush2.msra.mxu0 %v1381
    %2634 = vmatprep.subr.mxu0 0.0
    %2635 = vmatpush2.msra.mxu0 %v1374
    %2636 = vmatprep.subr.mxu0 0.0
    %2637 = vmatpush2.msra.mxu0 %v1367
    %2638 = vmatprep.subr.mxu0 0.0
    %2639 = vmatpush2.msra.mxu0 %v1360
    %2640 = vmatprep.subr.mxu0 0.0
    %2641 = vmatpush2.msra.mxu0 %v1353
    %2642 = vmatprep.subr.mxu0 0.0
    %2643 = vmatpush2.msra.mxu0 %v1346
    %2644 = vmatprep.subr.mxu0 0.0
    %2645 = vmatpush2.msra.mxu0 %v1339
    %2646 = vmatprep.mubr.f32.mxu0 %v1492
    %2647 = vmatmul.mubr.f32.gmra.mxu0 %v1491
    %v2648 = vpop.f32.mrf.mxu0
    %v2649 = vadd.f32 %v2574, %v2648
    %v2650 = vpop.f32.mrf.mxu0
    %2651 = vmatprep.mubr.f32.mxu0 %v1499
    %2652 = vmatmul.mubr.f32.gmra.mxu0 %v1498
    %v2653 = vpop.f32.mrf.mxu0
    %v2654 = vadd.f32 %v2579, %v2653
    %v2655 = vpop.f32.mrf.mxu0
    %2656 = vdwg.mxu0
    %2657 = vmatprep.subr.mxu0 0.0
    %2658 = vmatpush1.msra.mxu0 0.0
    %2659 = vmatprep.subr.mxu0 0.0
    %2660 = vmatpush1.msra.mxu0 0.0
    %2661 = vmatprep.subr.mxu0 0.0
    %2662 = vmatpush1.msra.mxu0 0.0
    %2663 = vmatprep.subr.mxu0 0.0
    %2664 = vmatpush1.msra.mxu0 0.0
    %2665 = vmatprep.subr.mxu0 0.0
    %2666 = vmatpush1.msra.mxu0 0.0
    %2667 = vmatprep.subr.mxu0 0.0
    %2668 = vmatpush1.msra.mxu0 0.0
    %2669 = vmatprep.subr.mxu0 0.0
    %2670 = vmatpush1.msra.mxu0 0.0
    %2671 = vmatprep.subr.mxu0 0.0
    %2672 = vmatpush1.msra.mxu0 0.0
    %2673 = vmatprep.subr.mxu0 0.0
    %2674 = vmatpush1.msra.mxu0 0.0
    %2675 = vmatprep.subr.mxu0 0.0
    %2676 = vmatpush1.msra.mxu0 0.0
    %2677 = vmatprep.subr.mxu0 0.0
    %2678 = vmatpush1.msra.mxu0 0.0
    %2679 = vmatprep.subr.mxu0 0.0
    %2680 = vmatpush1.msra.mxu0 0.0
    %2681 = vmatprep.subr.mxu0 0.0
    %2682 = vmatpush1.msra.mxu0 %v1472
    %2683 = vmatprep.subr.mxu0 0.0
    %2684 = vmatpush1.msra.mxu0 %v1465
    %2685 = vmatprep.subr.mxu0 0.0
    %2686 = vmatpush1.msra.mxu0 %v1458
    %2687 = vmatprep.subr.mxu0 0.0
    %2688 = vmatpush1.msra.mxu0 %v1451
    %2689 = vmatprep.subr.mxu0 0.0
    %2690 = vmatpush2.msra.mxu0 0.0
    %2691 = vmatprep.subr.mxu0 0.0
    %2692 = vmatpush2.msra.mxu0 0.0
    %2693 = vmatprep.subr.mxu0 0.0
    %2694 = vmatpush2.msra.mxu0 0.0
    %2695 = vmatprep.subr.mxu0 0.0
    %2696 = vmatpush2.msra.mxu0 0.0
    %2697 = vmatprep.subr.mxu0 0.0
    %2698 = vmatpush2.msra.mxu0 0.0
    %2699 = vmatprep.subr.mxu0 0.0
    %2700 = vmatpush2.msra.mxu0 0.0
    %2701 = vmatprep.subr.mxu0 0.0
    %2702 = vmatpush2.msra.mxu0 0.0
    %2703 = vmatprep.subr.mxu0 0.0
    %2704 = vmatpush2.msra.mxu0 0.0
    %2705 = vmatprep.subr.mxu0 0.0
    %2706 = vmatpush2.msra.mxu0 0.0
    %2707 = vmatprep.subr.mxu0 0.0
    %2708 = vmatpush2.msra.mxu0 0.0
    %2709 = vmatprep.subr.mxu0 0.0
    %2710 = vmatpush2.msra.mxu0 0.0
    %2711 = vmatprep.subr.mxu0 0.0
    %2712 = vmatpush2.msra.mxu0 0.0
    %2713 = vmatprep.subr.mxu0 0.0
    %2714 = vmatpush2.msra.mxu0 0.0
    %2715 = vmatprep.subr.mxu0 0.0
    %2716 = vmatpush2.msra.mxu0 0.0
    %2717 = vmatprep.subr.mxu0 0.0
    %2718 = vmatpush2.msra.mxu0 0.0
    %2719 = vmatprep.subr.mxu0 0.0
    %2720 = vmatpush2.msra.mxu0 0.0
    %2721 = vmatprep.mubr.f32.mxu0 0.0
    %2722 = vmatmul.mubr.f32.gmra.mxu0 %v1503
    %v2723 = vpop.f32.mrf.mxu0
    %v2724 = vadd.f32 %v2649, %v2723
    %v2725 = vpop.f32.mrf.mxu0
    %2726 = vmatprep.mubr.f32.mxu0 0.0
    %2727 = vmatmul.mubr.f32.gmra.mxu0 %v1506
    %v2728 = vpop.f32.mrf.mxu0
    %v2729 = vadd.f32 %v2654, %v2728
    %v2730 = vpop.f32.mrf.mxu0
    %2731 = vdwg.mxu0
    %v2733 = vsel %vm1501, %v1479, 0
    %v2736 = vsel %vm1501, %v1486, 0
    %2738 = vmatprep.subr.mxu0 %v179
    %2739 = vmatpush1.msra.mxu0 %v178
    %2740 = vmatprep.subr.mxu0 %v172
    %2741 = vmatpush1.msra.mxu0 %v171
    %2742 = vmatprep.subr.mxu0 %v165
    %2743 = vmatpush1.msra.mxu0 %v164
    %2744 = vmatprep.subr.mxu0 %v158
    %2745 = vmatpush1.msra.mxu0 %v157
    %2746 = vmatprep.subr.mxu0 %v151
    %2747 = vmatpush1.msra.mxu0 %v150
    %2748 = vmatprep.subr.mxu0 %v144
    %2749 = vmatpush1.msra.mxu0 %v143
    %2750 = vmatprep.subr.mxu0 %v137
    %2751 = vmatpush1.msra.mxu0 %v136
    %2752 = vmatprep.subr.mxu0 %v130
    %2753 = vmatpush1.msra.mxu0 %v129
    %2754 = vmatprep.subr.mxu0 %v123
    %2755 = vmatpush1.msra.mxu0 %v122
    %2756 = vmatprep.subr.mxu0 %v116
    %2757 = vmatpush1.msra.mxu0 %v115
    %2758 = vmatprep.subr.mxu0 %v109
    %2759 = vmatpush1.msra.mxu0 %v108
    %2760 = vmatprep.subr.mxu0 %v102
    %2761 = vmatpush1.msra.mxu0 %v101
    %2762 = vmatprep.subr.mxu0 %v95
    %2763 = vmatpush1.msra.mxu0 %v94
    %2764 = vmatprep.subr.mxu0 %v88
    %2765 = vmatpush1.msra.mxu0 %v87
    %2766 = vmatprep.subr.mxu0 %v81
    %2767 = vmatpush1.msra.mxu0 %v80
    %2768 = vmatprep.subr.mxu0 %v74
    %2769 = vmatpush1.msra.mxu0 %v73
    %2770 = vmatprep.subr.mxu0 %v291
    %2771 = vmatpush2.msra.mxu0 %v290
    %2772 = vmatprep.subr.mxu0 %v284
    %2773 = vmatpush2.msra.mxu0 %v283
    %2774 = vmatprep.subr.mxu0 %v277
    %2775 = vmatpush2.msra.mxu0 %v276
    %2776 = vmatprep.subr.mxu0 %v270
    %2777 = vmatpush2.msra.mxu0 %v269
    %2778 = vmatprep.subr.mxu0 %v263
    %2779 = vmatpush2.msra.mxu0 %v262
    %2780 = vmatprep.subr.mxu0 %v256
    %2781 = vmatpush2.msra.mxu0 %v255
    %2782 = vmatprep.subr.mxu0 %v249
    %2783 = vmatpush2.msra.mxu0 %v248
    %2784 = vmatprep.subr.mxu0 %v242
    %2785 = vmatpush2.msra.mxu0 %v241
    %2786 = vmatprep.subr.mxu0 %v235
    %2787 = vmatpush2.msra.mxu0 %v234
    %2788 = vmatprep.subr.mxu0 %v228
    %2789 = vmatpush2.msra.mxu0 %v227
    %2790 = vmatprep.subr.mxu0 %v221
    %2791 = vmatpush2.msra.mxu0 %v220
    %2792 = vmatprep.subr.mxu0 %v214
    %2793 = vmatpush2.msra.mxu0 %v213
    %2794 = vmatprep.subr.mxu0 %v207
    %2795 = vmatpush2.msra.mxu0 %v206
    %2796 = vmatprep.subr.mxu0 %v200
    %2797 = vmatpush2.msra.mxu0 %v199
    %2798 = vmatprep.subr.mxu0 %v193
    %2799 = vmatpush2.msra.mxu0 %v192
    %2800 = vmatprep.subr.mxu0 %v186
    %2801 = vmatpush2.msra.mxu0 %v185
    %2802 = vmatprep.mubr.f32.mxu0 %v1474
    %2803 = vmatmul.mubr.f32.gmra.mxu0 %v1473
    %v2804 = vpop.f32.mrf.mxu0
    %v2805 = vadd.f32 %v1806, %v2804
    %v2806 = vpop.f32.mrf.mxu0
    %v2807 = vadd.f32 %v1808, %v2806
    %2808 = vmatprep.mubr.f32.mxu0 %v1481
    %2809 = vmatmul.mubr.f32.gmra.mxu0 %v1480
    %v2810 = vpop.f32.mrf.mxu0
    %v2811 = vadd.f32 %v1812, %v2810
    %v2812 = vpop.f32.mrf.mxu0
    %v2813 = vadd.f32 %v1814, %v2812
    %2814 = vdwg.mxu0
    %2815 = vmatprep.subr.mxu0 %v403
    %2816 = vmatpush1.msra.mxu0 %v402
    %2817 = vmatprep.subr.mxu0 %v396
    %2818 = vmatpush1.msra.mxu0 %v395
    %2819 = vmatprep.subr.mxu0 %v389
    %2820 = vmatpush1.msra.mxu0 %v388
    %2821 = vmatprep.subr.mxu0 %v382
    %2822 = vmatpush1.msra.mxu0 %v381
    %2823 = vmatprep.subr.mxu0 %v375
    %2824 = vmatpush1.msra.mxu0 %v374
    %2825 = vmatprep.subr.mxu0 %v368
    %2826 = vmatpush1.msra.mxu0 %v367
    %2827 = vmatprep.subr.mxu0 %v361
    %2828 = vmatpush1.msra.mxu0 %v360
    %2829 = vmatprep.subr.mxu0 %v354
    %2830 = vmatpush1.msra.mxu0 %v353
    %2831 = vmatprep.subr.mxu0 %v347
    %2832 = vmatpush1.msra.mxu0 %v346
    %2833 = vmatprep.subr.mxu0 %v340
    %2834 = vmatpush1.msra.mxu0 %v339
    %2835 = vmatprep.subr.mxu0 %v333
    %2836 = vmatpush1.msra.mxu0 %v332
    %2837 = vmatprep.subr.mxu0 %v326
    %2838 = vmatpush1.msra.mxu0 %v325
    %2839 = vmatprep.subr.mxu0 %v319
    %2840 = vmatpush1.msra.mxu0 %v318
    %2841 = vmatprep.subr.mxu0 %v312
    %2842 = vmatpush1.msra.mxu0 %v311
    %2843 = vmatprep.subr.mxu0 %v305
    %2844 = vmatpush1.msra.mxu0 %v304
    %2845 = vmatprep.subr.mxu0 %v298
    %2846 = vmatpush1.msra.mxu0 %v297
    %2847 = vmatprep.subr.mxu0 %v515
    %2848 = vmatpush2.msra.mxu0 %v514
    %2849 = vmatprep.subr.mxu0 %v508
    %2850 = vmatpush2.msra.mxu0 %v507
    %2851 = vmatprep.subr.mxu0 %v501
    %2852 = vmatpush2.msra.mxu0 %v500
    %2853 = vmatprep.subr.mxu0 %v494
    %2854 = vmatpush2.msra.mxu0 %v493
    %2855 = vmatprep.subr.mxu0 %v487
    %2856 = vmatpush2.msra.mxu0 %v486
    %2857 = vmatprep.subr.mxu0 %v480
    %2858 = vmatpush2.msra.mxu0 %v479
    %2859 = vmatprep.subr.mxu0 %v473
    %2860 = vmatpush2.msra.mxu0 %v472
    %2861 = vmatprep.subr.mxu0 %v466
    %2862 = vmatpush2.msra.mxu0 %v465
    %2863 = vmatprep.subr.mxu0 %v459
    %2864 = vmatpush2.msra.mxu0 %v458
    %2865 = vmatprep.subr.mxu0 %v452
    %2866 = vmatpush2.msra.mxu0 %v451
    %2867 = vmatprep.subr.mxu0 %v445
    %2868 = vmatpush2.msra.mxu0 %v444
    %2869 = vmatprep.subr.mxu0 %v438
    %2870 = vmatpush2.msra.mxu0 %v437
    %2871 = vmatprep.subr.mxu0 %v431
    %2872 = vmatpush2.msra.mxu0 %v430
    %2873 = vmatprep.subr.mxu0 %v424
    %2874 = vmatpush2.msra.mxu0 %v423
    %2875 = vmatprep.subr.mxu0 %v417
    %2876 = vmatpush2.msra.mxu0 %v416
    %2877 = vmatprep.subr.mxu0 %v410
    %2878 = vmatpush2.msra.mxu0 %v409
    %2879 = vmatprep.mubr.f32.mxu0 %v1476
    %2880 = vmatmul.mubr.f32.gmra.mxu0 %v1475
    %v2881 = vpop.f32.mrf.mxu0
    %v2882 = vadd.f32 %v2805, %v2881
    %v2883 = vpop.f32.mrf.mxu0
    %v2884 = vadd.f32 %v2807, %v2883
    %2885 = vmatprep.mubr.f32.mxu0 %v1483
    %2886 = vmatmul.mubr.f32.gmra.mxu0 %v1482
    %v2887 = vpop.f32.mrf.mxu0
    %v2888 = vadd.f32 %v2811, %v2887
    %v2889 = vpop.f32.mrf.mxu0
    %v2890 = vadd.f32 %v2813, %v2889
    %2891 = vdwg.mxu0
    %2892 = vmatprep.subr.mxu0 %v627
    %2893 = vmatpush1.msra.mxu0 %v626
    %2894 = vmatprep.subr.mxu0 %v620
    %2895 = vmatpush1.msra.mxu0 %v619
    %2896 = vmatprep.subr.mxu0 %v613
    %2897 = vmatpush1.msra.mxu0 %v612
    %2898 = vmatprep.subr.mxu0 %v606
    %2899 = vmatpush1.msra.mxu0 %v605
    %2900 = vmatprep.subr.mxu0 %v599
    %2901 = vmatpush1.msra.mxu0 %v598
    %2902 = vmatprep.subr.mxu0 %v592
    %2903 = vmatpush1.msra.mxu0 %v591
    %2904 = vmatprep.subr.mxu0 %v585
    %2905 = vmatpush1.msra.mxu0 %v584
    %2906 = vmatprep.subr.mxu0 %v578
    %2907 = vmatpush1.msra.mxu0 %v577
    %2908 = vmatprep.subr.mxu0 %v571
    %2909 = vmatpush1.msra.mxu0 %v570
    %2910 = vmatprep.subr.mxu0 %v564
    %2911 = vmatpush1.msra.mxu0 %v563
    %2912 = vmatprep.subr.mxu0 %v557
    %2913 = vmatpush1.msra.mxu0 %v556
    %2914 = vmatprep.subr.mxu0 %v550
    %2915 = vmatpush1.msra.mxu0 %v549
    %2916 = vmatprep.subr.mxu0 %v543
    %2917 = vmatpush1.msra.mxu0 %v542
    %2918 = vmatprep.subr.mxu0 %v536
    %2919 = vmatpush1.msra.mxu0 %v535
    %2920 = vmatprep.subr.mxu0 %v529
    %2921 = vmatpush1.msra.mxu0 %v528
    %2922 = vmatprep.subr.mxu0 %v522
    %2923 = vmatpush1.msra.mxu0 %v521
    %2924 = vmatprep.subr.mxu0 %v739
    %2925 = vmatpush2.msra.mxu0 %v738
    %2926 = vmatprep.subr.mxu0 %v732
    %2927 = vmatpush2.msra.mxu0 %v731
    %2928 = vmatprep.subr.mxu0 %v725
    %2929 = vmatpush2.msra.mxu0 %v724
    %2930 = vmatprep.subr.mxu0 %v718
    %2931 = vmatpush2.msra.mxu0 %v717
    %2932 = vmatprep.subr.mxu0 %v711
    %2933 = vmatpush2.msra.mxu0 %v710
    %2934 = vmatprep.subr.mxu0 %v704
    %2935 = vmatpush2.msra.mxu0 %v703
    %2936 = vmatprep.subr.mxu0 %v697
    %2937 = vmatpush2.msra.mxu0 %v696
    %2938 = vmatprep.subr.mxu0 %v690
    %2939 = vmatpush2.msra.mxu0 %v689
    %2940 = vmatprep.subr.mxu0 %v683
    %2941 = vmatpush2.msra.mxu0 %v682
    %2942 = vmatprep.subr.mxu0 %v676
    %2943 = vmatpush2.msra.mxu0 %v675
    %2944 = vmatprep.subr.mxu0 %v669
    %2945 = vmatpush2.msra.mxu0 %v668
    %2946 = vmatprep.subr.mxu0 %v662
    %2947 = vmatpush2.msra.mxu0 %v661
    %2948 = vmatprep.subr.mxu0 %v655
    %2949 = vmatpush2.msra.mxu0 %v654
    %2950 = vmatprep.subr.mxu0 %v648
    %2951 = vmatpush2.msra.mxu0 %v647
    %2952 = vmatprep.subr.mxu0 %v641
    %2953 = vmatpush2.msra.mxu0 %v640
    %2954 = vmatprep.subr.mxu0 %v634
    %2955 = vmatpush2.msra.mxu0 %v633
    %2956 = vmatprep.mubr.f32.mxu0 %v1478
    %2957 = vmatmul.mubr.f32.gmra.mxu0 %v1477
    %v2958 = vpop.f32.mrf.mxu0
    %v2959 = vadd.f32 %v2882, %v2958
    %v2960 = vpop.f32.mrf.mxu0
    %v2961 = vadd.f32 %v2884, %v2960
    %2962 = vmatprep.mubr.f32.mxu0 %v1485
    %2963 = vmatmul.mubr.f32.gmra.mxu0 %v1484
    %v2964 = vpop.f32.mrf.mxu0
    %v2965 = vadd.f32 %v2888, %v2964
    %v2966 = vpop.f32.mrf.mxu0
    %v2967 = vadd.f32 %v2890, %v2966
    %2968 = vdwg.mxu0
    %2969 = vmatprep.subr.mxu0 0.0
    %2970 = vmatpush1.msra.mxu0 0.0
    %2971 = vmatprep.subr.mxu0 0.0
    %2972 = vmatpush1.msra.mxu0 0.0
    %2973 = vmatprep.subr.mxu0 0.0
    %2974 = vmatpush1.msra.mxu0 0.0
    %2975 = vmatprep.subr.mxu0 0.0
    %2976 = vmatpush1.msra.mxu0 0.0
    %2977 = vmatprep.subr.mxu0 0.0
    %2978 = vmatpush1.msra.mxu0 0.0
    %2979 = vmatprep.subr.mxu0 0.0
    %2980 = vmatpush1.msra.mxu0 0.0
    %2981 = vmatprep.subr.mxu0 0.0
    %2982 = vmatpush1.msra.mxu0 0.0
    %2983 = vmatprep.subr.mxu0 0.0
    %2984 = vmatpush1.msra.mxu0 0.0
    %2985 = vmatprep.subr.mxu0 0.0
    %2986 = vmatpush1.msra.mxu0 0.0
    %2987 = vmatprep.subr.mxu0 0.0
    %2988 = vmatpush1.msra.mxu0 0.0
    %2989 = vmatprep.subr.mxu0 0.0
    %2990 = vmatpush1.msra.mxu0 0.0
    %2991 = vmatprep.subr.mxu0 0.0
    %2992 = vmatpush1.msra.mxu0 0.0
    %2993 = vmatprep.subr.mxu0 %v767
    %2994 = vmatpush1.msra.mxu0 %v766
    %2995 = vmatprep.subr.mxu0 %v760
    %2996 = vmatpush1.msra.mxu0 %v759
    %2997 = vmatprep.subr.mxu0 %v753
    %2998 = vmatpush1.msra.mxu0 %v752
    %2999 = vmatprep.subr.mxu0 %v746
    %3000 = vmatpush1.msra.mxu0 %v745
    %3001 = vmatprep.subr.mxu0 0.0
    %3002 = vmatpush2.msra.mxu0 0.0
    %3003 = vmatprep.subr.mxu0 0.0
    %3004 = vmatpush2.msra.mxu0 0.0
    %3005 = vmatprep.subr.mxu0 0.0
    %3006 = vmatpush2.msra.mxu0 0.0
    %3007 = vmatprep.subr.mxu0 0.0
    %3008 = vmatpush2.msra.mxu0 0.0
    %3009 = vmatprep.subr.mxu0 0.0
    %3010 = vmatpush2.msra.mxu0 0.0
    %3011 = vmatprep.subr.mxu0 0.0
    %3012 = vmatpush2.msra.mxu0 0.0
    %3013 = vmatprep.subr.mxu0 0.0
    %3014 = vmatpush2.msra.mxu0 0.0
    %3015 = vmatprep.subr.mxu0 0.0
    %3016 = vmatpush2.msra.mxu0 0.0
    %3017 = vmatprep.subr.mxu0 0.0
    %3018 = vmatpush2.msra.mxu0 0.0
    %3019 = vmatprep.subr.mxu0 0.0
    %3020 = vmatpush2.msra.mxu0 0.0
    %3021 = vmatprep.subr.mxu0 0.0
    %3022 = vmatpush2.msra.mxu0 0.0
    %3023 = vmatprep.subr.mxu0 0.0
    %3024 = vmatpush2.msra.mxu0 0.0
    %3025 = vmatprep.subr.mxu0 0.0
    %3026 = vmatpush2.msra.mxu0 0.0
    %3027 = vmatprep.subr.mxu0 0.0
    %3028 = vmatpush2.msra.mxu0 0.0
    %3029 = vmatprep.subr.mxu0 0.0
    %3030 = vmatpush2.msra.mxu0 0.0
    %3031 = vmatprep.subr.mxu0 0.0
    %3032 = vmatpush2.msra.mxu0 0.0
    %3033 = vmatprep.mubr.f32.mxu0 0.0
    %3034 = vmatmul.mubr.f32.gmra.mxu0 %v2733
    %v3035 = vpop.f32.mrf.mxu0
    %v3036 = vadd.f32 %v2959, %v3035
    %v3037 = vpop.f32.mrf.mxu0
    %v3038 = vadd.f32 %v2961, %v3037
    %3039 = vmatprep.mubr.f32.mxu0 0.0
    %3040 = vmatmul.mubr.f32.gmra.mxu0 %v2736
    %v3041 = vpop.f32.mrf.mxu0
    %v3042 = vadd.f32 %v2965, %v3041
    %v3043 = vpop.f32.mrf.mxu0
    %v3044 = vadd.f32 %v2967, %v3043
    %3045 = vdwg.mxu0
    %3046 = vmatprep.subr.mxu0 %v181
    %3047 = vmatpush1.msra.mxu0 %v180
    %3048 = vmatprep.subr.mxu0 %v174
    %3049 = vmatpush1.msra.mxu0 %v173
    %3050 = vmatprep.subr.mxu0 %v167
    %3051 = vmatpush1.msra.mxu0 %v166
    %3052 = vmatprep.subr.mxu0 %v160
    %3053 = vmatpush1.msra.mxu0 %v159
    %3054 = vmatprep.subr.mxu0 %v153
    %3055 = vmatpush1.msra.mxu0 %v152
    %3056 = vmatprep.subr.mxu0 %v146
    %3057 = vmatpush1.msra.mxu0 %v145
    %3058 = vmatprep.subr.mxu0 %v139
    %3059 = vmatpush1.msra.mxu0 %v138
    %3060 = vmatprep.subr.mxu0 %v132
    %3061 = vmatpush1.msra.mxu0 %v131
    %3062 = vmatprep.subr.mxu0 %v125
    %3063 = vmatpush1.msra.mxu0 %v124
    %3064 = vmatprep.subr.mxu0 %v118
    %3065 = vmatpush1.msra.mxu0 %v117
    %3066 = vmatprep.subr.mxu0 %v111
    %3067 = vmatpush1.msra.mxu0 %v110
    %3068 = vmatprep.subr.mxu0 %v104
    %3069 = vmatpush1.msra.mxu0 %v103
    %3070 = vmatprep.subr.mxu0 %v97
    %3071 = vmatpush1.msra.mxu0 %v96
    %3072 = vmatprep.subr.mxu0 %v90
    %3073 = vmatpush1.msra.mxu0 %v89
    %3074 = vmatprep.subr.mxu0 %v83
    %3075 = vmatpush1.msra.mxu0 %v82
    %3076 = vmatprep.subr.mxu0 %v76
    %3077 = vmatpush1.msra.mxu0 %v75
    %3078 = vmatprep.subr.mxu0 %v293
    %3079 = vmatpush2.msra.mxu0 %v292
    %3080 = vmatprep.subr.mxu0 %v286
    %3081 = vmatpush2.msra.mxu0 %v285
    %3082 = vmatprep.subr.mxu0 %v279
    %3083 = vmatpush2.msra.mxu0 %v278
    %3084 = vmatprep.subr.mxu0 %v272
    %3085 = vmatpush2.msra.mxu0 %v271
    %3086 = vmatprep.subr.mxu0 %v265
    %3087 = vmatpush2.msra.mxu0 %v264
    %3088 = vmatprep.subr.mxu0 %v258
    %3089 = vmatpush2.msra.mxu0 %v257
    %3090 = vmatprep.subr.mxu0 %v251
    %3091 = vmatpush2.msra.mxu0 %v250
    %3092 = vmatprep.subr.mxu0 %v244
    %3093 = vmatpush2.msra.mxu0 %v243
    %3094 = vmatprep.subr.mxu0 %v237
    %3095 = vmatpush2.msra.mxu0 %v236
    %3096 = vmatprep.subr.mxu0 %v230
    %3097 = vmatpush2.msra.mxu0 %v229
    %3098 = vmatprep.subr.mxu0 %v223
    %3099 = vmatpush2.msra.mxu0 %v222
    %3100 = vmatprep.subr.mxu0 %v216
    %3101 = vmatpush2.msra.mxu0 %v215
    %3102 = vmatprep.subr.mxu0 %v209
    %3103 = vmatpush2.msra.mxu0 %v208
    %3104 = vmatprep.subr.mxu0 %v202
    %3105 = vmatpush2.msra.mxu0 %v201
    %3106 = vmatprep.subr.mxu0 %v195
    %3107 = vmatpush2.msra.mxu0 %v194
    %3108 = vmatprep.subr.mxu0 %v188
    %3109 = vmatpush2.msra.mxu0 %v187
    %3110 = vmatprep.mubr.f32.mxu0 %v1474
    %3111 = vmatmul.mubr.f32.gmra.mxu0 %v1473
    %v3112 = vpop.f32.mrf.mxu0
    %v3113 = vadd.f32 %v2114, %v3112
    %v3114 = vpop.f32.mrf.mxu0
    %v3115 = vadd.f32 %v2116, %v3114
    %3116 = vmatprep.mubr.f32.mxu0 %v1481
    %3117 = vmatmul.mubr.f32.gmra.mxu0 %v1480
    %v3118 = vpop.f32.mrf.mxu0
    %v3119 = vadd.f32 %v2120, %v3118
    %v3120 = vpop.f32.mrf.mxu0
    %v3121 = vadd.f32 %v2122, %v3120
    %3122 = vdwg.mxu0
    %3123 = vmatprep.subr.mxu0 %v405
    %3124 = vmatpush1.msra.mxu0 %v404
    %3125 = vmatprep.subr.mxu0 %v398
    %3126 = vmatpush1.msra.mxu0 %v397
    %3127 = vmatprep.subr.mxu0 %v391
    %3128 = vmatpush1.msra.mxu0 %v390
    %3129 = vmatprep.subr.mxu0 %v384
    %3130 = vmatpush1.msra.mxu0 %v383
    %3131 = vmatprep.subr.mxu0 %v377
    %3132 = vmatpush1.msra.mxu0 %v376
    %3133 = vmatprep.subr.mxu0 %v370
    %3134 = vmatpush1.msra.mxu0 %v369
    %3135 = vmatprep.subr.mxu0 %v363
    %3136 = vmatpush1.msra.mxu0 %v362
    %3137 = vmatprep.subr.mxu0 %v356
    %3138 = vmatpush1.msra.mxu0 %v355
    %3139 = vmatprep.subr.mxu0 %v349
    %3140 = vmatpush1.msra.mxu0 %v348
    %3141 = vmatprep.subr.mxu0 %v342
    %3142 = vmatpush1.msra.mxu0 %v341
    %3143 = vmatprep.subr.mxu0 %v335
    %3144 = vmatpush1.msra.mxu0 %v334
    %3145 = vmatprep.subr.mxu0 %v328
    %3146 = vmatpush1.msra.mxu0 %v327
    %3147 = vmatprep.subr.mxu0 %v321
    %3148 = vmatpush1.msra.mxu0 %v320
    %3149 = vmatprep.subr.mxu0 %v314
    %3150 = vmatpush1.msra.mxu0 %v313
    %3151 = vmatprep.subr.mxu0 %v307
    %3152 = vmatpush1.msra.mxu0 %v306
    %3153 = vmatprep.subr.mxu0 %v300
    %3154 = vmatpush1.msra.mxu0 %v299
    %3155 = vmatprep.subr.mxu0 %v517
    %3156 = vmatpush2.msra.mxu0 %v516
    %3157 = vmatprep.subr.mxu0 %v510
    %3158 = vmatpush2.msra.mxu0 %v509
    %3159 = vmatprep.subr.mxu0 %v503
    %3160 = vmatpush2.msra.mxu0 %v502
    %3161 = vmatprep.subr.mxu0 %v496
    %3162 = vmatpush2.msra.mxu0 %v495
    %3163 = vmatprep.subr.mxu0 %v489
    %3164 = vmatpush2.msra.mxu0 %v488
    %3165 = vmatprep.subr.mxu0 %v482
    %3166 = vmatpush2.msra.mxu0 %v481
    %3167 = vmatprep.subr.mxu0 %v475
    %3168 = vmatpush2.msra.mxu0 %v474
    %3169 = vmatprep.subr.mxu0 %v468
    %3170 = vmatpush2.msra.mxu0 %v467
    %3171 = vmatprep.subr.mxu0 %v461
    %3172 = vmatpush2.msra.mxu0 %v460
    %3173 = vmatprep.subr.mxu0 %v454
    %3174 = vmatpush2.msra.mxu0 %v453
    %3175 = vmatprep.subr.mxu0 %v447
    %3176 = vmatpush2.msra.mxu0 %v446
    %3177 = vmatprep.subr.mxu0 %v440
    %3178 = vmatpush2.msra.mxu0 %v439
    %3179 = vmatprep.subr.mxu0 %v433
    %3180 = vmatpush2.msra.mxu0 %v432
    %3181 = vmatprep.subr.mxu0 %v426
    %3182 = vmatpush2.msra.mxu0 %v425
    %3183 = vmatprep.subr.mxu0 %v419
    %3184 = vmatpush2.msra.mxu0 %v418
    %3185 = vmatprep.subr.mxu0 %v412
    %3186 = vmatpush2.msra.mxu0 %v411
    %3187 = vmatprep.mubr.f32.mxu0 %v1476
    %3188 = vmatmul.mubr.f32.gmra.mxu0 %v1475
    %v3189 = vpop.f32.mrf.mxu0
    %v3190 = vadd.f32 %v3113, %v3189
    %v3191 = vpop.f32.mrf.mxu0
    %v3192 = vadd.f32 %v3115, %v3191
    %3193 = vmatprep.mubr.f32.mxu0 %v1483
    %3194 = vmatmul.mubr.f32.gmra.mxu0 %v1482
    %v3195 = vpop.f32.mrf.mxu0
    %v3196 = vadd.f32 %v3119, %v3195
    %v3197 = vpop.f32.mrf.mxu0
    %v3198 = vadd.f32 %v3121, %v3197
    %3199 = vdwg.mxu0
    %3200 = vmatprep.subr.mxu0 %v629
    %3201 = vmatpush1.msra.mxu0 %v628
    %3202 = vmatprep.subr.mxu0 %v622
    %3203 = vmatpush1.msra.mxu0 %v621
    %3204 = vmatprep.subr.mxu0 %v615
    %3205 = vmatpush1.msra.mxu0 %v614
    %3206 = vmatprep.subr.mxu0 %v608
    %3207 = vmatpush1.msra.mxu0 %v607
    %3208 = vmatprep.subr.mxu0 %v601
    %3209 = vmatpush1.msra.mxu0 %v600
    %3210 = vmatprep.subr.mxu0 %v594
    %3211 = vmatpush1.msra.mxu0 %v593
    %3212 = vmatprep.subr.mxu0 %v587
    %3213 = vmatpush1.msra.mxu0 %v586
    %3214 = vmatprep.subr.mxu0 %v580
    %3215 = vmatpush1.msra.mxu0 %v579
    %3216 = vmatprep.subr.mxu0 %v573
    %3217 = vmatpush1.msra.mxu0 %v572
    %3218 = vmatprep.subr.mxu0 %v566
    %3219 = vmatpush1.msra.mxu0 %v565
    %3220 = vmatprep.subr.mxu0 %v559
    %3221 = vmatpush1.msra.mxu0 %v558
    %3222 = vmatprep.subr.mxu0 %v552
    %3223 = vmatpush1.msra.mxu0 %v551
    %3224 = vmatprep.subr.mxu0 %v545
    %3225 = vmatpush1.msra.mxu0 %v544
    %3226 = vmatprep.subr.mxu0 %v538
    %3227 = vmatpush1.msra.mxu0 %v537
    %3228 = vmatprep.subr.mxu0 %v531
    %3229 = vmatpush1.msra.mxu0 %v530
    %3230 = vmatprep.subr.mxu0 %v524
    %3231 = vmatpush1.msra.mxu0 %v523
    %3232 = vmatprep.subr.mxu0 %v741
    %3233 = vmatpush2.msra.mxu0 %v740
    %3234 = vmatprep.subr.mxu0 %v734
    %3235 = vmatpush2.msra.mxu0 %v733
    %3236 = vmatprep.subr.mxu0 %v727
    %3237 = vmatpush2.msra.mxu0 %v726
    %3238 = vmatprep.subr.mxu0 %v720
    %3239 = vmatpush2.msra.mxu0 %v719
    %3240 = vmatprep.subr.mxu0 %v713
    %3241 = vmatpush2.msra.mxu0 %v712
    %3242 = vmatprep.subr.mxu0 %v706
    %3243 = vmatpush2.msra.mxu0 %v705
    %3244 = vmatprep.subr.mxu0 %v699
    %3245 = vmatpush2.msra.mxu0 %v698
    %3246 = vmatprep.subr.mxu0 %v692
    %3247 = vmatpush2.msra.mxu0 %v691
    %3248 = vmatprep.subr.mxu0 %v685
    %3249 = vmatpush2.msra.mxu0 %v684
    %3250 = vmatprep.subr.mxu0 %v678
    %3251 = vmatpush2.msra.mxu0 %v677
    %3252 = vmatprep.subr.mxu0 %v671
    %3253 = vmatpush2.msra.mxu0 %v670
    %3254 = vmatprep.subr.mxu0 %v664
    %3255 = vmatpush2.msra.mxu0 %v663
    %3256 = vmatprep.subr.mxu0 %v657
    %3257 = vmatpush2.msra.mxu0 %v656
    %3258 = vmatprep.subr.mxu0 %v650
    %3259 = vmatpush2.msra.mxu0 %v649
    %3260 = vmatprep.subr.mxu0 %v643
    %3261 = vmatpush2.msra.mxu0 %v642
    %3262 = vmatprep.subr.mxu0 %v636
    %3263 = vmatpush2.msra.mxu0 %v635
    %3264 = vmatprep.mubr.f32.mxu0 %v1478
    %3265 = vmatmul.mubr.f32.gmra.mxu0 %v1477
    %v3266 = vpop.f32.mrf.mxu0
    %v3267 = vadd.f32 %v3190, %v3266
    %v3268 = vpop.f32.mrf.mxu0
    %v3269 = vadd.f32 %v3192, %v3268
    %3270 = vmatprep.mubr.f32.mxu0 %v1485
    %3271 = vmatmul.mubr.f32.gmra.mxu0 %v1484
    %v3272 = vpop.f32.mrf.mxu0
    %v3273 = vadd.f32 %v3196, %v3272
    %v3274 = vpop.f32.mrf.mxu0
    %v3275 = vadd.f32 %v3198, %v3274
    %3276 = vdwg.mxu0
    %3277 = vmatprep.subr.mxu0 0.0
    %3278 = vmatpush1.msra.mxu0 0.0
    %3279 = vmatprep.subr.mxu0 0.0
    %3280 = vmatpush1.msra.mxu0 0.0
    %3281 = vmatprep.subr.mxu0 0.0
    %3282 = vmatpush1.msra.mxu0 0.0
    %3283 = vmatprep.subr.mxu0 0.0
    %3284 = vmatpush1.msra.mxu0 0.0
    %3285 = vmatprep.subr.mxu0 0.0
    %3286 = vmatpush1.msra.mxu0 0.0
    %3287 = vmatprep.subr.mxu0 0.0
    %3288 = vmatpush1.msra.mxu0 0.0
    %3289 = vmatprep.subr.mxu0 0.0
    %3290 = vmatpush1.msra.mxu0 0.0
    %3291 = vmatprep.subr.mxu0 0.0
    %3292 = vmatpush1.msra.mxu0 0.0
    %3293 = vmatprep.subr.mxu0 0.0
    %3294 = vmatpush1.msra.mxu0 0.0
    %3295 = vmatprep.subr.mxu0 0.0
    %3296 = vmatpush1.msra.mxu0 0.0
    %3297 = vmatprep.subr.mxu0 0.0
    %3298 = vmatpush1.msra.mxu0 0.0
    %3299 = vmatprep.subr.mxu0 0.0
    %3300 = vmatpush1.msra.mxu0 0.0
    %3301 = vmatprep.subr.mxu0 %v769
    %3302 = vmatpush1.msra.mxu0 %v768
    %3303 = vmatprep.subr.mxu0 %v762
    %3304 = vmatpush1.msra.mxu0 %v761
    %3305 = vmatprep.subr.mxu0 %v755
    %3306 = vmatpush1.msra.mxu0 %v754
    %3307 = vmatprep.subr.mxu0 %v748
    %3308 = vmatpush1.msra.mxu0 %v747
    %3309 = vmatprep.subr.mxu0 0.0
    %3310 = vmatpush2.msra.mxu0 0.0
    %3311 = vmatprep.subr.mxu0 0.0
    %3312 = vmatpush2.msra.mxu0 0.0
    %3313 = vmatprep.subr.mxu0 0.0
    %3314 = vmatpush2.msra.mxu0 0.0
    %3315 = vmatprep.subr.mxu0 0.0
    %3316 = vmatpush2.msra.mxu0 0.0
    %3317 = vmatprep.subr.mxu0 0.0
    %3318 = vmatpush2.msra.mxu0 0.0
    %3319 = vmatprep.subr.mxu0 0.0
    %3320 = vmatpush2.msra.mxu0 0.0
    %3321 = vmatprep.subr.mxu0 0.0
    %3322 = vmatpush2.msra.mxu0 0.0
    %3323 = vmatprep.subr.mxu0 0.0
    %3324 = vmatpush2.msra.mxu0 0.0
    %3325 = vmatprep.subr.mxu0 0.0
    %3326 = vmatpush2.msra.mxu0 0.0
    %3327 = vmatprep.subr.mxu0 0.0
    %3328 = vmatpush2.msra.mxu0 0.0
    %3329 = vmatprep.subr.mxu0 0.0
    %3330 = vmatpush2.msra.mxu0 0.0
    %3331 = vmatprep.subr.mxu0 0.0
    %3332 = vmatpush2.msra.mxu0 0.0
    %3333 = vmatprep.subr.mxu0 0.0
    %3334 = vmatpush2.msra.mxu0 0.0
    %3335 = vmatprep.subr.mxu0 0.0
    %3336 = vmatpush2.msra.mxu0 0.0
    %3337 = vmatprep.subr.mxu0 0.0
    %3338 = vmatpush2.msra.mxu0 0.0
    %3339 = vmatprep.subr.mxu0 0.0
    %3340 = vmatpush2.msra.mxu0 0.0
    %3341 = vmatprep.mubr.f32.mxu0 0.0
    %3342 = vmatmul.mubr.f32.gmra.mxu0 %v2733
    %v3343 = vpop.f32.mrf.mxu0
    %v3344 = vadd.f32 %v3267, %v3343
    %v3345 = vpop.f32.mrf.mxu0
    %v3346 = vadd.f32 %v3269, %v3345
    %3347 = vmatprep.mubr.f32.mxu0 0.0
    %3348 = vmatmul.mubr.f32.gmra.mxu0 %v2736
    %v3349 = vpop.f32.mrf.mxu0
    %v3350 = vadd.f32 %v3273, %v3349
    %v3351 = vpop.f32.mrf.mxu0
    %v3352 = vadd.f32 %v3275, %v3351
    %3353 = vdwg.mxu0
    %3354 = vmatprep.subr.mxu0 %v183
    %3355 = vmatpush1.msra.mxu0 %v182
    %3356 = vmatprep.subr.mxu0 %v176
    %3357 = vmatpush1.msra.mxu0 %v175
    %3358 = vmatprep.subr.mxu0 %v169
    %3359 = vmatpush1.msra.mxu0 %v168
    %3360 = vmatprep.subr.mxu0 %v162
    %3361 = vmatpush1.msra.mxu0 %v161
    %3362 = vmatprep.subr.mxu0 %v155
    %3363 = vmatpush1.msra.mxu0 %v154
    %3364 = vmatprep.subr.mxu0 %v148
    %3365 = vmatpush1.msra.mxu0 %v147
    %3366 = vmatprep.subr.mxu0 %v141
    %3367 = vmatpush1.msra.mxu0 %v140
    %3368 = vmatprep.subr.mxu0 %v134
    %3369 = vmatpush1.msra.mxu0 %v133
    %3370 = vmatprep.subr.mxu0 %v127
    %3371 = vmatpush1.msra.mxu0 %v126
    %3372 = vmatprep.subr.mxu0 %v120
    %3373 = vmatpush1.msra.mxu0 %v119
    %3374 = vmatprep.subr.mxu0 %v113
    %3375 = vmatpush1.msra.mxu0 %v112
    %3376 = vmatprep.subr.mxu0 %v106
    %3377 = vmatpush1.msra.mxu0 %v105
    %3378 = vmatprep.subr.mxu0 %v99
    %3379 = vmatpush1.msra.mxu0 %v98
    %3380 = vmatprep.subr.mxu0 %v92
    %3381 = vmatpush1.msra.mxu0 %v91
    %3382 = vmatprep.subr.mxu0 %v85
    %3383 = vmatpush1.msra.mxu0 %v84
    %3384 = vmatprep.subr.mxu0 %v78
    %3385 = vmatpush1.msra.mxu0 %v77
    %3386 = vmatprep.subr.mxu0 %v295
    %3387 = vmatpush2.msra.mxu0 %v294
    %3388 = vmatprep.subr.mxu0 %v288
    %3389 = vmatpush2.msra.mxu0 %v287
    %3390 = vmatprep.subr.mxu0 %v281
    %3391 = vmatpush2.msra.mxu0 %v280
    %3392 = vmatprep.subr.mxu0 %v274
    %3393 = vmatpush2.msra.mxu0 %v273
    %3394 = vmatprep.subr.mxu0 %v267
    %3395 = vmatpush2.msra.mxu0 %v266
    %3396 = vmatprep.subr.mxu0 %v260
    %3397 = vmatpush2.msra.mxu0 %v259
    %3398 = vmatprep.subr.mxu0 %v253
    %3399 = vmatpush2.msra.mxu0 %v252
    %3400 = vmatprep.subr.mxu0 %v246
    %3401 = vmatpush2.msra.mxu0 %v245
    %3402 = vmatprep.subr.mxu0 %v239
    %3403 = vmatpush2.msra.mxu0 %v238
    %3404 = vmatprep.subr.mxu0 %v232
    %3405 = vmatpush2.msra.mxu0 %v231
    %3406 = vmatprep.subr.mxu0 %v225
    %3407 = vmatpush2.msra.mxu0 %v224
    %3408 = vmatprep.subr.mxu0 %v218
    %3409 = vmatpush2.msra.mxu0 %v217
    %3410 = vmatprep.subr.mxu0 %v211
    %3411 = vmatpush2.msra.mxu0 %v210
    %3412 = vmatprep.subr.mxu0 %v204
    %3413 = vmatpush2.msra.mxu0 %v203
    %3414 = vmatprep.subr.mxu0 %v197
    %3415 = vmatpush2.msra.mxu0 %v196
    %3416 = vmatprep.subr.mxu0 %v190
    %3417 = vmatpush2.msra.mxu0 %v189
    %3418 = vmatprep.mubr.f32.mxu0 %v1474
    %3419 = vmatmul.mubr.f32.gmra.mxu0 %v1473
    %v3420 = vpop.f32.mrf.mxu0
    %v3421 = vadd.f32 %v2422, %v3420
    %v3422 = vpop.f32.mrf.mxu0
    %v3423 = vadd.f32 %v2424, %v3422
    %3424 = vmatprep.mubr.f32.mxu0 %v1481
    %3425 = vmatmul.mubr.f32.gmra.mxu0 %v1480
    %v3426 = vpop.f32.mrf.mxu0
    %v3427 = vadd.f32 %v2428, %v3426
    %v3428 = vpop.f32.mrf.mxu0
    %v3429 = vadd.f32 %v2430, %v3428
    %3430 = vdwg.mxu0
    %3431 = vmatprep.subr.mxu0 %v407
    %3432 = vmatpush1.msra.mxu0 %v406
    %3433 = vmatprep.subr.mxu0 %v400
    %3434 = vmatpush1.msra.mxu0 %v399
    %3435 = vmatprep.subr.mxu0 %v393
    %3436 = vmatpush1.msra.mxu0 %v392
    %3437 = vmatprep.subr.mxu0 %v386
    %3438 = vmatpush1.msra.mxu0 %v385
    %3439 = vmatprep.subr.mxu0 %v379
    %3440 = vmatpush1.msra.mxu0 %v378
    %3441 = vmatprep.subr.mxu0 %v372
    %3442 = vmatpush1.msra.mxu0 %v371
    %3443 = vmatprep.subr.mxu0 %v365
    %3444 = vmatpush1.msra.mxu0 %v364
    %3445 = vmatprep.subr.mxu0 %v358
    %3446 = vmatpush1.msra.mxu0 %v357
    %3447 = vmatprep.subr.mxu0 %v351
    %3448 = vmatpush1.msra.mxu0 %v350
    %3449 = vmatprep.subr.mxu0 %v344
    %3450 = vmatpush1.msra.mxu0 %v343
    %3451 = vmatprep.subr.mxu0 %v337
    %3452 = vmatpush1.msra.mxu0 %v336
    %3453 = vmatprep.subr.mxu0 %v330
    %3454 = vmatpush1.msra.mxu0 %v329
    %3455 = vmatprep.subr.mxu0 %v323
    %3456 = vmatpush1.msra.mxu0 %v322
    %3457 = vmatprep.subr.mxu0 %v316
    %3458 = vmatpush1.msra.mxu0 %v315
    %3459 = vmatprep.subr.mxu0 %v309
    %3460 = vmatpush1.msra.mxu0 %v308
    %3461 = vmatprep.subr.mxu0 %v302
    %3462 = vmatpush1.msra.mxu0 %v301
    %3463 = vmatprep.subr.mxu0 %v519
    %3464 = vmatpush2.msra.mxu0 %v518
    %3465 = vmatprep.subr.mxu0 %v512
    %3466 = vmatpush2.msra.mxu0 %v511
    %3467 = vmatprep.subr.mxu0 %v505
    %3468 = vmatpush2.msra.mxu0 %v504
    %3469 = vmatprep.subr.mxu0 %v498
    %3470 = vmatpush2.msra.mxu0 %v497
    %3471 = vmatprep.subr.mxu0 %v491
    %3472 = vmatpush2.msra.mxu0 %v490
    %3473 = vmatprep.subr.mxu0 %v484
    %3474 = vmatpush2.msra.mxu0 %v483
    %3475 = vmatprep.subr.mxu0 %v477
    %3476 = vmatpush2.msra.mxu0 %v476
    %3477 = vmatprep.subr.mxu0 %v470
    %3478 = vmatpush2.msra.mxu0 %v469
    %3479 = vmatprep.subr.mxu0 %v463
    %3480 = vmatpush2.msra.mxu0 %v462
    %3481 = vmatprep.subr.mxu0 %v456
    %3482 = vmatpush2.msra.mxu0 %v455
    %3483 = vmatprep.subr.mxu0 %v449
    %3484 = vmatpush2.msra.mxu0 %v448
    %3485 = vmatprep.subr.mxu0 %v442
    %3486 = vmatpush2.msra.mxu0 %v441
    %3487 = vmatprep.subr.mxu0 %v435
    %3488 = vmatpush2.msra.mxu0 %v434
    %3489 = vmatprep.subr.mxu0 %v428
    %3490 = vmatpush2.msra.mxu0 %v427
    %3491 = vmatprep.subr.mxu0 %v421
    %3492 = vmatpush2.msra.mxu0 %v420
    %3493 = vmatprep.subr.mxu0 %v414
    %3494 = vmatpush2.msra.mxu0 %v413
    %3495 = vmatprep.mubr.f32.mxu0 %v1476
    %3496 = vmatmul.mubr.f32.gmra.mxu0 %v1475
    %v3497 = vpop.f32.mrf.mxu0
    %v3498 = vadd.f32 %v3421, %v3497
    %v3499 = vpop.f32.mrf.mxu0
    %v3500 = vadd.f32 %v3423, %v3499
    %3501 = vmatprep.mubr.f32.mxu0 %v1483
    %3502 = vmatmul.mubr.f32.gmra.mxu0 %v1482
    %v3503 = vpop.f32.mrf.mxu0
    %v3504 = vadd.f32 %v3427, %v3503
    %v3505 = vpop.f32.mrf.mxu0
    %v3506 = vadd.f32 %v3429, %v3505
    %3507 = vdwg.mxu0
    %3508 = vmatprep.subr.mxu0 %v631
    %3509 = vmatpush1.msra.mxu0 %v630
    %3510 = vmatprep.subr.mxu0 %v624
    %3511 = vmatpush1.msra.mxu0 %v623
    %3512 = vmatprep.subr.mxu0 %v617
    %3513 = vmatpush1.msra.mxu0 %v616
    %3514 = vmatprep.subr.mxu0 %v610
    %3515 = vmatpush1.msra.mxu0 %v609
    %3516 = vmatprep.subr.mxu0 %v603
    %3517 = vmatpush1.msra.mxu0 %v602
    %3518 = vmatprep.subr.mxu0 %v596
    %3519 = vmatpush1.msra.mxu0 %v595
    %3520 = vmatprep.subr.mxu0 %v589
    %3521 = vmatpush1.msra.mxu0 %v588
    %3522 = vmatprep.subr.mxu0 %v582
    %3523 = vmatpush1.msra.mxu0 %v581
    %3524 = vmatprep.subr.mxu0 %v575
    %3525 = vmatpush1.msra.mxu0 %v574
    %3526 = vmatprep.subr.mxu0 %v568
    %3527 = vmatpush1.msra.mxu0 %v567
    %3528 = vmatprep.subr.mxu0 %v561
    %3529 = vmatpush1.msra.mxu0 %v560
    %3530 = vmatprep.subr.mxu0 %v554
    %3531 = vmatpush1.msra.mxu0 %v553
    %3532 = vmatprep.subr.mxu0 %v547
    %3533 = vmatpush1.msra.mxu0 %v546
    %3534 = vmatprep.subr.mxu0 %v540
    %3535 = vmatpush1.msra.mxu0 %v539
    %3536 = vmatprep.subr.mxu0 %v533
    %3537 = vmatpush1.msra.mxu0 %v532
    %3538 = vmatprep.subr.mxu0 %v526
    %3539 = vmatpush1.msra.mxu0 %v525
    %3540 = vmatprep.subr.mxu0 %v743
    %3541 = vmatpush2.msra.mxu0 %v742
    %3542 = vmatprep.subr.mxu0 %v736
    %3543 = vmatpush2.msra.mxu0 %v735
    %3544 = vmatprep.subr.mxu0 %v729
    %3545 = vmatpush2.msra.mxu0 %v728
    %3546 = vmatprep.subr.mxu0 %v722
    %3547 = vmatpush2.msra.mxu0 %v721
    %3548 = vmatprep.subr.mxu0 %v715
    %3549 = vmatpush2.msra.mxu0 %v714
    %3550 = vmatprep.subr.mxu0 %v708
    %3551 = vmatpush2.msra.mxu0 %v707
    %3552 = vmatprep.subr.mxu0 %v701
    %3553 = vmatpush2.msra.mxu0 %v700
    %3554 = vmatprep.subr.mxu0 %v694
    %3555 = vmatpush2.msra.mxu0 %v693
    %3556 = vmatprep.subr.mxu0 %v687
    %3557 = vmatpush2.msra.mxu0 %v686
    %3558 = vmatprep.subr.mxu0 %v680
    %3559 = vmatpush2.msra.mxu0 %v679
    %3560 = vmatprep.subr.mxu0 %v673
    %3561 = vmatpush2.msra.mxu0 %v672
    %3562 = vmatprep.subr.mxu0 %v666
    %3563 = vmatpush2.msra.mxu0 %v665
    %3564 = vmatprep.subr.mxu0 %v659
    %3565 = vmatpush2.msra.mxu0 %v658
    %3566 = vmatprep.subr.mxu0 %v652
    %3567 = vmatpush2.msra.mxu0 %v651
    %3568 = vmatprep.subr.mxu0 %v645
    %3569 = vmatpush2.msra.mxu0 %v644
    %3570 = vmatprep.subr.mxu0 %v638
    %3571 = vmatpush2.msra.mxu0 %v637
    %3572 = vmatprep.mubr.f32.mxu0 %v1478
    %3573 = vmatmul.mubr.f32.gmra.mxu0 %v1477
    %v3574 = vpop.f32.mrf.mxu0
    %v3575 = vadd.f32 %v3498, %v3574
    %v3576 = vpop.f32.mrf.mxu0
    %v3577 = vadd.f32 %v3500, %v3576
    %3578 = vmatprep.mubr.f32.mxu0 %v1485
    %3579 = vmatmul.mubr.f32.gmra.mxu0 %v1484
    %v3580 = vpop.f32.mrf.mxu0
    %v3581 = vadd.f32 %v3504, %v3580
    %v3582 = vpop.f32.mrf.mxu0
    %v3583 = vadd.f32 %v3506, %v3582
    %3584 = vdwg.mxu0
    %3585 = vmatprep.subr.mxu0 0.0
    %3586 = vmatpush1.msra.mxu0 0.0
    %3587 = vmatprep.subr.mxu0 0.0
    %3588 = vmatpush1.msra.mxu0 0.0
    %3589 = vmatprep.subr.mxu0 0.0
    %3590 = vmatpush1.msra.mxu0 0.0
    %3591 = vmatprep.subr.mxu0 0.0
    %3592 = vmatpush1.msra.mxu0 0.0
    %3593 = vmatprep.subr.mxu0 0.0
    %3594 = vmatpush1.msra.mxu0 0.0
    %3595 = vmatprep.subr.mxu0 0.0
    %3596 = vmatpush1.msra.mxu0 0.0
    %3597 = vmatprep.subr.mxu0 0.0
    %3598 = vmatpush1.msra.mxu0 0.0
    %3599 = vmatprep.subr.mxu0 0.0
    %3600 = vmatpush1.msra.mxu0 0.0
    %3601 = vmatprep.subr.mxu0 0.0
    %3602 = vmatpush1.msra.mxu0 0.0
    %3603 = vmatprep.subr.mxu0 0.0
    %3604 = vmatpush1.msra.mxu0 0.0
    %3605 = vmatprep.subr.mxu0 0.0
    %3606 = vmatpush1.msra.mxu0 0.0
    %3607 = vmatprep.subr.mxu0 0.0
    %3608 = vmatpush1.msra.mxu0 0.0
    %3609 = vmatprep.subr.mxu0 %v771
    %3610 = vmatpush1.msra.mxu0 %v770
    %3611 = vmatprep.subr.mxu0 %v764
    %3612 = vmatpush1.msra.mxu0 %v763
    %3613 = vmatprep.subr.mxu0 %v757
    %3614 = vmatpush1.msra.mxu0 %v756
    %3615 = vmatprep.subr.mxu0 %v750
    %3616 = vmatpush1.msra.mxu0 %v749
    %3617 = vmatprep.subr.mxu0 0.0
    %3618 = vmatpush2.msra.mxu0 0.0
    %3619 = vmatprep.subr.mxu0 0.0
    %3620 = vmatpush2.msra.mxu0 0.0
    %3621 = vmatprep.subr.mxu0 0.0
    %3622 = vmatpush2.msra.mxu0 0.0
    %3623 = vmatprep.subr.mxu0 0.0
    %3624 = vmatpush2.msra.mxu0 0.0
    %3625 = vmatprep.subr.mxu0 0.0
    %3626 = vmatpush2.msra.mxu0 0.0
    %3627 = vmatprep.subr.mxu0 0.0
    %3628 = vmatpush2.msra.mxu0 0.0
    %3629 = vmatprep.subr.mxu0 0.0
    %3630 = vmatpush2.msra.mxu0 0.0
    %3631 = vmatprep.subr.mxu0 0.0
    %3632 = vmatpush2.msra.mxu0 0.0
    %3633 = vmatprep.subr.mxu0 0.0
    %3634 = vmatpush2.msra.mxu0 0.0
    %3635 = vmatprep.subr.mxu0 0.0
    %3636 = vmatpush2.msra.mxu0 0.0
    %3637 = vmatprep.subr.mxu0 0.0
    %3638 = vmatpush2.msra.mxu0 0.0
    %3639 = vmatprep.subr.mxu0 0.0
    %3640 = vmatpush2.msra.mxu0 0.0
    %3641 = vmatprep.subr.mxu0 0.0
    %3642 = vmatpush2.msra.mxu0 0.0
    %3643 = vmatprep.subr.mxu0 0.0
    %3644 = vmatpush2.msra.mxu0 0.0
    %3645 = vmatprep.subr.mxu0 0.0
    %3646 = vmatpush2.msra.mxu0 0.0
    %3647 = vmatprep.subr.mxu0 0.0
    %3648 = vmatpush2.msra.mxu0 0.0
    %3649 = vmatprep.mubr.f32.mxu0 0.0
    %3650 = vmatmul.mubr.f32.gmra.mxu0 %v2733
    %v3651 = vpop.f32.mrf.mxu0
    %v3652 = vadd.f32 %v3575, %v3651
    %v3653 = vpop.f32.mrf.mxu0
    %v3654 = vadd.f32 %v3577, %v3653
    %3655 = vmatprep.mubr.f32.mxu0 0.0
    %3656 = vmatmul.mubr.f32.gmra.mxu0 %v2736
    %v3657 = vpop.f32.mrf.mxu0
    %v3658 = vadd.f32 %v3581, %v3657
    %v3659 = vpop.f32.mrf.mxu0
    %v3660 = vadd.f32 %v3583, %v3659
    %3661 = vdwg.mxu0
    %3662 = vmatprep.subr.mxu0 0.0
    %3663 = vmatpush1.msra.mxu0 %v184
    %3664 = vmatprep.subr.mxu0 0.0
    %3665 = vmatpush1.msra.mxu0 %v177
    %3666 = vmatprep.subr.mxu0 0.0
    %3667 = vmatpush1.msra.mxu0 %v170
    %3668 = vmatprep.subr.mxu0 0.0
    %3669 = vmatpush1.msra.mxu0 %v163
    %3670 = vmatprep.subr.mxu0 0.0
    %3671 = vmatpush1.msra.mxu0 %v156
    %3672 = vmatprep.subr.mxu0 0.0
    %3673 = vmatpush1.msra.mxu0 %v149
    %3674 = vmatprep.subr.mxu0 0.0
    %3675 = vmatpush1.msra.mxu0 %v142
    %3676 = vmatprep.subr.mxu0 0.0
    %3677 = vmatpush1.msra.mxu0 %v135
    %3678 = vmatprep.subr.mxu0 0.0
    %3679 = vmatpush1.msra.mxu0 %v128
    %3680 = vmatprep.subr.mxu0 0.0
    %3681 = vmatpush1.msra.mxu0 %v121
    %3682 = vmatprep.subr.mxu0 0.0
    %3683 = vmatpush1.msra.mxu0 %v114
    %3684 = vmatprep.subr.mxu0 0.0
    %3685 = vmatpush1.msra.mxu0 %v107
    %3686 = vmatprep.subr.mxu0 0.0
    %3687 = vmatpush1.msra.mxu0 %v100
    %3688 = vmatprep.subr.mxu0 0.0
    %3689 = vmatpush1.msra.mxu0 %v93
    %3690 = vmatprep.subr.mxu0 0.0
    %3691 = vmatpush1.msra.mxu0 %v86
    %3692 = vmatprep.subr.mxu0 0.0
    %3693 = vmatpush1.msra.mxu0 %v79
    %3694 = vmatprep.subr.mxu0 0.0
    %3695 = vmatpush2.msra.mxu0 %v296
    %3696 = vmatprep.subr.mxu0 0.0
    %3697 = vmatpush2.msra.mxu0 %v289
    %3698 = vmatprep.subr.mxu0 0.0
    %3699 = vmatpush2.msra.mxu0 %v282
    %3700 = vmatprep.subr.mxu0 0.0
    %3701 = vmatpush2.msra.mxu0 %v275
    %3702 = vmatprep.subr.mxu0 0.0
    %3703 = vmatpush2.msra.mxu0 %v268
    %3704 = vmatprep.subr.mxu0 0.0
    %3705 = vmatpush2.msra.mxu0 %v261
    %3706 = vmatprep.subr.mxu0 0.0
    %3707 = vmatpush2.msra.mxu0 %v254
    %3708 = vmatprep.subr.mxu0 0.0
    %3709 = vmatpush2.msra.mxu0 %v247
    %3710 = vmatprep.subr.mxu0 0.0
    %3711 = vmatpush2.msra.mxu0 %v240
    %3712 = vmatprep.subr.mxu0 0.0
    %3713 = vmatpush2.msra.mxu0 %v233
    %3714 = vmatprep.subr.mxu0 0.0
    %3715 = vmatpush2.msra.mxu0 %v226
    %3716 = vmatprep.subr.mxu0 0.0
    %3717 = vmatpush2.msra.mxu0 %v219
    %3718 = vmatprep.subr.mxu0 0.0
    %3719 = vmatpush2.msra.mxu0 %v212
    %3720 = vmatprep.subr.mxu0 0.0
    %3721 = vmatpush2.msra.mxu0 %v205
    %3722 = vmatprep.subr.mxu0 0.0
    %3723 = vmatpush2.msra.mxu0 %v198
    %3724 = vmatprep.subr.mxu0 0.0
    %3725 = vmatpush2.msra.mxu0 %v191
    %3726 = vmatprep.mubr.f32.mxu0 %v1474
    %3727 = vmatmul.mubr.f32.gmra.mxu0 %v1473
    %v3728 = vpop.f32.mrf.mxu0
    %v3729 = vadd.f32 %v2724, %v3728
    %v3730 = vpop.f32.mrf.mxu0
    %3731 = vmatprep.mubr.f32.mxu0 %v1481
    %3732 = vmatmul.mubr.f32.gmra.mxu0 %v1480
    %v3733 = vpop.f32.mrf.mxu0
    %v3734 = vadd.f32 %v2729, %v3733
    %v3735 = vpop.f32.mrf.mxu0
    %3736 = vdwg.mxu0
    %3737 = vmatprep.subr.mxu0 0.0
    %3738 = vmatpush1.msra.mxu0 %v408
    %3739 = vmatprep.subr.mxu0 0.0
    %3740 = vmatpush1.msra.mxu0 %v401
    %3741 = vmatprep.subr.mxu0 0.0
    %3742 = vmatpush1.msra.mxu0 %v394
    %3743 = vmatprep.subr.mxu0 0.0
    %3744 = vmatpush1.msra.mxu0 %v387
    %3745 = vmatprep.subr.mxu0 0.0
    %3746 = vmatpush1.msra.mxu0 %v380
    %3747 = vmatprep.subr.mxu0 0.0
    %3748 = vmatpush1.msra.mxu0 %v373
    %3749 = vmatprep.subr.mxu0 0.0
    %3750 = vmatpush1.msra.mxu0 %v366
    %3751 = vmatprep.subr.mxu0 0.0
    %3752 = vmatpush1.msra.mxu0 %v359
    %3753 = vmatprep.subr.mxu0 0.0
    %3754 = vmatpush1.msra.mxu0 %v352
    %3755 = vmatprep.subr.mxu0 0.0
    %3756 = vmatpush1.msra.mxu0 %v345
    %3757 = vmatprep.subr.mxu0 0.0
    %3758 = vmatpush1.msra.mxu0 %v338
    %3759 = vmatprep.subr.mxu0 0.0
    %3760 = vmatpush1.msra.mxu0 %v331
    %3761 = vmatprep.subr.mxu0 0.0
    %3762 = vmatpush1.msra.mxu0 %v324
    %3763 = vmatprep.subr.mxu0 0.0
    %3764 = vmatpush1.msra.mxu0 %v317
    %3765 = vmatprep.subr.mxu0 0.0
    %3766 = vmatpush1.msra.mxu0 %v310
    %3767 = vmatprep.subr.mxu0 0.0
    %3768 = vmatpush1.msra.mxu0 %v303
    %3769 = vmatprep.subr.mxu0 0.0
    %3770 = vmatpush2.msra.mxu0 %v520
    %3771 = vmatprep.subr.mxu0 0.0
    %3772 = vmatpush2.msra.mxu0 %v513
    %3773 = vmatprep.subr.mxu0 0.0
    %3774 = vmatpush2.msra.mxu0 %v506
    %3775 = vmatprep.subr.mxu0 0.0
    %3776 = vmatpush2.msra.mxu0 %v499
    %3777 = vmatprep.subr.mxu0 0.0
    %3778 = vmatpush2.msra.mxu0 %v492
    %3779 = vmatprep.subr.mxu0 0.0
    %3780 = vmatpush2.msra.mxu0 %v485
    %3781 = vmatprep.subr.mxu0 0.0
    %3782 = vmatpush2.msra.mxu0 %v478
    %3783 = vmatprep.subr.mxu0 0.0
    %3784 = vmatpush2.msra.mxu0 %v471
    %3785 = vmatprep.subr.mxu0 0.0
    %3786 = vmatpush2.msra.mxu0 %v464
    %3787 = vmatprep.subr.mxu0 0.0
    %3788 = vmatpush2.msra.mxu0 %v457
    %3789 = vmatprep.subr.mxu0 0.0
    %3790 = vmatpush2.msra.mxu0 %v450
    %3791 = vmatprep.subr.mxu0 0.0
    %3792 = vmatpush2.msra.mxu0 %v443
    %3793 = vmatprep.subr.mxu0 0.0
    %3794 = vmatpush2.msra.mxu0 %v436
    %3795 = vmatprep.subr.mxu0 0.0
    %3796 = vmatpush2.msra.mxu0 %v429
    %3797 = vmatprep.subr.mxu0 0.0
    %3798 = vmatpush2.msra.mxu0 %v422
    %3799 = vmatprep.subr.mxu0 0.0
    %3800 = vmatpush2.msra.mxu0 %v415
    %3801 = vmatprep.mubr.f32.mxu0 %v1476
    %3802 = vmatmul.mubr.f32.gmra.mxu0 %v1475
    %v3803 = vpop.f32.mrf.mxu0
    %v3804 = vadd.f32 %v3729, %v3803
    %v3805 = vpop.f32.mrf.mxu0
    %3806 = vmatprep.mubr.f32.mxu0 %v1483
    %3807 = vmatmul.mubr.f32.gmra.mxu0 %v1482
    %v3808 = vpop.f32.mrf.mxu0
    %v3809 = vadd.f32 %v3734, %v3808
    %v3810 = vpop.f32.mrf.mxu0
    %3811 = vdwg.mxu0
    %3812 = vmatprep.subr.mxu0 0.0
    %3813 = vmatpush1.msra.mxu0 %v632
    %3814 = vmatprep.subr.mxu0 0.0
    %3815 = vmatpush1.msra.mxu0 %v625
    %3816 = vmatprep.subr.mxu0 0.0
    %3817 = vmatpush1.msra.mxu0 %v618
    %3818 = vmatprep.subr.mxu0 0.0
    %3819 = vmatpush1.msra.mxu0 %v611
    %3820 = vmatprep.subr.mxu0 0.0
    %3821 = vmatpush1.msra.mxu0 %v604
    %3822 = vmatprep.subr.mxu0 0.0
    %3823 = vmatpush1.msra.mxu0 %v597
    %3824 = vmatprep.subr.mxu0 0.0
    %3825 = vmatpush1.msra.mxu0 %v590
    %3826 = vmatprep.subr.mxu0 0.0
    %3827 = vmatpush1.msra.mxu0 %v583
    %3828 = vmatprep.subr.mxu0 0.0
    %3829 = vmatpush1.msra.mxu0 %v576
    %3830 = vmatprep.subr.mxu0 0.0
    %3831 = vmatpush1.msra.mxu0 %v569
    %3832 = vmatprep.subr.mxu0 0.0
    %3833 = vmatpush1.msra.mxu0 %v562
    %3834 = vmatprep.subr.mxu0 0.0
    %3835 = vmatpush1.msra.mxu0 %v555
    %3836 = vmatprep.subr.mxu0 0.0
    %3837 = vmatpush1.msra.mxu0 %v548
    %3838 = vmatprep.subr.mxu0 0.0
    %3839 = vmatpush1.msra.mxu0 %v541
    %3840 = vmatprep.subr.mxu0 0.0
    %3841 = vmatpush1.msra.mxu0 %v534
    %3842 = vmatprep.subr.mxu0 0.0
    %3843 = vmatpush1.msra.mxu0 %v527
    %3844 = vmatprep.subr.mxu0 0.0
    %3845 = vmatpush2.msra.mxu0 %v744
    %3846 = vmatprep.subr.mxu0 0.0
    %3847 = vmatpush2.msra.mxu0 %v737
    %3848 = vmatprep.subr.mxu0 0.0
    %3849 = vmatpush2.msra.mxu0 %v730
    %3850 = vmatprep.subr.mxu0 0.0
    %3851 = vmatpush2.msra.mxu0 %v723
    %3852 = vmatprep.subr.mxu0 0.0
    %3853 = vmatpush2.msra.mxu0 %v716
    %3854 = vmatprep.subr.mxu0 0.0
    %3855 = vmatpush2.msra.mxu0 %v709
    %3856 = vmatprep.subr.mxu0 0.0
    %3857 = vmatpush2.msra.mxu0 %v702
    %3858 = vmatprep.subr.mxu0 0.0
    %3859 = vmatpush2.msra.mxu0 %v695
    %3860 = vmatprep.subr.mxu0 0.0
    %3861 = vmatpush2.msra.mxu0 %v688
    %3862 = vmatprep.subr.mxu0 0.0
    %3863 = vmatpush2.msra.mxu0 %v681
    %3864 = vmatprep.subr.mxu0 0.0
    %3865 = vmatpush2.msra.mxu0 %v674
    %3866 = vmatprep.subr.mxu0 0.0
    %3867 = vmatpush2.msra.mxu0 %v667
    %3868 = vmatprep.subr.mxu0 0.0
    %3869 = vmatpush2.msra.mxu0 %v660
    %3870 = vmatprep.subr.mxu0 0.0
    %3871 = vmatpush2.msra.mxu0 %v653
    %3872 = vmatprep.subr.mxu0 0.0
    %3873 = vmatpush2.msra.mxu0 %v646
    %3874 = vmatprep.subr.mxu0 0.0
    %3875 = vmatpush2.msra.mxu0 %v639
    %3876 = vmatprep.mubr.f32.mxu0 %v1478
    %3877 = vmatmul.mubr.f32.gmra.mxu0 %v1477
    %v3878 = vpop.f32.mrf.mxu0
    %v3879 = vadd.f32 %v3804, %v3878
    %v3880 = vpop.f32.mrf.mxu0
    %3881 = vmatprep.mubr.f32.mxu0 %v1485
    %3882 = vmatmul.mubr.f32.gmra.mxu0 %v1484
    %v3883 = vpop.f32.mrf.mxu0
    %v3884 = vadd.f32 %v3809, %v3883
    %v3885 = vpop.f32.mrf.mxu0
    %3886 = vdwg.mxu0
    %3887 = vmatprep.subr.mxu0 0.0
    %3888 = vmatpush1.msra.mxu0 0.0
    %3889 = vmatprep.subr.mxu0 0.0
    %3890 = vmatpush1.msra.mxu0 0.0
    %3891 = vmatprep.subr.mxu0 0.0
    %3892 = vmatpush1.msra.mxu0 0.0
    %3893 = vmatprep.subr.mxu0 0.0
    %3894 = vmatpush1.msra.mxu0 0.0
    %3895 = vmatprep.subr.mxu0 0.0
    %3896 = vmatpush1.msra.mxu0 0.0
    %3897 = vmatprep.subr.mxu0 0.0
    %3898 = vmatpush1.msra.mxu0 0.0
    %3899 = vmatprep.subr.mxu0 0.0
    %3900 = vmatpush1.msra.mxu0 0.0
    %3901 = vmatprep.subr.mxu0 0.0
    %3902 = vmatpush1.msra.mxu0 0.0
    %3903 = vmatprep.subr.mxu0 0.0
    %3904 = vmatpush1.msra.mxu0 0.0
    %3905 = vmatprep.subr.mxu0 0.0
    %3906 = vmatpush1.msra.mxu0 0.0
    %3907 = vmatprep.subr.mxu0 0.0
    %3908 = vmatpush1.msra.mxu0 0.0
    %3909 = vmatprep.subr.mxu0 0.0
    %3910 = vmatpush1.msra.mxu0 0.0
    %3911 = vmatprep.subr.mxu0 0.0
    %3912 = vmatpush1.msra.mxu0 %v772
    %3913 = vmatprep.subr.mxu0 0.0
    %3914 = vmatpush1.msra.mxu0 %v765
    %3915 = vmatprep.subr.mxu0 0.0
    %3916 = vmatpush1.msra.mxu0 %v758
    %3917 = vmatprep.subr.mxu0 0.0
    %3918 = vmatpush1.msra.mxu0 %v751
    %3919 = vmatprep.subr.mxu0 0.0
    %3920 = vmatpush2.msra.mxu0 0.0
    %3921 = vmatprep.subr.mxu0 0.0
    %3922 = vmatpush2.msra.mxu0 0.0
    %3923 = vmatprep.subr.mxu0 0.0
    %3924 = vmatpush2.msra.mxu0 0.0
    %3925 = vmatprep.subr.mxu0 0.0
    %3926 = vmatpush2.msra.mxu0 0.0
    %3927 = vmatprep.subr.mxu0 0.0
    %3928 = vmatpush2.msra.mxu0 0.0
    %3929 = vmatprep.subr.mxu0 0.0
    %3930 = vmatpush2.msra.mxu0 0.0
    %3931 = vmatprep.subr.mxu0 0.0
    %3932 = vmatpush2.msra.mxu0 0.0
    %3933 = vmatprep.subr.mxu0 0.0
    %3934 = vmatpush2.msra.mxu0 0.0
    %3935 = vmatprep.subr.mxu0 0.0
    %3936 = vmatpush2.msra.mxu0 0.0
    %3937 = vmatprep.subr.mxu0 0.0
    %3938 = vmatpush2.msra.mxu0 0.0
    %3939 = vmatprep.subr.mxu0 0.0
    %3940 = vmatpush2.msra.mxu0 0.0
    %3941 = vmatprep.subr.mxu0 0.0
    %3942 = vmatpush2.msra.mxu0 0.0
    %3943 = vmatprep.subr.mxu0 0.0
    %3944 = vmatpush2.msra.mxu0 0.0
    %3945 = vmatprep.subr.mxu0 0.0
    %3946 = vmatpush2.msra.mxu0 0.0
    %3947 = vmatprep.subr.mxu0 0.0
    %3948 = vmatpush2.msra.mxu0 0.0
    %3949 = vmatprep.subr.mxu0 0.0
    %3950 = vmatpush2.msra.mxu0 0.0
    %3951 = vmatprep.mubr.f32.mxu0 0.0
    %3952 = vmatmul.mubr.f32.gmra.mxu0 %v2733
    %v3953 = vpop.f32.mrf.mxu0
    %v3954 = vadd.f32 %v3879, %v3953
    %v3955 = vpop.f32.mrf.mxu0
    %3956 = vmatprep.mubr.f32.mxu0 0.0
    %3957 = vmatmul.mubr.f32.gmra.mxu0 %v2736
    %v3958 = vpop.f32.mrf.mxu0
    %v3959 = vadd.f32 %v3884, %v3958
    %v3960 = vpop.f32.mrf.mxu0
    %3961 = vdwg.mxu0
    %v3962 = vtanh.pop %v3036
    %v3963 = vtanh.pop %v3038
    %v3964 = vtanh.pop %v3344
    %v3965 = vtanh.pop %v3346
    %v3966 = vtanh.pop %v3652
    %v3967 = vtanh.pop %v3654
    %v3968 = vtanh.pop %v3954
    %v3969 = vtanh.pop %v3042
    %v3970 = vtanh.pop %v3044
    %v3971 = vtanh.pop %v3350
    %v3972 = vtanh.pop %v3352
    %v3973 = vtanh.pop %v3658
    %v3974 = vtanh.pop %v3660
    %v3975 = vtanh.pop %v3959
    %3976 = vst [vmem:[#allocation10] sm:$0xff] %v3962
    %3977 = vst [vmem:[#allocation10 + $0x8] sm:$0xff] %v3963
    %3978 = vst [vmem:[#allocation10 + $0x10] sm:$0xff] %v3964
    %3979 = vst [vmem:[#allocation10 + $0x18] sm:$0xff] %v3965
    %3980 = vst [vmem:[#allocation10 + $0x20] sm:$0xff] %v3966
    %3981 = vst [vmem:[#allocation10 + $0x28] sm:$0xff] %v3967
    %3982 = vst.msk [vmem:[#allocation10 + $0x30] sm:$0xff] %vm1501, %v3968
    %3983 = vst [vmem:[#allocation10 + $0x38] sm:$0xff] %v3969
    %3984 = vst [vmem:[#allocation10 + $0x40] sm:$0xff] %v3970
    %3985 = vst [vmem:[#allocation10 + $0x48] sm:$0xff] %v3971
    %3986 = vst [vmem:[#allocation10 + $0x50] sm:$0xff] %v3972
    %3987 = vst [vmem:[#allocation10 + $0x58] sm:$0xff] %v3973
    %3988 = vst [vmem:[#allocation10 + $0x60] sm:$0xff] %v3974
    %3989 = vst.msk [vmem:[#allocation10 + $0x68] sm:$0xff] %vm1501, %v3975
    // Predicated region
    $region34: #{post_attention_layer.1} parent=1 // pred_check
      _
    $region35: #{post_attention_layer.1} parent=1 // pred_check_branch
      %3991 = sbr.rel (0) target = $region37
    $region36: #{post_attention_layer.1} parent=1 // pred_region
      %s3993 = ssub.s32 1792, 1792
      %3994 = vsyncadd [#allocation4], %s3993
      %s3995 = sshll.u32 [#allocation10], 4
      %s3996 = int_to_ptr.vmem [resolvable:$true] %s3995
      %4001 = dma.vmem_to_hbm [thread:$0]  %s3996, 1792, %s4, [#allocation4], 896, 896, 56
    $region37: #{post_attention_layer.1} parent=1 // pred_fallthru
      _
    // Predicated region
    $region38: #{post_attention_layer.1} parent=1 // pred_check
      _
    $region39: #{post_attention_layer.1} parent=1 // pred_check_branch
      %4003 = sbr.rel (0) target = $region41
    $region40: #{post_attention_layer.1} parent=1 // pred_region
      %4004 = dma.done [#allocation4], 1792
    $region41: #{post_attention_layer.1} parent=1 // pred_fallthru
      _
    %4005 = vsyncpa [#allocation3], 1
    %4006 = vsyncpa [#allocation6], 1
    %4007 = vsyncpa [#allocation9], 1
    %4008 = vsyncpa [#allocation4], 1

</llo_original>
